<compile_context>
chip_gen: v7x
topology: tpu7x:2x2x1
jax: 0.10.0
libtpu: 0.0.40
codegen_flags: <defaults>
</compile_context>

<pallas_src>
import functools
import math

import jax
import jax.numpy as jnp
from jax.experimental import pallas as pl
from jax.experimental.pallas import tpu as pltpu

D_MODEL = 32
NUM_HEADS = 4
HEAD_DIM = D_MODEL // NUM_HEADS
FF_DIM = 64
EPS = 1e-5  # nn.LayerNorm default

SLAB_LANES = 128  # lane-dense parameter slab width


# ----------------------------- parameter slab layout (static, module level) -----------------------------
def _build_layout():
    layout = {}
    off = 0

    def add(name, nrows):
        nonlocal off
        layout[name] = off
        off = ((off + nrows + 7) // 8) * 8  # next entry starts on an 8-row tile boundary

    add("sa_wqkv", D_MODEL)   # (D, 3D) fused self-attn QKV weight
    add("sa_bqkv", 1)         # (1, 3D)
    add("sa_wo", D_MODEL)     # (D, D)
    add("sa_bo", 1)           # (1, D)
    add("ca_wq", D_MODEL)     # (D, D)
    add("ca_bq", 1)           # (1, D)
    add("ca_wkv", D_MODEL)    # (D, 2D) fused cross-attn KV weight
    add("ca_bkv", 1)          # (1, 2D)
    add("ca_wo", D_MODEL)     # (D, D)
    add("ca_bo", 1)           # (1, D)
    add("ff_w1", D_MODEL)     # (D, FF)
    add("ff_b1", 1)           # (1, FF)
    add("ff_w2", FF_DIM)      # (FF, D)
    add("ff_b2", 1)           # (1, D)
    add("ln", 6)              # (6, D): [n1_g, n1_b, n2_g, n2_b, n3_g, n3_b]
    return layout, off


LAYOUT, SLAB_ROWS = _build_layout()


def pack_params(p):
    """Pack the 26 raw parameters into one (SLAB_ROWS, 128) f32 slab.  Call ONCE at init."""
    (sa_wq, sa_bq, sa_wk, sa_bk, sa_wv, sa_bv, sa_wo, sa_bo,
     ca_wq, ca_bq, ca_wk, ca_bk, ca_wv, ca_bv, ca_wo, ca_bo,
     n1_g, n1_b, n2_g, n2_b, n3_g, n3_b,
     ff_w1, ff_b1, ff_w2, ff_b2) = p

    slab = jnp.zeros((SLAB_ROWS, SLAB_LANES), jnp.float32)

    def put(s, name, arr):
        r, c = arr.shape
        row = LAYOUT[name]
        return s.at[row:row + r, 0:c].set(arr.astype(jnp.float32))

    slab = put(slab, "sa_wqkv", jnp.concatenate([sa_wq, sa_wk, sa_wv], axis=1))
    slab = put(slab, "sa_bqkv", jnp.concatenate([sa_bq, sa_bk, sa_bv], axis=1))
    slab = put(slab, "sa_wo", sa_wo)
    slab = put(slab, "sa_bo", sa_bo)
    slab = put(slab, "ca_wq", ca_wq)
    slab = put(slab, "ca_bq", ca_bq)
    slab = put(slab, "ca_wkv", jnp.concatenate([ca_wk, ca_wv], axis=1))
    slab = put(slab, "ca_bkv", jnp.concatenate([ca_bk, ca_bv], axis=1))
    slab = put(slab, "ca_wo", ca_wo)
    slab = put(slab, "ca_bo", ca_bo)
    slab = put(slab, "ff_w1", ff_w1)
    slab = put(slab, "ff_b1", ff_b1)
    slab = put(slab, "ff_w2", ff_w2)
    slab = put(slab, "ff_b2", ff_b2)
    slab = put(slab, "ln", jnp.concatenate([n1_g, n1_b, n2_g, n2_b, n3_g, n3_b], axis=0))
    return slab


# ----------------------------- kernel helpers (traced inside the kernel) -----------------------------
def _layer_norm(x, gamma, beta):
    mean = jnp.mean(x, axis=-1, keepdims=True)
    var = jnp.mean((x - mean) ** 2, axis=-1, keepdims=True)
    inv = jax.lax.rsqrt(var + EPS)
    return (x - mean) * inv * gamma + beta


def _softmax(x):
    m = jnp.max(x, axis=-1, keepdims=True)
    e = jnp.exp(x - m)
    return e * pl.reciprocal(jnp.sum(e, axis=-1, keepdims=True), approx=False)


def _attn_core(qb, kb, vb, wo):
    """Per-batch multi-head attention (out-proj bias NOT included).

    qb: (S, D) queries, kb/vb: (M, D) keys/values (already projected), wo: (D, D).
    Builds the full (S, D) context (4 x 8-lane groups) and applies Wo in ONE K=32 matmul.
    """
    scale = 1.0 / math.sqrt(HEAD_DIM)
    ctx_heads = []
    for h in range(NUM_HEADS):
        lo = h * HEAD_DIM
        qh = qb[:, lo:lo + HEAD_DIM]
        kh = kb[:, lo:lo + HEAD_DIM]
        vh = vb[:, lo:lo + HEAD_DIM]
        # (S, HD) x (M, HD) contracting the last dims -> (S, M); no explicit transpose.
        scores = jax.lax.dot_general(
            qh, kh, (((1,), (1,)), ((), ())),
            preferred_element_type=jnp.float32) * scale
        attn = _softmax(scores)
        ctx_heads.append(jnp.dot(attn, vh, preferred_element_type=jnp.float32))
    ctx = jnp.concatenate(ctx_heads, axis=1)  # (S, D): lane packing, VPU/vst slots have slack
    return jnp.dot(ctx, wo, preferred_element_type=jnp.float32)


# ----------------------------- the Pallas kernel (single grid step) -----------------------------
def decoder_layer_kernel(B, S, M, x_ref, mem_ref, slab_ref, out_ref, attn_scratch):
    D = D_MODEL
    x = x_ref[...]      # (B*S, D)
    mem = mem_ref[...]  # (B*M, D)

    ln = slab_ref[LAYOUT["ln"]:LAYOUT["ln"] + 6, 0:D]  # (6, D)

    # --- self-attention: fused QKV projection over all B*S rows (128-lane padded weight) ---
    wqkv = slab_ref[LAYOUT["sa_wqkv"]:LAYOUT["sa_wqkv"] + D, :]       # (D, 128), cols 96..127 zero
    bqkv = slab_ref[LAYOUT["sa_bqkv"]:LAYOUT["sa_bqkv"] + 1, :]       # (1, 128)
    qkv = jnp.dot(x, wqkv, preferred_element_type=jnp.float32) + bqkv  # (B*S, 128)
    sa_wo = slab_ref[LAYOUT["sa_wo"]:LAYOUT["sa_wo"] + D, 0:D]
    for b in range(B):
        r0 = b * S
        qb = qkv[r0:r0 + S, 0:D]
        kb = qkv[r0:r0 + S, D:2 * D]
        vb = qkv[r0:r0 + S, 2 * D:3 * D]
        attn_scratch[r0:r0 + S, :] = _attn_core(qb, kb, vb, sa_wo)
    sa_bo = slab_ref[LAYOUT["sa_bo"]:LAYOUT["sa_bo"] + 1, 0:D]
    x = _layer_norm(x + attn_scratch[...] + sa_bo, ln[0:1, :], ln[1:2, :])

    # --- cross-attention: Q over updated x, fused KV over memory ---
    ca_wq = slab_ref[LAYOUT["ca_wq"]:LAYOUT["ca_wq"] + D, 0:D]
    ca_bq = slab_ref[LAYOUT["ca_bq"]:LAYOUT["ca_bq"] + 1, 0:D]
    q = jnp.dot(x, ca_wq, preferred_element_type=jnp.float32) + ca_bq  # (B*S, D)
    wkv = slab_ref[LAYOUT["ca_wkv"]:LAYOUT["ca_wkv"] + D, :]           # (D, 128), cols 64..127 zero
    bkv = slab_ref[LAYOUT["ca_bkv"]:LAYOUT["ca_bkv"] + 1, :]
    kv = jnp.dot(mem, wkv, preferred_element_type=jnp.float32) + bkv   # (B*M, 128)
    ca_wo = slab_ref[LAYOUT["ca_wo"]:LAYOUT["ca_wo"] + D, 0:D]
    for b in range(B):
        qb = q[b * S:(b + 1) * S, :]
        kb = kv[b * M:(b + 1) * M, 0:D]
        vb = kv[b * M:(b + 1) * M, D:2 * D]
        attn_scratch[b * S:(b + 1) * S, :] = _attn_core(qb, kb, vb, ca_wo)
    ca_bo = slab_ref[LAYOUT["ca_bo"]:LAYOUT["ca_bo"] + 1, 0:D]
    x = _layer_norm(x + attn_scratch[...] + ca_bo, ln[2:3, :], ln[3:4, :])

    # --- feed-forward + residual + norm3 ---
    w1 = slab_ref[LAYOUT["ff_w1"]:LAYOUT["ff_w1"] + D, 0:FF_DIM]
    b1 = slab_ref[LAYOUT["ff_b1"]:LAYOUT["ff_b1"] + 1, 0:FF_DIM]
    w2 = slab_ref[LAYOUT["ff_w2"]:LAYOUT["ff_w2"] + FF_DIM, 0:D]
    b2 = slab_ref[LAYOUT["ff_b2"]:LAYOUT["ff_b2"] + 1, 0:D]
    h = jnp.maximum(jnp.dot(x, w1, preferred_element_type=jnp.float32) + b1, 0.0)
    ff = jnp.dot(h, w2, preferred_element_type=jnp.float32) + b2
    x = _layer_norm(x + ff, ln[4:5, :], ln[5:6, :])

    out_ref[...] = x


# ----------------------------- wrapper -----------------------------
def decoder_layer(tgt, memory, slab):
    """tgt: (B, S, D), memory: (B, M, D), slab: pre-packed (SLAB_ROWS, 128) param slab."""
    B, S, D = tgt.shape
    _, M, _ = memory.shape

    x2d = tgt.reshape(B * S, D)
    mem2d = memory.reshape(B * M, D)
    inputs = (x2d, mem2d, slab)

    def full_spec(arr):
        nd = arr.ndim
        return pl.BlockSpec(arr.shape, lambda i, _nd=nd: (0,) * _nd)

    kernel = functools.partial(decoder_layer_kernel, B, S, M)

    out2d = pl.pallas_call(
        kernel,
        out_shape=jax.ShapeDtypeStruct((B * S, D), jnp.float32),
        grid_spec=pltpu.PrefetchScalarGridSpec(
            num_scalar_prefetch=0,
            grid=(1,),  # single step: whole problem (<200 KiB) sits in VMEM on all chips
            in_specs=[full_spec(a) for a in inputs],
            out_specs=pl.BlockSpec((B * S, D), lambda i: (0, 0)),
            scratch_shapes=[pltpu.VMEM((B * S, D), jnp.float32)],
        ),
        compiler_params=pltpu.CompilerParams(dimension_semantics=("arbitrary",)),
    )(*inputs)
    return out2d.reshape(B, S, D)


# ----------------------------- pure-JAX reference (for validation) -----------------------------
def _mha_ref(q_in, kv_in, wq, bq, wk, bk, wv, bv, wo, bo):
    B, S, D = q_in.shape
    _, M, _ = kv_in.shape
    q = q_in @ wq + bq
    k = kv_in @ wk + bk
    v = kv_in @ wv + bv
    q = q.reshape(B, S, NUM_HEADS, HEAD_DIM).transpose(0, 2, 1, 3)
    k = k.reshape(B, M, NUM_HEADS, HEAD_DIM).transpose(0, 2, 1, 3)
    v = v.reshape(B, M, NUM_HEADS, HEAD_DIM).transpose(0, 2, 1, 3)
    scores = jnp.einsum('bhqd,bhkd->bhqk', q, k) / (HEAD_DIM ** 0.5)
    attn = jax.nn.softmax(scores, axis=-1)
    ctx = jnp.einsum('bhqk,bhkd->bhqd', attn, v).transpose(0, 2, 1, 3).reshape(B, S, D)
    return ctx @ wo + bo


def _ln_ref(x, g, b):
    mean = jnp.mean(x, axis=-1, keepdims=True)
    var = jnp.mean((x - mean) ** 2, axis=-1, keepdims=True)
    return (x - mean) * jax.lax.rsqrt(var + EPS) * g + b


def decoder_layer_ref(tgt, memory, p):
    (sa_wq, sa_bq, sa_wk, sa_bk, sa_wv, sa_bv, sa_wo, sa_bo,
     ca_wq, ca_bq, ca_wk, ca_bk, ca_wv, ca_bv, ca_wo, ca_bo,
     n1_g, n1_b, n2_g, n2_b, n3_g, n3_b,
     ff_w1, ff_b1, ff_w2, ff_b2) = p
    x = tgt
    sa = _mha_ref(x, x, sa_wq, sa_bq, sa_wk, sa_bk, sa_wv, sa_bv, sa_wo, sa_bo)
    x = _ln_ref(x + sa, n1_g, n1_b)
    ca = _mha_ref(x, memory, ca_wq, ca_bq, ca_wk, ca_bk, ca_wv, ca_bv, ca_wo, ca_bo)
    x = _ln_ref(x + ca, n2_g, n2_b)
    h = jnp.maximum(x @ ff_w1 + ff_b1, 0.0)
    ff = h @ ff_w2 + ff_b2
    x = _ln_ref(x + ff, n3_g, n3_b)
    return x


# ----------------------------- deterministic parameter init -----------------------------
def init_params(key):
    ks = jax.random.split(key, 32)
    i = 0

    def nrm(shape, scale=0.05):
        nonlocal i
        v = scale * jax.random.normal(ks[i], shape, dtype=jnp.float32)
        i += 1
        return v

    def linear(din, dout):
        return nrm((din, dout)), nrm((1, dout))

    params = []
    # self-attention q/k/v/out projections
    for _ in range(4):
        w, b = linear(D_MODEL, D_MODEL); params += [w, b]
    # cross-attention q/k/v/out projections
    for _ in range(4):
        w, b = linear(D_MODEL, D_MODEL); params += [w, b]
    # norm1/2/3 (gamma near 1, beta near 0 — randomized slightly to exercise the math)
    for _ in range(3):
        params += [1.0 + nrm((1, D_MODEL), 0.02), nrm((1, D_MODEL), 0.02)]
    # feed-forward
    w1, b1 = linear(D_MODEL, FF_DIM)
    w2, b2 = linear(FF_DIM, D_MODEL)
    params += [w1, b1, w2, b2]
    return params


if __name__ == "__main__":
    key = jax.random.PRNGKey(0)
    k_tgt, k_mem, k_par = jax.random.split(key, 3)

    B, S, M = 2, 8, 16
    tgt = jax.random.normal(k_tgt, (B, S, D_MODEL), dtype=jnp.float32)
    memory = jax.random.normal(k_mem, (B, M, D_MODEL), dtype=jnp.float32)
    params = init_params(k_par)

    # Parameters are packed ONCE, outside the forward path.
    slab = jax.block_until_ready(pack_params(params))

    fwd = jax.jit(decoder_layer)
    out = fwd(tgt, memory, slab)
    out = jax.block_until_ready(out)

    ref = decoder_layer_ref(tgt, memory, params)
    assert out.shape == (B, S, D_MODEL)
    assert jnp.allclose(out, ref, rtol=2e-4, atol=2e-4), \
        f"max abs err = {jnp.max(jnp.abs(out - ref))}"

    print("KERNEL_OK")
</pallas_src>

<mosaic_0001>
module attributes {stable_mosaic.version = 11 : i64} {
  func.func @decoder_layer_kernel(%arg0: i32, %arg1: memref<16x32xf32, #tpu.memory_space<vmem>>, %arg2: memref<32x32xf32, #tpu.memory_space<vmem>>, %arg3: memref<320x128xf32, #tpu.memory_space<vmem>>, %arg4: memref<16x32xf32, #tpu.memory_space<vmem>>, %arg5: memref<16x32xf32, #tpu.memory_space<vmem>>) attributes {dimension_semantics = [#tpu.dimension_semantics<arbitrary>], iteration_bounds = array<i64: 1>, scalar_prefetch = 0 : i64, scratch_operands = 1 : i64, tpu.core_type = #tpu.core_type<tc>, window_params = [{pipeline_mode = #tpu.pipeline_mode<synchronous>, transform_indices = @transform_0, window_bounds = array<i64: 16, 32>}, {pipeline_mode = #tpu.pipeline_mode<synchronous>, transform_indices = @transform_1, window_bounds = array<i64: 32, 32>}, {pipeline_mode = #tpu.pipeline_mode<synchronous>, transform_indices = @transform_2, window_bounds = array<i64: 320, 128>}, {pipeline_mode = #tpu.pipeline_mode<synchronous>, transform_indices = @transform_3, window_bounds = array<i64: 16, 32>}]} {
    %c0 = arith.constant 0 : index
    %c0_0 = arith.constant 0 : index
    %0 = vector.load %arg1[%c0, %c0_0] : memref<16x32xf32, #tpu.memory_space<vmem>>, vector<16x32xf32>
    %c0_1 = arith.constant 0 : index
    %c0_2 = arith.constant 0 : index
    %1 = vector.load %arg2[%c0_1, %c0_2] : memref<32x32xf32, #tpu.memory_space<vmem>>, vector<32x32xf32>
    %c312 = arith.constant 312 : index
    %c0_3 = arith.constant 0 : index
    %2 = vector.load %arg3[%c312, %c0_3] : memref<320x128xf32, #tpu.memory_space<vmem>>, vector<6x32xf32>
    %c0_4 = arith.constant 0 : index
    %c0_5 = arith.constant 0 : index
    %3 = vector.load %arg3[%c0_4, %c0_5] : memref<320x128xf32, #tpu.memory_space<vmem>>, vector<32x128xf32>
    %c32 = arith.constant 32 : index
    %c0_6 = arith.constant 0 : index
    %4 = vector.load %arg3[%c32, %c0_6] : memref<320x128xf32, #tpu.memory_space<vmem>>, vector<1x128xf32>
    %cst = arith.constant dense<0.000000e+00> : vector<16x128xf32>
    %5 = tpu.matmul %0, %3, %cst {dimension_numbers = #tpu.dot_dimension_numbers<[1], [0], [0], [1], [0, 0, 1, 1], [], []>} : vector<16x32xf32>, vector<32x128xf32>, vector<16x128xf32> -> vector<16x128xf32>
    %6 = vector.broadcast %4 : vector<1x128xf32> to vector<16x128xf32>
    %7 = arith.addf %5, %6 : vector<16x128xf32>
    %c40 = arith.constant 40 : index
    %c0_7 = arith.constant 0 : index
    %8 = vector.load %arg3[%c40, %c0_7] : memref<320x128xf32, #tpu.memory_space<vmem>>, vector<32x32xf32>
    %9 = vector.extract_strided_slice %7 {offsets = [0, 0], sizes = [8, 32], strides = [1, 1]} : vector<16x128xf32> to vector<8x32xf32>
    %10 = vector.extract_strided_slice %7 {offsets = [0, 32], sizes = [8, 32], strides = [1, 1]} : vector<16x128xf32> to vector<8x32xf32>
    %11 = vector.extract_strided_slice %7 {offsets = [0, 64], sizes = [8, 32], strides = [1, 1]} : vector<16x128xf32> to vector<8x32xf32>
    %12 = vector.extract_strided_slice %9 {offsets = [0, 0], sizes = [8, 8], strides = [1, 1]} : vector<8x32xf32> to vector<8x8xf32>
    %13 = vector.extract_strided_slice %10 {offsets = [0, 0], sizes = [8, 8], strides = [1, 1]} : vector<8x32xf32> to vector<8x8xf32>
    %14 = vector.extract_strided_slice %11 {offsets = [0, 0], sizes = [8, 8], strides = [1, 1]} : vector<8x32xf32> to vector<8x8xf32>
    %cst_8 = arith.constant dense<0.000000e+00> : vector<8x8xf32>
    %15 = tpu.matmul %12, %13, %cst_8 {dimension_numbers = #tpu.dot_dimension_numbers<[1], [1], [0], [0], [0, 0, 1, 0], [], []>} : vector<8x8xf32>, vector<8x8xf32>, vector<8x8xf32> -> vector<8x8xf32>
    %cst_9 = arith.constant 0.353553385 : f32
    %16 = vector.broadcast %cst_9 : f32 to vector<8x8xf32>
    %17 = arith.mulf %15, %16 : vector<8x8xf32>
    %cst_10 = arith.constant dense<0xFF800000> : vector<8xf32>
    %18 = vector.multi_reduction <maximumf>, %17, %cst_10 [1] : vector<8x8xf32> to vector<8xf32>
    %19 = vector.shape_cast %18 : vector<8xf32> to vector<8x1xf32>
    %20 = vector.broadcast %19 : vector<8x1xf32> to vector<8x8xf32>
    %21 = arith.subf %17, %20 : vector<8x8xf32>
    %22 = math.exp %21 : vector<8x8xf32>
    %cst_11 = arith.constant dense<0.000000e+00> : vector<8xf32>
    %23 = vector.multi_reduction <add>, %22, %cst_11 [1] : vector<8x8xf32> to vector<8xf32>
    %24 = vector.shape_cast %23 : vector<8xf32> to vector<8x1xf32>
    %25 = tpu.reciprocal %24 : vector<8x1xf32> -> vector<8x1xf32>
    %26 = vector.broadcast %25 : vector<8x1xf32> to vector<8x8xf32>
    %27 = arith.mulf %22, %26 : vector<8x8xf32>
    %cst_12 = arith.constant dense<0.000000e+00> : vector<8x8xf32>
    %28 = tpu.matmul %27, %14, %cst_12 {dimension_numbers = #tpu.dot_dimension_numbers<[1], [0], [0], [1], [0, 0, 1, 1], [], []>} : vector<8x8xf32>, vector<8x8xf32>, vector<8x8xf32> -> vector<8x8xf32>
    %29 = vector.extract_strided_slice %9 {offsets = [0, 8], sizes = [8, 8], strides = [1, 1]} : vector<8x32xf32> to vector<8x8xf32>
    %30 = vector.extract_strided_slice %10 {offsets = [0, 8], sizes = [8, 8], strides = [1, 1]} : vector<8x32xf32> to vector<8x8xf32>
    %31 = vector.extract_strided_slice %11 {offsets = [0, 8], sizes = [8, 8], strides = [1, 1]} : vector<8x32xf32> to vector<8x8xf32>
    %cst_13 = arith.constant dense<0.000000e+00> : vector<8x8xf32>
    %32 = tpu.matmul %29, %30, %cst_13 {dimension_numbers = #tpu.dot_dimension_numbers<[1], [1], [0], [0], [0, 0, 1, 0], [], []>} : vector<8x8xf32>, vector<8x8xf32>, vector<8x8xf32> -> vector<8x8xf32>
    %cst_14 = arith.constant 0.353553385 : f32
    %33 = vector.broadcast %cst_14 : f32 to vector<8x8xf32>
    %34 = arith.mulf %32, %33 : vector<8x8xf32>
    %cst_15 = arith.constant dense<0xFF800000> : vector<8xf32>
    %35 = vector.multi_reduction <maximumf>, %34, %cst_15 [1] : vector<8x8xf32> to vector<8xf32>
    %36 = vector.shape_cast %35 : vector<8xf32> to vector<8x1xf32>
    %37 = vector.broadcast %36 : vector<8x1xf32> to vector<8x8xf32>
    %38 = arith.subf %34, %37 : vector<8x8xf32>
    %39 = math.exp %38 : vector<8x8xf32>
    %cst_16 = arith.constant dense<0.000000e+00> : vector<8xf32>
    %40 = vector.multi_reduction <add>, %39, %cst_16 [1] : vector<8x8xf32> to vector<8xf32>
    %41 = vector.shape_cast %40 : vector<8xf32> to vector<8x1xf32>
    %42 = tpu.reciprocal %41 : vector<8x1xf32> -> vector<8x1xf32>
    %43 = vector.broadcast %42 : vector<8x1xf32> to vector<8x8xf32>
    %44 = arith.mulf %39, %43 : vector<8x8xf32>
    %cst_17 = arith.constant dense<0.000000e+00> : vector<8x8xf32>
    %45 = tpu.matmul %44, %31, %cst_17 {dimension_numbers = #tpu.dot_dimension_numbers<[1], [0], [0], [1], [0, 0, 1, 1], [], []>} : vector<8x8xf32>, vector<8x8xf32>, vector<8x8xf32> -> vector<8x8xf32>
    %46 = vector.extract_strided_slice %9 {offsets = [0, 16], sizes = [8, 8], strides = [1, 1]} : vector<8x32xf32> to vector<8x8xf32>
    %47 = vector.extract_strided_slice %10 {offsets = [0, 16], sizes = [8, 8], strides = [1, 1]} : vector<8x32xf32> to vector<8x8xf32>
    %48 = vector.extract_strided_slice %11 {offsets = [0, 16], sizes = [8, 8], strides = [1, 1]} : vector<8x32xf32> to vector<8x8xf32>
    %cst_18 = arith.constant dense<0.000000e+00> : vector<8x8xf32>
    %49 = tpu.matmul %46, %47, %cst_18 {dimension_numbers = #tpu.dot_dimension_numbers<[1], [1], [0], [0], [0, 0, 1, 0], [], []>} : vector<8x8xf32>, vector<8x8xf32>, vector<8x8xf32> -> vector<8x8xf32>
    %cst_19 = arith.constant 0.353553385 : f32
    %50 = vector.broadcast %cst_19 : f32 to vector<8x8xf32>
    %51 = arith.mulf %49, %50 : vector<8x8xf32>
    %cst_20 = arith.constant dense<0xFF800000> : vector<8xf32>
    %52 = vector.multi_reduction <maximumf>, %51, %cst_20 [1] : vector<8x8xf32> to vector<8xf32>
    %53 = vector.shape_cast %52 : vector<8xf32> to vector<8x1xf32>
    %54 = vector.broadcast %53 : vector<8x1xf32> to vector<8x8xf32>
    %55 = arith.subf %51, %54 : vector<8x8xf32>
    %56 = math.exp %55 : vector<8x8xf32>
    %cst_21 = arith.constant dense<0.000000e+00> : vector<8xf32>
    %57 = vector.multi_reduction <add>, %56, %cst_21 [1] : vector<8x8xf32> to vector<8xf32>
    %58 = vector.shape_cast %57 : vector<8xf32> to vector<8x1xf32>
    %59 = tpu.reciprocal %58 : vector<8x1xf32> -> vector<8x1xf32>
    %60 = vector.broadcast %59 : vector<8x1xf32> to vector<8x8xf32>
    %61 = arith.mulf %56, %60 : vector<8x8xf32>
    %cst_22 = arith.constant dense<0.000000e+00> : vector<8x8xf32>
    %62 = tpu.matmul %61, %48, %cst_22 {dimension_numbers = #tpu.dot_dimension_numbers<[1], [0], [0], [1], [0, 0, 1, 1], [], []>} : vector<8x8xf32>, vector<8x8xf32>, vector<8x8xf32> -> vector<8x8xf32>
    %63 = vector.extract_strided_slice %9 {offsets = [0, 24], sizes = [8, 8], strides = [1, 1]} : vector<8x32xf32> to vector<8x8xf32>
    %64 = vector.extract_strided_slice %10 {offsets = [0, 24], sizes = [8, 8], strides = [1, 1]} : vector<8x32xf32> to vector<8x8xf32>
    %65 = vector.extract_strided_slice %11 {offsets = [0, 24], sizes = [8, 8], strides = [1, 1]} : vector<8x32xf32> to vector<8x8xf32>
    %cst_23 = arith.constant dense<0.000000e+00> : vector<8x8xf32>
    %66 = tpu.matmul %63, %64, %cst_23 {dimension_numbers = #tpu.dot_dimension_numbers<[1], [1], [0], [0], [0, 0, 1, 0], [], []>} : vector<8x8xf32>, vector<8x8xf32>, vector<8x8xf32> -> vector<8x8xf32>
    %cst_24 = arith.constant 0.353553385 : f32
    %67 = vector.broadcast %cst_24 : f32 to vector<8x8xf32>
    %68 = arith.mulf %66, %67 : vector<8x8xf32>
    %cst_25 = arith.constant dense<0xFF800000> : vector<8xf32>
    %69 = vector.multi_reduction <maximumf>, %68, %cst_25 [1] : vector<8x8xf32> to vector<8xf32>
    %70 = vector.shape_cast %69 : vector<8xf32> to vector<8x1xf32>
    %71 = vector.broadcast %70 : vector<8x1xf32> to vector<8x8xf32>
    %72 = arith.subf %68, %71 : vector<8x8xf32>
    %73 = math.exp %72 : vector<8x8xf32>
    %cst_26 = arith.constant dense<0.000000e+00> : vector<8xf32>
    %74 = vector.multi_reduction <add>, %73, %cst_26 [1] : vector<8x8xf32> to vector<8xf32>
    %75 = vector.shape_cast %74 : vector<8xf32> to vector<8x1xf32>
    %76 = tpu.reciprocal %75 : vector<8x1xf32> -> vector<8x1xf32>
    %77 = vector.broadcast %76 : vector<8x1xf32> to vector<8x8xf32>
    %78 = arith.mulf %73, %77 : vector<8x8xf32>
    %cst_27 = arith.constant dense<0.000000e+00> : vector<8x8xf32>
    %79 = tpu.matmul %78, %65, %cst_27 {dimension_numbers = #tpu.dot_dimension_numbers<[1], [0], [0], [1], [0, 0, 1, 1], [], []>} : vector<8x8xf32>, vector<8x8xf32>, vector<8x8xf32> -> vector<8x8xf32>
    %80 = tpu.concatenate %28, %45, %62, %79 in 1 : vector<8x8xf32>, vector<8x8xf32>, vector<8x8xf32>, vector<8x8xf32> -> vector<8x32xf32>
    %cst_28 = arith.constant dense<0.000000e+00> : vector<8x32xf32>
    %81 = tpu.matmul %80, %8, %cst_28 {dimension_numbers = #tpu.dot_dimension_numbers<[1], [0], [0], [1], [0, 0, 1, 1], [], []>} : vector<8x32xf32>, vector<32x32xf32>, vector<8x32xf32> -> vector<8x32xf32>
    %c0_29 = arith.constant 0 : index
    %c0_30 = arith.constant 0 : index
    %82 = vector.load %arg5[%c0_29, %c0_30] : memref<16x32xf32, #tpu.memory_space<vmem>>, vector<8x32xf32>
    tpu.vector_store %arg5[%c0_29, %c0_30], %81 {strides = array<i32>} : memref<16x32xf32, #tpu.memory_space<vmem>>, vector<8x32xf32>,
    %83 = vector.extract_strided_slice %7 {offsets = [8, 0], sizes = [8, 32], strides = [1, 1]} : vector<16x128xf32> to vector<8x32xf32>
    %84 = vector.extract_strided_slice %7 {offsets = [8, 32], sizes = [8, 32], strides = [1, 1]} : vector<16x128xf32> to vector<8x32xf32>
    %85 = vector.extract_strided_slice %7 {offsets = [8, 64], sizes = [8, 32], strides = [1, 1]} : vector<16x128xf32> to vector<8x32xf32>
    %86 = vector.extract_strided_slice %83 {offsets = [0, 0], sizes = [8, 8], strides = [1, 1]} : vector<8x32xf32> to vector<8x8xf32>
    %87 = vector.extract_strided_slice %84 {offsets = [0, 0], sizes = [8, 8], strides = [1, 1]} : vector<8x32xf32> to vector<8x8xf32>
    %88 = vector.extract_strided_slice %85 {offsets = [0, 0], sizes = [8, 8], strides = [1, 1]} : vector<8x32xf32> to vector<8x8xf32>
    %cst_31 = arith.constant dense<0.000000e+00> : vector<8x8xf32>
    %89 = tpu.matmul %86, %87, %cst_31 {dimension_numbers = #tpu.dot_dimension_numbers<[1], [1], [0], [0], [0, 0, 1, 0], [], []>} : vector<8x8xf32>, vector<8x8xf32>, vector<8x8xf32> -> vector<8x8xf32>
    %cst_32 = arith.constant 0.353553385 : f32
    %90 = vector.broadcast %cst_32 : f32 to vector<8x8xf32>
    %91 = arith.mulf %89, %90 : vector<8x8xf32>
    %cst_33 = arith.constant dense<0xFF800000> : vector<8xf32>
    %92 = vector.multi_reduction <maximumf>, %91, %cst_33 [1] : vector<8x8xf32> to vector<8xf32>
    %93 = vector.shape_cast %92 : vector<8xf32> to vector<8x1xf32>
    %94 = vector.broadcast %93 : vector<8x1xf32> to vector<8x8xf32>
    %95 = arith.subf %91, %94 : vector<8x8xf32>
    %96 = math.exp %95 : vector<8x8xf32>
    %cst_34 = arith.constant dense<0.000000e+00> : vector<8xf32>
    %97 = vector.multi_reduction <add>, %96, %cst_34 [1] : vector<8x8xf32> to vector<8xf32>
    %98 = vector.shape_cast %97 : vector<8xf32> to vector<8x1xf32>
    %99 = tpu.reciprocal %98 : vector<8x1xf32> -> vector<8x1xf32>
    %100 = vector.broadcast %99 : vector<8x1xf32> to vector<8x8xf32>
    %101 = arith.mulf %96, %100 : vector<8x8xf32>
    %cst_35 = arith.constant dense<0.000000e+00> : vector<8x8xf32>
    %102 = tpu.matmul %101, %88, %cst_35 {dimension_numbers = #tpu.dot_dimension_numbers<[1], [0], [0], [1], [0, 0, 1, 1], [], []>} : vector<8x8xf32>, vector<8x8xf32>, vector<8x8xf32> -> vector<8x8xf32>
    %103 = vector.extract_strided_slice %83 {offsets = [0, 8], sizes = [8, 8], strides = [1, 1]} : vector<8x32xf32> to vector<8x8xf32>
    %104 = vector.extract_strided_slice %84 {offsets = [0, 8], sizes = [8, 8], strides = [1, 1]} : vector<8x32xf32> to vector<8x8xf32>
    %105 = vector.extract_strided_slice %85 {offsets = [0, 8], sizes = [8, 8], strides = [1, 1]} : vector<8x32xf32> to vector<8x8xf32>
    %cst_36 = arith.constant dense<0.000000e+00> : vector<8x8xf32>
    %106 = tpu.matmul %103, %104, %cst_36 {dimension_numbers = #tpu.dot_dimension_numbers<[1], [1], [0], [0], [0, 0, 1, 0], [], []>} : vector<8x8xf32>, vector<8x8xf32>, vector<8x8xf32> -> vector<8x8xf32>
    %cst_37 = arith.constant 0.353553385 : f32
    %107 = vector.broadcast %cst_37 : f32 to vector<8x8xf32>
    %108 = arith.mulf %106, %107 : vector<8x8xf32>
    %cst_38 = arith.constant dense<0xFF800000> : vector<8xf32>
    %109 = vector.multi_reduction <maximumf>, %108, %cst_38 [1] : vector<8x8xf32> to vector<8xf32>
    %110 = vector.shape_cast %109 : vector<8xf32> to vector<8x1xf32>
    %111 = vector.broadcast %110 : vector<8x1xf32> to vector<8x8xf32>
    %112 = arith.subf %108, %111 : vector<8x8xf32>
    %113 = math.exp %112 : vector<8x8xf32>
    %cst_39 = arith.constant dense<0.000000e+00> : vector<8xf32>
    %114 = vector.multi_reduction <add>, %113, %cst_39 [1] : vector<8x8xf32> to vector<8xf32>
    %115 = vector.shape_cast %114 : vector<8xf32> to vector<8x1xf32>
    %116 = tpu.reciprocal %115 : vector<8x1xf32> -> vector<8x1xf32>
    %117 = vector.broadcast %116 : vector<8x1xf32> to vector<8x8xf32>
    %118 = arith.mulf %113, %117 : vector<8x8xf32>
    %cst_40 = arith.constant dense<0.000000e+00> : vector<8x8xf32>
    %119 = tpu.matmul %118, %105, %cst_40 {dimension_numbers = #tpu.dot_dimension_numbers<[1], [0], [0], [1], [0, 0, 1, 1], [], []>} : vector<8x8xf32>, vector<8x8xf32>, vector<8x8xf32> -> vector<8x8xf32>
    %120 = vector.extract_strided_slice %83 {offsets = [0, 16], sizes = [8, 8], strides = [1, 1]} : vector<8x32xf32> to vector<8x8xf32>
    %121 = vector.extract_strided_slice %84 {offsets = [0, 16], sizes = [8, 8], strides = [1, 1]} : vector<8x32xf32> to vector<8x8xf32>
    %122 = vector.extract_strided_slice %85 {offsets = [0, 16], sizes = [8, 8], strides = [1, 1]} : vector<8x32xf32> to vector<8x8xf32>
    %cst_41 = arith.constant dense<0.000000e+00> : vector<8x8xf32>
    %123 = tpu.matmul %120, %121, %cst_41 {dimension_numbers = #tpu.dot_dimension_numbers<[1], [1], [0], [0], [0, 0, 1, 0], [], []>} : vector<8x8xf32>, vector<8x8xf32>, vector<8x8xf32> -> vector<8x8xf32>
    %cst_42 = arith.constant 0.353553385 : f32
    %124 = vector.broadcast %cst_42 : f32 to vector<8x8xf32>
    %125 = arith.mulf %123, %124 : vector<8x8xf32>
    %cst_43 = arith.constant dense<0xFF800000> : vector<8xf32>
    %126 = vector.multi_reduction <maximumf>, %125, %cst_43 [1] : vector<8x8xf32> to vector<8xf32>
    %127 = vector.shape_cast %126 : vector<8xf32> to vector<8x1xf32>
    %128 = vector.broadcast %127 : vector<8x1xf32> to vector<8x8xf32>
    %129 = arith.subf %125, %128 : vector<8x8xf32>
    %130 = math.exp %129 : vector<8x8xf32>
    %cst_44 = arith.constant dense<0.000000e+00> : vector<8xf32>
    %131 = vector.multi_reduction <add>, %130, %cst_44 [1] : vector<8x8xf32> to vector<8xf32>
    %132 = vector.shape_cast %131 : vector<8xf32> to vector<8x1xf32>
    %133 = tpu.reciprocal %132 : vector<8x1xf32> -> vector<8x1xf32>
    %134 = vector.broadcast %133 : vector<8x1xf32> to vector<8x8xf32>
    %135 = arith.mulf %130, %134 : vector<8x8xf32>
    %cst_45 = arith.constant dense<0.000000e+00> : vector<8x8xf32>
    %136 = tpu.matmul %135, %122, %cst_45 {dimension_numbers = #tpu.dot_dimension_numbers<[1], [0], [0], [1], [0, 0, 1, 1], [], []>} : vector<8x8xf32>, vector<8x8xf32>, vector<8x8xf32> -> vector<8x8xf32>
    %137 = vector.extract_strided_slice %83 {offsets = [0, 24], sizes = [8, 8], strides = [1, 1]} : vector<8x32xf32> to vector<8x8xf32>
    %138 = vector.extract_strided_slice %84 {offsets = [0, 24], sizes = [8, 8], strides = [1, 1]} : vector<8x32xf32> to vector<8x8xf32>
    %139 = vector.extract_strided_slice %85 {offsets = [0, 24], sizes = [8, 8], strides = [1, 1]} : vector<8x32xf32> to vector<8x8xf32>
    %cst_46 = arith.constant dense<0.000000e+00> : vector<8x8xf32>
    %140 = tpu.matmul %137, %138, %cst_46 {dimension_numbers = #tpu.dot_dimension_numbers<[1], [1], [0], [0], [0, 0, 1, 0], [], []>} : vector<8x8xf32>, vector<8x8xf32>, vector<8x8xf32> -> vector<8x8xf32>
    %cst_47 = arith.constant 0.353553385 : f32
    %141 = vector.broadcast %cst_47 : f32 to vector<8x8xf32>
    %142 = arith.mulf %140, %141 : vector<8x8xf32>
    %cst_48 = arith.constant dense<0xFF800000> : vector<8xf32>
    %143 = vector.multi_reduction <maximumf>, %142, %cst_48 [1] : vector<8x8xf32> to vector<8xf32>
    %144 = vector.shape_cast %143 : vector<8xf32> to vector<8x1xf32>
    %145 = vector.broadcast %144 : vector<8x1xf32> to vector<8x8xf32>
    %146 = arith.subf %142, %145 : vector<8x8xf32>
    %147 = math.exp %146 : vector<8x8xf32>
    %cst_49 = arith.constant dense<0.000000e+00> : vector<8xf32>
    %148 = vector.multi_reduction <add>, %147, %cst_49 [1] : vector<8x8xf32> to vector<8xf32>
    %149 = vector.shape_cast %148 : vector<8xf32> to vector<8x1xf32>
    %150 = tpu.reciprocal %149 : vector<8x1xf32> -> vector<8x1xf32>
    %151 = vector.broadcast %150 : vector<8x1xf32> to vector<8x8xf32>
    %152 = arith.mulf %147, %151 : vector<8x8xf32>
    %cst_50 = arith.constant dense<0.000000e+00> : vector<8x8xf32>
    %153 = tpu.matmul %152, %139, %cst_50 {dimension_numbers = #tpu.dot_dimension_numbers<[1], [0], [0], [1], [0, 0, 1, 1], [], []>} : vector<8x8xf32>, vector<8x8xf32>, vector<8x8xf32> -> vector<8x8xf32>
    %154 = tpu.concatenate %102, %119, %136, %153 in 1 : vector<8x8xf32>, vector<8x8xf32>, vector<8x8xf32>, vector<8x8xf32> -> vector<8x32xf32>
    %cst_51 = arith.constant dense<0.000000e+00> : vector<8x32xf32>
    %155 = tpu.matmul %154, %8, %cst_51 {dimension_numbers = #tpu.dot_dimension_numbers<[1], [0], [0], [1], [0, 0, 1, 1], [], []>} : vector<8x32xf32>, vector<32x32xf32>, vector<8x32xf32> -> vector<8x32xf32>
    %c8 = arith.constant 8 : index
    %c0_52 = arith.constant 0 : index
    %156 = vector.load %arg5[%c8, %c0_52] : memref<16x32xf32, #tpu.memory_space<vmem>>, vector<8x32xf32>
    tpu.vector_store %arg5[%c8, %c0_52], %155 {strides = array<i32>} : memref<16x32xf32, #tpu.memory_space<vmem>>, vector<8x32xf32>,
    %c72 = arith.constant 72 : index
    %c0_53 = arith.constant 0 : index
    %157 = vector.load %arg3[%c72, %c0_53] : memref<320x128xf32, #tpu.memory_space<vmem>>, vector<1x32xf32>
    %c0_54 = arith.constant 0 : index
    %c0_55 = arith.constant 0 : index
    %158 = vector.load %arg5[%c0_54, %c0_55] : memref<16x32xf32, #tpu.memory_space<vmem>>, vector<16x32xf32>
    %159 = arith.addf %0, %158 : vector<16x32xf32>
    %160 = vector.broadcast %157 : vector<1x32xf32> to vector<16x32xf32>
    %161 = arith.addf %159, %160 : vector<16x32xf32>
    %162 = vector.extract_strided_slice %2 {offsets = [0, 0], sizes = [1, 32], strides = [1, 1]} : vector<6x32xf32> to vector<1x32xf32>
    %163 = vector.extract_strided_slice %2 {offsets = [1, 0], sizes = [1, 32], strides = [1, 1]} : vector<6x32xf32> to vector<1x32xf32>
    %cst_56 = arith.constant dense<0.000000e+00> : vector<16xf32>
    %164 = vector.multi_reduction <add>, %161, %cst_56 [1] : vector<16x32xf32> to vector<16xf32>
    %165 = vector.shape_cast %164 : vector<16xf32> to vector<16x1xf32>
    %cst_57 = arith.constant 3.200000e+01 : f32
    %166 = vector.broadcast %cst_57 : f32 to vector<16x1xf32>
    %167 = arith.divf %165, %166 : vector<16x1xf32>
    %168 = vector.broadcast %167 : vector<16x1xf32> to vector<16x32xf32>
    %169 = arith.subf %161, %168 : vector<16x32xf32>
    %170 = arith.mulf %169, %169 : vector<16x32xf32>
    %cst_58 = arith.constant dense<0.000000e+00> : vector<16xf32>
    %171 = vector.multi_reduction <add>, %170, %cst_58 [1] : vector<16x32xf32> to vector<16xf32>
    %172 = vector.shape_cast %171 : vector<16xf32> to vector<16x1xf32>
    %cst_59 = arith.constant 3.200000e+01 : f32
    %173 = vector.broadcast %cst_59 : f32 to vector<16x1xf32>
    %174 = arith.divf %172, %173 : vector<16x1xf32>
    %cst_60 = arith.constant 9.99999974E-6 : f32
    %175 = vector.broadcast %cst_60 : f32 to vector<16x1xf32>
    %176 = arith.addf %174, %175 : vector<16x1xf32>
    %177 = math.rsqrt %176 : vector<16x1xf32>
    %178 = vector.broadcast %167 : vector<16x1xf32> to vector<16x32xf32>
    %179 = arith.subf %161, %178 : vector<16x32xf32>
    %180 = vector.broadcast %177 : vector<16x1xf32> to vector<16x32xf32>
    %181 = arith.mulf %179, %180 : vector<16x32xf32>
    %182 = vector.broadcast %162 : vector<1x32xf32> to vector<16x32xf32>
    %183 = arith.mulf %181, %182 : vector<16x32xf32>
    %184 = vector.broadcast %163 : vector<1x32xf32> to vector<16x32xf32>
    %185 = arith.addf %183, %184 : vector<16x32xf32>
    %c80 = arith.constant 80 : index
    %c0_61 = arith.constant 0 : index
    %186 = vector.load %arg3[%c80, %c0_61] : memref<320x128xf32, #tpu.memory_space<vmem>>, vector<32x32xf32>
    %c112 = arith.constant 112 : index
    %c0_62 = arith.constant 0 : index
    %187 = vector.load %arg3[%c112, %c0_62] : memref<320x128xf32, #tpu.memory_space<vmem>>, vector<1x32xf32>
    %cst_63 = arith.constant dense<0.000000e+00> : vector<16x32xf32>
    %188 = tpu.matmul %185, %186, %cst_63 {dimension_numbers = #tpu.dot_dimension_numbers<[1], [0], [0], [1], [0, 0, 1, 1], [], []>} : vector<16x32xf32>, vector<32x32xf32>, vector<16x32xf32> -> vector<16x32xf32>
    %189 = vector.broadcast %187 : vector<1x32xf32> to vector<16x32xf32>
    %190 = arith.addf %188, %189 : vector<16x32xf32>
    %c120 = arith.constant 120 : index
    %c0_64 = arith.constant 0 : index
    %191 = vector.load %arg3[%c120, %c0_64] : memref<320x128xf32, #tpu.memory_space<vmem>>, vector<32x128xf32>
    %c152 = arith.constant 152 : index
    %c0_65 = arith.constant 0 : index
    %192 = vector.load %arg3[%c152, %c0_65] : memref<320x128xf32, #tpu.memory_space<vmem>>, vector<1x128xf32>
    %cst_66 = arith.constant dense<0.000000e+00> : vector<32x128xf32>
    %193 = tpu.matmul %1, %191, %cst_66 {dimension_numbers = #tpu.dot_dimension_numbers<[1], [0], [0], [1], [0, 0, 1, 1], [], []>} : vector<32x32xf32>, vector<32x128xf32>, vector<32x128xf32> -> vector<32x128xf32>
    %194 = vector.broadcast %192 : vector<1x128xf32> to vector<32x128xf32>
    %195 = arith.addf %193, %194 : vector<32x128xf32>
    %c160 = arith.constant 160 : index
    %c0_67 = arith.constant 0 : index
    %196 = vector.load %arg3[%c160, %c0_67] : memref<320x128xf32, #tpu.memory_space<vmem>>, vector<32x32xf32>
    %197 = vector.extract_strided_slice %190 {offsets = [0, 0], sizes = [8, 32], strides = [1, 1]} : vector<16x32xf32> to vector<8x32xf32>
    %198 = vector.extract_strided_slice %195 {offsets = [0, 0], sizes = [16, 32], strides = [1, 1]} : vector<32x128xf32> to vector<16x32xf32>
    %199 = vector.extract_strided_slice %195 {offsets = [0, 32], sizes = [16, 32], strides = [1, 1]} : vector<32x128xf32> to vector<16x32xf32>
    %200 = vector.extract_strided_slice %197 {offsets = [0, 0], sizes = [8, 8], strides = [1, 1]} : vector<8x32xf32> to vector<8x8xf32>
    %201 = vector.extract_strided_slice %198 {offsets = [0, 0], sizes = [16, 8], strides = [1, 1]} : vector<16x32xf32> to vector<16x8xf32>
    %202 = vector.extract_strided_slice %199 {offsets = [0, 0], sizes = [16, 8], strides = [1, 1]} : vector<16x32xf32> to vector<16x8xf32>
    %cst_68 = arith.constant dense<0.000000e+00> : vector<8x16xf32>
    %203 = tpu.matmul %200, %201, %cst_68 {dimension_numbers = #tpu.dot_dimension_numbers<[1], [1], [0], [0], [0, 0, 1, 0], [], []>} : vector<8x8xf32>, vector<16x8xf32>, vector<8x16xf32> -> vector<8x16xf32>
    %cst_69 = arith.constant 0.353553385 : f32
    %204 = vector.broadcast %cst_69 : f32 to vector<8x16xf32>
    %205 = arith.mulf %203, %204 : vector<8x16xf32>
    %cst_70 = arith.constant dense<0xFF800000> : vector<8xf32>
    %206 = vector.multi_reduction <maximumf>, %205, %cst_70 [1] : vector<8x16xf32> to vector<8xf32>
    %207 = vector.shape_cast %206 : vector<8xf32> to vector<8x1xf32>
    %208 = vector.broadcast %207 : vector<8x1xf32> to vector<8x16xf32>
    %209 = arith.subf %205, %208 : vector<8x16xf32>
    %210 = math.exp %209 : vector<8x16xf32>
    %cst_71 = arith.constant dense<0.000000e+00> : vector<8xf32>
    %211 = vector.multi_reduction <add>, %210, %cst_71 [1] : vector<8x16xf32> to vector<8xf32>
    %212 = vector.shape_cast %211 : vector<8xf32> to vector<8x1xf32>
    %213 = tpu.reciprocal %212 : vector<8x1xf32> -> vector<8x1xf32>
    %214 = vector.broadcast %213 : vector<8x1xf32> to vector<8x16xf32>
    %215 = arith.mulf %210, %214 : vector<8x16xf32>
    %cst_72 = arith.constant dense<0.000000e+00> : vector<8x8xf32>
    %216 = tpu.matmul %215, %202, %cst_72 {dimension_numbers = #tpu.dot_dimension_numbers<[1], [0], [0], [1], [0, 0, 1, 1], [], []>} : vector<8x16xf32>, vector<16x8xf32>, vector<8x8xf32> -> vector<8x8xf32>
    %217 = vector.extract_strided_slice %197 {offsets = [0, 8], sizes = [8, 8], strides = [1, 1]} : vector<8x32xf32> to vector<8x8xf32>
    %218 = vector.extract_strided_slice %198 {offsets = [0, 8], sizes = [16, 8], strides = [1, 1]} : vector<16x32xf32> to vector<16x8xf32>
    %219 = vector.extract_strided_slice %199 {offsets = [0, 8], sizes = [16, 8], strides = [1, 1]} : vector<16x32xf32> to vector<16x8xf32>
    %cst_73 = arith.constant dense<0.000000e+00> : vector<8x16xf32>
    %220 = tpu.matmul %217, %218, %cst_73 {dimension_numbers = #tpu.dot_dimension_numbers<[1], [1], [0], [0], [0, 0, 1, 0], [], []>} : vector<8x8xf32>, vector<16x8xf32>, vector<8x16xf32> -> vector<8x16xf32>
    %cst_74 = arith.constant 0.353553385 : f32
    %221 = vector.broadcast %cst_74 : f32 to vector<8x16xf32>
    %222 = arith.mulf %220, %221 : vector<8x16xf32>
    %cst_75 = arith.constant dense<0xFF800000> : vector<8xf32>
    %223 = vector.multi_reduction <maximumf>, %222, %cst_75 [1] : vector<8x16xf32> to vector<8xf32>
    %224 = vector.shape_cast %223 : vector<8xf32> to vector<8x1xf32>
    %225 = vector.broadcast %224 : vector<8x1xf32> to vector<8x16xf32>
    %226 = arith.subf %222, %225 : vector<8x16xf32>
    %227 = math.exp %226 : vector<8x16xf32>
    %cst_76 = arith.constant dense<0.000000e+00> : vector<8xf32>
    %228 = vector.multi_reduction <add>, %227, %cst_76 [1] : vector<8x16xf32> to vector<8xf32>
    %229 = vector.shape_cast %228 : vector<8xf32> to vector<8x1xf32>
    %230 = tpu.reciprocal %229 : vector<8x1xf32> -> vector<8x1xf32>
    %231 = vector.broadcast %230 : vector<8x1xf32> to vector<8x16xf32>
    %232 = arith.mulf %227, %231 : vector<8x16xf32>
    %cst_77 = arith.constant dense<0.000000e+00> : vector<8x8xf32>
    %233 = tpu.matmul %232, %219, %cst_77 {dimension_numbers = #tpu.dot_dimension_numbers<[1], [0], [0], [1], [0, 0, 1, 1], [], []>} : vector<8x16xf32>, vector<16x8xf32>, vector<8x8xf32> -> vector<8x8xf32>
    %234 = vector.extract_strided_slice %197 {offsets = [0, 16], sizes = [8, 8], strides = [1, 1]} : vector<8x32xf32> to vector<8x8xf32>
    %235 = vector.extract_strided_slice %198 {offsets = [0, 16], sizes = [16, 8], strides = [1, 1]} : vector<16x32xf32> to vector<16x8xf32>
    %236 = vector.extract_strided_slice %199 {offsets = [0, 16], sizes = [16, 8], strides = [1, 1]} : vector<16x32xf32> to vector<16x8xf32>
    %cst_78 = arith.constant dense<0.000000e+00> : vector<8x16xf32>
    %237 = tpu.matmul %234, %235, %cst_78 {dimension_numbers = #tpu.dot_dimension_numbers<[1], [1], [0], [0], [0, 0, 1, 0], [], []>} : vector<8x8xf32>, vector<16x8xf32>, vector<8x16xf32> -> vector<8x16xf32>
    %cst_79 = arith.constant 0.353553385 : f32
    %238 = vector.broadcast %cst_79 : f32 to vector<8x16xf32>
    %239 = arith.mulf %237, %238 : vector<8x16xf32>
    %cst_80 = arith.constant dense<0xFF800000> : vector<8xf32>
    %240 = vector.multi_reduction <maximumf>, %239, %cst_80 [1] : vector<8x16xf32> to vector<8xf32>
    %241 = vector.shape_cast %240 : vector<8xf32> to vector<8x1xf32>
    %242 = vector.broadcast %241 : vector<8x1xf32> to vector<8x16xf32>
    %243 = arith.subf %239, %242 : vector<8x16xf32>
    %244 = math.exp %243 : vector<8x16xf32>
    %cst_81 = arith.constant dense<0.000000e+00> : vector<8xf32>
    %245 = vector.multi_reduction <add>, %244, %cst_81 [1] : vector<8x16xf32> to vector<8xf32>
    %246 = vector.shape_cast %245 : vector<8xf32> to vector<8x1xf32>
    %247 = tpu.reciprocal %246 : vector<8x1xf32> -> vector<8x1xf32>
    %248 = vector.broadcast %247 : vector<8x1xf32> to vector<8x16xf32>
    %249 = arith.mulf %244, %248 : vector<8x16xf32>
    %cst_82 = arith.constant dense<0.000000e+00> : vector<8x8xf32>
    %250 = tpu.matmul %249, %236, %cst_82 {dimension_numbers = #tpu.dot_dimension_numbers<[1], [0], [0], [1], [0, 0, 1, 1], [], []>} : vector<8x16xf32>, vector<16x8xf32>, vector<8x8xf32> -> vector<8x8xf32>
    %251 = vector.extract_strided_slice %197 {offsets = [0, 24], sizes = [8, 8], strides = [1, 1]} : vector<8x32xf32> to vector<8x8xf32>
    %252 = vector.extract_strided_slice %198 {offsets = [0, 24], sizes = [16, 8], strides = [1, 1]} : vector<16x32xf32> to vector<16x8xf32>
    %253 = vector.extract_strided_slice %199 {offsets = [0, 24], sizes = [16, 8], strides = [1, 1]} : vector<16x32xf32> to vector<16x8xf32>
    %cst_83 = arith.constant dense<0.000000e+00> : vector<8x16xf32>
    %254 = tpu.matmul %251, %252, %cst_83 {dimension_numbers = #tpu.dot_dimension_numbers<[1], [1], [0], [0], [0, 0, 1, 0], [], []>} : vector<8x8xf32>, vector<16x8xf32>, vector<8x16xf32> -> vector<8x16xf32>
    %cst_84 = arith.constant 0.353553385 : f32
    %255 = vector.broadcast %cst_84 : f32 to vector<8x16xf32>
    %256 = arith.mulf %254, %255 : vector<8x16xf32>
    %cst_85 = arith.constant dense<0xFF800000> : vector<8xf32>
    %257 = vector.multi_reduction <maximumf>, %256, %cst_85 [1] : vector<8x16xf32> to vector<8xf32>
    %258 = vector.shape_cast %257 : vector<8xf32> to vector<8x1xf32>
    %259 = vector.broadcast %258 : vector<8x1xf32> to vector<8x16xf32>
    %260 = arith.subf %256, %259 : vector<8x16xf32>
    %261 = math.exp %260 : vector<8x16xf32>
    %cst_86 = arith.constant dense<0.000000e+00> : vector<8xf32>
    %262 = vector.multi_reduction <add>, %261, %cst_86 [1] : vector<8x16xf32> to vector<8xf32>
    %263 = vector.shape_cast %262 : vector<8xf32> to vector<8x1xf32>
    %264 = tpu.reciprocal %263 : vector<8x1xf32> -> vector<8x1xf32>
    %265 = vector.broadcast %264 : vector<8x1xf32> to vector<8x16xf32>
    %266 = arith.mulf %261, %265 : vector<8x16xf32>
    %cst_87 = arith.constant dense<0.000000e+00> : vector<8x8xf32>
    %267 = tpu.matmul %266, %253, %cst_87 {dimension_numbers = #tpu.dot_dimension_numbers<[1], [0], [0], [1], [0, 0, 1, 1], [], []>} : vector<8x16xf32>, vector<16x8xf32>, vector<8x8xf32> -> vector<8x8xf32>
    %268 = tpu.concatenate %216, %233, %250, %267 in 1 : vector<8x8xf32>, vector<8x8xf32>, vector<8x8xf32>, vector<8x8xf32> -> vector<8x32xf32>
    %cst_88 = arith.constant dense<0.000000e+00> : vector<8x32xf32>
    %269 = tpu.matmul %268, %196, %cst_88 {dimension_numbers = #tpu.dot_dimension_numbers<[1], [0], [0], [1], [0, 0, 1, 1], [], []>} : vector<8x32xf32>, vector<32x32xf32>, vector<8x32xf32> -> vector<8x32xf32>
    %c0_89 = arith.constant 0 : index
    %c0_90 = arith.constant 0 : index
    %270 = vector.load %arg5[%c0_89, %c0_90] : memref<16x32xf32, #tpu.memory_space<vmem>>, vector<8x32xf32>
    tpu.vector_store %arg5[%c0_89, %c0_90], %269 {strides = array<i32>} : memref<16x32xf32, #tpu.memory_space<vmem>>, vector<8x32xf32>,
    %271 = vector.extract_strided_slice %190 {offsets = [8, 0], sizes = [8, 32], strides = [1, 1]} : vector<16x32xf32> to vector<8x32xf32>
    %272 = vector.extract_strided_slice %195 {offsets = [16, 0], sizes = [16, 32], strides = [1, 1]} : vector<32x128xf32> to vector<16x32xf32>
    %273 = vector.extract_strided_slice %195 {offsets = [16, 32], sizes = [16, 32], strides = [1, 1]} : vector<32x128xf32> to vector<16x32xf32>
    %274 = vector.extract_strided_slice %271 {offsets = [0, 0], sizes = [8, 8], strides = [1, 1]} : vector<8x32xf32> to vector<8x8xf32>
    %275 = vector.extract_strided_slice %272 {offsets = [0, 0], sizes = [16, 8], strides = [1, 1]} : vector<16x32xf32> to vector<16x8xf32>
    %276 = vector.extract_strided_slice %273 {offsets = [0, 0], sizes = [16, 8], strides = [1, 1]} : vector<16x32xf32> to vector<16x8xf32>
    %cst_91 = arith.constant dense<0.000000e+00> : vector<8x16xf32>
    %277 = tpu.matmul %274, %275, %cst_91 {dimension_numbers = #tpu.dot_dimension_numbers<[1], [1], [0], [0], [0, 0, 1, 0], [], []>} : vector<8x8xf32>, vector<16x8xf32>, vector<8x16xf32> -> vector<8x16xf32>
    %cst_92 = arith.constant 0.353553385 : f32
    %278 = vector.broadcast %cst_92 : f32 to vector<8x16xf32>
    %279 = arith.mulf %277, %278 : vector<8x16xf32>
    %cst_93 = arith.constant dense<0xFF800000> : vector<8xf32>
    %280 = vector.multi_reduction <maximumf>, %279, %cst_93 [1] : vector<8x16xf32> to vector<8xf32>
    %281 = vector.shape_cast %280 : vector<8xf32> to vector<8x1xf32>
    %282 = vector.broadcast %281 : vector<8x1xf32> to vector<8x16xf32>
    %283 = arith.subf %279, %282 : vector<8x16xf32>
    %284 = math.exp %283 : vector<8x16xf32>
    %cst_94 = arith.constant dense<0.000000e+00> : vector<8xf32>
    %285 = vector.multi_reduction <add>, %284, %cst_94 [1] : vector<8x16xf32> to vector<8xf32>
    %286 = vector.shape_cast %285 : vector<8xf32> to vector<8x1xf32>
    %287 = tpu.reciprocal %286 : vector<8x1xf32> -> vector<8x1xf32>
    %288 = vector.broadcast %287 : vector<8x1xf32> to vector<8x16xf32>
    %289 = arith.mulf %284, %288 : vector<8x16xf32>
    %cst_95 = arith.constant dense<0.000000e+00> : vector<8x8xf32>
    %290 = tpu.matmul %289, %276, %cst_95 {dimension_numbers = #tpu.dot_dimension_numbers<[1], [0], [0], [1], [0, 0, 1, 1], [], []>} : vector<8x16xf32>, vector<16x8xf32>, vector<8x8xf32> -> vector<8x8xf32>
    %291 = vector.extract_strided_slice %271 {offsets = [0, 8], sizes = [8, 8], strides = [1, 1]} : vector<8x32xf32> to vector<8x8xf32>
    %292 = vector.extract_strided_slice %272 {offsets = [0, 8], sizes = [16, 8], strides = [1, 1]} : vector<16x32xf32> to vector<16x8xf32>
    %293 = vector.extract_strided_slice %273 {offsets = [0, 8], sizes = [16, 8], strides = [1, 1]} : vector<16x32xf32> to vector<16x8xf32>
    %cst_96 = arith.constant dense<0.000000e+00> : vector<8x16xf32>
    %294 = tpu.matmul %291, %292, %cst_96 {dimension_numbers = #tpu.dot_dimension_numbers<[1], [1], [0], [0], [0, 0, 1, 0], [], []>} : vector<8x8xf32>, vector<16x8xf32>, vector<8x16xf32> -> vector<8x16xf32>
    %cst_97 = arith.constant 0.353553385 : f32
    %295 = vector.broadcast %cst_97 : f32 to vector<8x16xf32>
    %296 = arith.mulf %294, %295 : vector<8x16xf32>
    %cst_98 = arith.constant dense<0xFF800000> : vector<8xf32>
    %297 = vector.multi_reduction <maximumf>, %296, %cst_98 [1] : vector<8x16xf32> to vector<8xf32>
    %298 = vector.shape_cast %297 : vector<8xf32> to vector<8x1xf32>
    %299 = vector.broadcast %298 : vector<8x1xf32> to vector<8x16xf32>
    %300 = arith.subf %296, %299 : vector<8x16xf32>
    %301 = math.exp %300 : vector<8x16xf32>
    %cst_99 = arith.constant dense<0.000000e+00> : vector<8xf32>
    %302 = vector.multi_reduction <add>, %301, %cst_99 [1] : vector<8x16xf32> to vector<8xf32>
    %303 = vector.shape_cast %302 : vector<8xf32> to vector<8x1xf32>
    %304 = tpu.reciprocal %303 : vector<8x1xf32> -> vector<8x1xf32>
    %305 = vector.broadcast %304 : vector<8x1xf32> to vector<8x16xf32>
    %306 = arith.mulf %301, %305 : vector<8x16xf32>
    %cst_100 = arith.constant dense<0.000000e+00> : vector<8x8xf32>
    %307 = tpu.matmul %306, %293, %cst_100 {dimension_numbers = #tpu.dot_dimension_numbers<[1], [0], [0], [1], [0, 0, 1, 1], [], []>} : vector<8x16xf32>, vector<16x8xf32>, vector<8x8xf32> -> vector<8x8xf32>
    %308 = vector.extract_strided_slice %271 {offsets = [0, 16], sizes = [8, 8], strides = [1, 1]} : vector<8x32xf32> to vector<8x8xf32>
    %309 = vector.extract_strided_slice %272 {offsets = [0, 16], sizes = [16, 8], strides = [1, 1]} : vector<16x32xf32> to vector<16x8xf32>
    %310 = vector.extract_strided_slice %273 {offsets = [0, 16], sizes = [16, 8], strides = [1, 1]} : vector<16x32xf32> to vector<16x8xf32>
    %cst_101 = arith.constant dense<0.000000e+00> : vector<8x16xf32>
    %311 = tpu.matmul %308, %309, %cst_101 {dimension_numbers = #tpu.dot_dimension_numbers<[1], [1], [0], [0], [0, 0, 1, 0], [], []>} : vector<8x8xf32>, vector<16x8xf32>, vector<8x16xf32> -> vector<8x16xf32>
    %cst_102 = arith.constant 0.353553385 : f32
    %312 = vector.broadcast %cst_102 : f32 to vector<8x16xf32>
    %313 = arith.mulf %311, %312 : vector<8x16xf32>
    %cst_103 = arith.constant dense<0xFF800000> : vector<8xf32>
    %314 = vector.multi_reduction <maximumf>, %313, %cst_103 [1] : vector<8x16xf32> to vector<8xf32>
    %315 = vector.shape_cast %314 : vector<8xf32> to vector<8x1xf32>
    %316 = vector.broadcast %315 : vector<8x1xf32> to vector<8x16xf32>
    %317 = arith.subf %313, %316 : vector<8x16xf32>
    %318 = math.exp %317 : vector<8x16xf32>
    %cst_104 = arith.constant dense<0.000000e+00> : vector<8xf32>
    %319 = vector.multi_reduction <add>, %318, %cst_104 [1] : vector<8x16xf32> to vector<8xf32>
    %320 = vector.shape_cast %319 : vector<8xf32> to vector<8x1xf32>
    %321 = tpu.reciprocal %320 : vector<8x1xf32> -> vector<8x1xf32>
    %322 = vector.broadcast %321 : vector<8x1xf32> to vector<8x16xf32>
    %323 = arith.mulf %318, %322 : vector<8x16xf32>
    %cst_105 = arith.constant dense<0.000000e+00> : vector<8x8xf32>
    %324 = tpu.matmul %323, %310, %cst_105 {dimension_numbers = #tpu.dot_dimension_numbers<[1], [0], [0], [1], [0, 0, 1, 1], [], []>} : vector<8x16xf32>, vector<16x8xf32>, vector<8x8xf32> -> vector<8x8xf32>
    %325 = vector.extract_strided_slice %271 {offsets = [0, 24], sizes = [8, 8], strides = [1, 1]} : vector<8x32xf32> to vector<8x8xf32>
    %326 = vector.extract_strided_slice %272 {offsets = [0, 24], sizes = [16, 8], strides = [1, 1]} : vector<16x32xf32> to vector<16x8xf32>
    %327 = vector.extract_strided_slice %273 {offsets = [0, 24], sizes = [16, 8], strides = [1, 1]} : vector<16x32xf32> to vector<16x8xf32>
    %cst_106 = arith.constant dense<0.000000e+00> : vector<8x16xf32>
    %328 = tpu.matmul %325, %326, %cst_106 {dimension_numbers = #tpu.dot_dimension_numbers<[1], [1], [0], [0], [0, 0, 1, 0], [], []>} : vector<8x8xf32>, vector<16x8xf32>, vector<8x16xf32> -> vector<8x16xf32>
    %cst_107 = arith.constant 0.353553385 : f32
    %329 = vector.broadcast %cst_107 : f32 to vector<8x16xf32>
    %330 = arith.mulf %328, %329 : vector<8x16xf32>
    %cst_108 = arith.constant dense<0xFF800000> : vector<8xf32>
    %331 = vector.multi_reduction <maximumf>, %330, %cst_108 [1] : vector<8x16xf32> to vector<8xf32>
    %332 = vector.shape_cast %331 : vector<8xf32> to vector<8x1xf32>
    %333 = vector.broadcast %332 : vector<8x1xf32> to vector<8x16xf32>
    %334 = arith.subf %330, %333 : vector<8x16xf32>
    %335 = math.exp %334 : vector<8x16xf32>
    %cst_109 = arith.constant dense<0.000000e+00> : vector<8xf32>
    %336 = vector.multi_reduction <add>, %335, %cst_109 [1] : vector<8x16xf32> to vector<8xf32>
    %337 = vector.shape_cast %336 : vector<8xf32> to vector<8x1xf32>
    %338 = tpu.reciprocal %337 : vector<8x1xf32> -> vector<8x1xf32>
    %339 = vector.broadcast %338 : vector<8x1xf32> to vector<8x16xf32>
    %340 = arith.mulf %335, %339 : vector<8x16xf32>
    %cst_110 = arith.constant dense<0.000000e+00> : vector<8x8xf32>
    %341 = tpu.matmul %340, %327, %cst_110 {dimension_numbers = #tpu.dot_dimension_numbers<[1], [0], [0], [1], [0, 0, 1, 1], [], []>} : vector<8x16xf32>, vector<16x8xf32>, vector<8x8xf32> -> vector<8x8xf32>
    %342 = tpu.concatenate %290, %307, %324, %341 in 1 : vector<8x8xf32>, vector<8x8xf32>, vector<8x8xf32>, vector<8x8xf32> -> vector<8x32xf32>
    %cst_111 = arith.constant dense<0.000000e+00> : vector<8x32xf32>
    %343 = tpu.matmul %342, %196, %cst_111 {dimension_numbers = #tpu.dot_dimension_numbers<[1], [0], [0], [1], [0, 0, 1, 1], [], []>} : vector<8x32xf32>, vector<32x32xf32>, vector<8x32xf32> -> vector<8x32xf32>
    %c8_112 = arith.constant 8 : index
    %c0_113 = arith.constant 0 : index
    %344 = vector.load %arg5[%c8_112, %c0_113] : memref<16x32xf32, #tpu.memory_space<vmem>>, vector<8x32xf32>
    tpu.vector_store %arg5[%c8_112, %c0_113], %343 {strides = array<i32>} : memref<16x32xf32, #tpu.memory_space<vmem>>, vector<8x32xf32>,
    %c192 = arith.constant 192 : index
    %c0_114 = arith.constant 0 : index
    %345 = vector.load %arg3[%c192, %c0_114] : memref<320x128xf32, #tpu.memory_space<vmem>>, vector<1x32xf32>
    %c0_115 = arith.constant 0 : index
    %c0_116 = arith.constant 0 : index
    %346 = vector.load %arg5[%c0_115, %c0_116] : memref<16x32xf32, #tpu.memory_space<vmem>>, vector<16x32xf32>
    %347 = arith.addf %185, %346 : vector<16x32xf32>
    %348 = vector.broadcast %345 : vector<1x32xf32> to vector<16x32xf32>
    %349 = arith.addf %347, %348 : vector<16x32xf32>
    %350 = vector.extract_strided_slice %2 {offsets = [2, 0], sizes = [1, 32], strides = [1, 1]} : vector<6x32xf32> to vector<1x32xf32>
    %351 = vector.extract_strided_slice %2 {offsets = [3, 0], sizes = [1, 32], strides = [1, 1]} : vector<6x32xf32> to vector<1x32xf32>
    %cst_117 = arith.constant dense<0.000000e+00> : vector<16xf32>
    %352 = vector.multi_reduction <add>, %349, %cst_117 [1] : vector<16x32xf32> to vector<16xf32>
    %353 = vector.shape_cast %352 : vector<16xf32> to vector<16x1xf32>
    %cst_118 = arith.constant 3.200000e+01 : f32
    %354 = vector.broadcast %cst_118 : f32 to vector<16x1xf32>
    %355 = arith.divf %353, %354 : vector<16x1xf32>
    %356 = vector.broadcast %355 : vector<16x1xf32> to vector<16x32xf32>
    %357 = arith.subf %349, %356 : vector<16x32xf32>
    %358 = arith.mulf %357, %357 : vector<16x32xf32>
    %cst_119 = arith.constant dense<0.000000e+00> : vector<16xf32>
    %359 = vector.multi_reduction <add>, %358, %cst_119 [1] : vector<16x32xf32> to vector<16xf32>
    %360 = vector.shape_cast %359 : vector<16xf32> to vector<16x1xf32>
    %cst_120 = arith.constant 3.200000e+01 : f32
    %361 = vector.broadcast %cst_120 : f32 to vector<16x1xf32>
    %362 = arith.divf %360, %361 : vector<16x1xf32>
    %cst_121 = arith.constant 9.99999974E-6 : f32
    %363 = vector.broadcast %cst_121 : f32 to vector<16x1xf32>
    %364 = arith.addf %362, %363 : vector<16x1xf32>
    %365 = math.rsqrt %364 : vector<16x1xf32>
    %366 = vector.broadcast %355 : vector<16x1xf32> to vector<16x32xf32>
    %367 = arith.subf %349, %366 : vector<16x32xf32>
    %368 = vector.broadcast %365 : vector<16x1xf32> to vector<16x32xf32>
    %369 = arith.mulf %367, %368 : vector<16x32xf32>
    %370 = vector.broadcast %350 : vector<1x32xf32> to vector<16x32xf32>
    %371 = arith.mulf %369, %370 : vector<16x32xf32>
    %372 = vector.broadcast %351 : vector<1x32xf32> to vector<16x32xf32>
    %373 = arith.addf %371, %372 : vector<16x32xf32>
    %c200 = arith.constant 200 : index
    %c0_122 = arith.constant 0 : index
    %374 = vector.load %arg3[%c200, %c0_122] : memref<320x128xf32, #tpu.memory_space<vmem>>, vector<32x64xf32>
    %c232 = arith.constant 232 : index
    %c0_123 = arith.constant 0 : index
    %375 = vector.load %arg3[%c232, %c0_123] : memref<320x128xf32, #tpu.memory_space<vmem>>, vector<1x64xf32>
    %c240 = arith.constant 240 : index
    %c0_124 = arith.constant 0 : index
    %376 = vector.load %arg3[%c240, %c0_124] : memref<320x128xf32, #tpu.memory_space<vmem>>, vector<64x32xf32>
    %c304 = arith.constant 304 : index
    %c0_125 = arith.constant 0 : index
    %377 = vector.load %arg3[%c304, %c0_125] : memref<320x128xf32, #tpu.memory_space<vmem>>, vector<1x32xf32>
    %cst_126 = arith.constant dense<0.000000e+00> : vector<16x64xf32>
    %378 = tpu.matmul %373, %374, %cst_126 {dimension_numbers = #tpu.dot_dimension_numbers<[1], [0], [0], [1], [0, 0, 1, 1], [], []>} : vector<16x32xf32>, vector<32x64xf32>, vector<16x64xf32> -> vector<16x64xf32>
    %379 = vector.broadcast %375 : vector<1x64xf32> to vector<16x64xf32>
    %380 = arith.addf %378, %379 : vector<16x64xf32>
    %cst_127 = arith.constant 0.000000e+00 : f32
    %381 = vector.broadcast %cst_127 : f32 to vector<16x64xf32>
    %382 = arith.maximumf %380, %381 : vector<16x64xf32>
    %cst_128 = arith.constant dense<0.000000e+00> : vector<16x32xf32>
    %383 = tpu.matmul %382, %376, %cst_128 {dimension_numbers = #tpu.dot_dimension_numbers<[1], [0], [0], [1], [0, 0, 1, 1], [], []>} : vector<16x64xf32>, vector<64x32xf32>, vector<16x32xf32> -> vector<16x32xf32>
    %384 = vector.broadcast %377 : vector<1x32xf32> to vector<16x32xf32>
    %385 = arith.addf %383, %384 : vector<16x32xf32>
    %386 = arith.addf %373, %385 : vector<16x32xf32>
    %387 = vector.extract_strided_slice %2 {offsets = [4, 0], sizes = [1, 32], strides = [1, 1]} : vector<6x32xf32> to vector<1x32xf32>
    %388 = vector.extract_strided_slice %2 {offsets = [5, 0], sizes = [1, 32], strides = [1, 1]} : vector<6x32xf32> to vector<1x32xf32>
    %cst_129 = arith.constant dense<0.000000e+00> : vector<16xf32>
    %389 = vector.multi_reduction <add>, %386, %cst_129 [1] : vector<16x32xf32> to vector<16xf32>
    %390 = vector.shape_cast %389 : vector<16xf32> to vector<16x1xf32>
    %cst_130 = arith.constant 3.200000e+01 : f32
    %391 = vector.broadcast %cst_130 : f32 to vector<16x1xf32>
    %392 = arith.divf %390, %391 : vector<16x1xf32>
    %393 = vector.broadcast %392 : vector<16x1xf32> to vector<16x32xf32>
    %394 = arith.subf %386, %393 : vector<16x32xf32>
    %395 = arith.mulf %394, %394 : vector<16x32xf32>
    %cst_131 = arith.constant dense<0.000000e+00> : vector<16xf32>
    %396 = vector.multi_reduction <add>, %395, %cst_131 [1] : vector<16x32xf32> to vector<16xf32>
    %397 = vector.shape_cast %396 : vector<16xf32> to vector<16x1xf32>
    %cst_132 = arith.constant 3.200000e+01 : f32
    %398 = vector.broadcast %cst_132 : f32 to vector<16x1xf32>
    %399 = arith.divf %397, %398 : vector<16x1xf32>
    %cst_133 = arith.constant 9.99999974E-6 : f32
    %400 = vector.broadcast %cst_133 : f32 to vector<16x1xf32>
    %401 = arith.addf %399, %400 : vector<16x1xf32>
    %402 = math.rsqrt %401 : vector<16x1xf32>
    %403 = vector.broadcast %392 : vector<16x1xf32> to vector<16x32xf32>
    %404 = arith.subf %386, %403 : vector<16x32xf32>
    %405 = vector.broadcast %402 : vector<16x1xf32> to vector<16x32xf32>
    %406 = arith.mulf %404, %405 : vector<16x32xf32>
    %407 = vector.broadcast %387 : vector<1x32xf32> to vector<16x32xf32>
    %408 = arith.mulf %406, %407 : vector<16x32xf32>
    %409 = vector.broadcast %388 : vector<1x32xf32> to vector<16x32xf32>
    %410 = arith.addf %408, %409 : vector<16x32xf32>
    %c0_134 = arith.constant 0 : index
    %c0_135 = arith.constant 0 : index
    %411 = vector.load %arg4[%c0_134, %c0_135] : memref<16x32xf32, #tpu.memory_space<vmem>>, vector<16x32xf32>
    tpu.vector_store %arg4[%c0_134, %c0_135], %410 {strides = array<i32>} : memref<16x32xf32, #tpu.memory_space<vmem>>, vector<16x32xf32>,
    return
  }
  func.func @transform_0(%arg0: i32) -> (i32, i32) {
    %c0_i32 = arith.constant 0 : i32
    %c0_i32_0 = arith.constant 0 : i32
    %c0_i32_1 = arith.constant 0 : i32
    return %c0_i32, %c0_i32_0 : i32, i32
  }
  func.func @transform_1(%arg0: i32) -> (i32, i32) {
    %c0_i32 = arith.constant 0 : i32
    %c0_i32_0 = arith.constant 0 : i32
    %c0_i32_1 = arith.constant 0 : i32
    return %c0_i32, %c0_i32_0 : i32, i32
  }
  func.func @transform_2(%arg0: i32) -> (i32, i32) {
    %c0_i32 = arith.constant 0 : i32
    %c0_i32_0 = arith.constant 0 : i32
    %c0_i32_1 = arith.constant 0 : i32
    return %c0_i32, %c0_i32_0 : i32, i32
  }
  func.func @transform_3(%arg0: i32) -> (i32, i32) {
    %c0_i32 = arith.constant 0 : i32
    %c0_i32_0 = arith.constant 0 : i32
    %c0_i32_1 = arith.constant 0 : i32
    return %c0_i32, %c0_i32_0 : i32, i32
  }
}

</mosaic_0001>

<llo_original>
// kernel: decoder_layer.1
$region0: #{decoder_layer.1}
  #allocation0 [shape = 'u32[]', space=smem, size = 0x4, offset = 0x4, fixed_abs, tag = 'smem constant byte address 0x4 - core index']
  #allocation1 [shape = 'u32[144,128]{1,0:T(1,128)}', space=vmem, size = 0x12000, scoped, tag = 'internal scratch']
  #allocation2 [shape = 'f32[16,32]{1,0:T(8,128)}', space=vmem, size = 0x2000, scoped, tag = 'scratch operand']
  %s0 = inlined_call_operand.hbm [shape: f32[16,32], index: 0, kind: input, shape index: {}]
  %s1 = inlined_call_operand.hbm [shape: f32[32,32], index: 1, kind: input, shape index: {}]
  %s2 = inlined_call_operand.hbm [shape: f32[320,128], index: 2, kind: input, shape index: {}]
  %s3 = inlined_call_operand.hbm [shape: f32[16,32], index: 3, kind: output, shape index: {}]
  %s4 = sld [smem:[#allocation0]]
  $region34: #{decoder_layer.1} parent=0
    _
  %s6 = ssub.s32 1, %s4
  %s7 = scalar_select 0, %s6, %s4
  $region1: #{decoder_layer.1} parent=0
    #allocation3 [shape = 'u8[8192]{0}', space=vmem, size = 0x2000, scoped, tag = 'input window, operand 0, single buffered']
    #allocation4 [shape = 's32[1]{0}', space=sflag, size = 0x4, scoped, tag = 'scoped memory for decoder_layer.1']
    #allocation5 [shape = 's32[1]{0}', space=sflag, size = 0x4, scoped, tag = 'scoped memory for decoder_layer.1']
    #allocation6 [shape = 'u8[16384]{0}', space=vmem, size = 0x4000, scoped, tag = 'input window, operand 1, single buffered']
    #allocation7 [shape = 's32[1]{0}', space=sflag, size = 0x4, scoped, tag = 'scoped memory for decoder_layer.1']
    #allocation8 [shape = 'u8[163840]{0}', space=vmem, size = 0x28000, scoped, tag = 'input window, operand 2, single buffered']
    #allocation9 [shape = 'u8[8192]{0}', space=vmem, size = 0x2000, scoped, tag = 'output window, operand 0, single buffered']
    %8 = vsyncpa [#allocation4], 0
    %9 = vsyncpa [#allocation7], 0
    %10 = vsyncpa [#allocation5], 0
    // Predicated region
    $region2: #{decoder_layer.1} parent=1 // pred_check
      _
    $region3: #{decoder_layer.1} parent=1 // pred_check_branch
      %12 = sbr.rel (0) target = $region5
    $region4: #{decoder_layer.1} parent=1 // pred_region
      %s14 = ssub.s32 256, 256
      %15 = vsyncadd [#allocation4], %s14
      %s16 = sshll.u32 [#allocation3], 4
      %s17 = int_to_ptr.vmem [resolvable:$true] %s16
      %22 = dma.hbm_to_vmem [thread:$0]  %s0, 256, %s17, [#allocation4], 128, 128, 8
    $region5: #{decoder_layer.1} parent=1 // pred_fallthru
      _
    // Predicated region
    $region6: #{decoder_layer.1} parent=1 // pred_check
      _
    $region7: #{decoder_layer.1} parent=1 // pred_check_branch
      %24 = sbr.rel (0) target = $region9
    $region8: #{decoder_layer.1} parent=1 // pred_region
      %s26 = ssub.s32 512, 512
      %27 = vsyncadd [#allocation7], %s26
      %s28 = sshll.u32 [#allocation6], 4
      %s29 = int_to_ptr.vmem [resolvable:$true] %s28
      %34 = dma.hbm_to_vmem [thread:$0]  %s1, 512, %s29, [#allocation7], 128, 128, 8
    $region9: #{decoder_layer.1} parent=1 // pred_fallthru
      _
    // Predicated region
    $region10: #{decoder_layer.1} parent=1 // pred_check
      _
    $region11: #{decoder_layer.1} parent=1 // pred_check_branch
      %36 = sbr.rel (0) target = $region13
    $region12: #{decoder_layer.1} parent=1 // pred_region
      %s38 = ssub.s32 5120, 5120
      %39 = vsyncadd [#allocation7], %s38
      %s40 = sshll.u32 [#allocation8], 4
      %s41 = int_to_ptr.vmem [resolvable:$true] %s40
      %46 = dma.hbm_to_vmem [thread:$0]  %s2, 5120, %s41, [#allocation7], 128, 128, 8
    $region13: #{decoder_layer.1} parent=1 // pred_fallthru
      _
    // Predicated region
    $region14: #{decoder_layer.1} parent=1 // pred_check
      _
    $region15: #{decoder_layer.1} parent=1 // pred_check_branch
      %48 = sbr.rel (0) target = $region17
    $region16: #{decoder_layer.1} parent=1 // pred_region
      %49 = dma.done [#allocation4], 256
    $region17: #{decoder_layer.1} parent=1 // pred_fallthru
      _
    // Predicated region
    $region18: #{decoder_layer.1} parent=1 // pred_check
      _
    $region19: #{decoder_layer.1} parent=1 // pred_check_branch
      %51 = sbr.rel (0) target = $region21
    $region20: #{decoder_layer.1} parent=1 // pred_region
      %52 = dma.done [#allocation7], 512
    $region21: #{decoder_layer.1} parent=1 // pred_fallthru
      _
    // Predicated region
    $region22: #{decoder_layer.1} parent=1 // pred_check
      _
    $region23: #{decoder_layer.1} parent=1 // pred_check_branch
      %54 = sbr.rel (0) target = $region25
    $region24: #{decoder_layer.1} parent=1 // pred_region
      %55 = dma.done [#allocation7], 5120
    $region25: #{decoder_layer.1} parent=1 // pred_fallthru
      _
    %v56 = vld [vmem:[#allocation3] sm:$0xff]
    %v57 = vld [vmem:[#allocation3 + $0x8] sm:$0xff]
    %v58 = vld [vmem:[#allocation6] sm:$0xff]
    %v59 = vld [vmem:[#allocation6 + $0x8] sm:$0xff]
    %v60 = vld [vmem:[#allocation6 + $0x10] sm:$0xff]
    %v61 = vld [vmem:[#allocation6 + $0x18] sm:$0xff]
    %v62 = vld [vmem:[#allocation8 + $0x138] sm:$0x3f]
    %v63 = vld [vmem:[#allocation8] sm:$0xff]
    %v64 = vld [vmem:[#allocation8 + $0x8] sm:$0xff]
    %v65 = vld [vmem:[#allocation8 + $0x10] sm:$0xff]
    %v66 = vld [vmem:[#allocation8 + $0x18] sm:$0xff]
    %v67 = vld [vmem:[#allocation8 + $0x20] sm:$0x1]
    %v68 = vlaneseq
    %v69 = vshrl.u32 %v68, 7
    %v70 = vsub.s32 0, %v69
    %v71 = vrot.slane %v67, %v70
    %vm72 = vcmask 261120
    %v74 = vsel %vm72, %v56, 0
    %v77 = vsel %vm72, %v57, 0
    %79 = vmatprep.subr.mxu0 0.0
    %80 = vmatpush1.msra.mxu0 %v63
    %81 = vmatprep.subr.mxu0 0.0
    %82 = vmatpush1.msra.mxu0 %v64
    %83 = vmatprep.subr.mxu0 0.0
    %84 = vmatpush1.msra.mxu0 %v65
    %85 = vmatprep.subr.mxu0 0.0
    %86 = vmatpush1.msra.mxu0 %v66
    %87 = vmatprep.subr.mxu0 0.0
    %88 = vmatpush1.msra.mxu0 0.0
    %89 = vmatprep.subr.mxu0 0.0
    %90 = vmatpush1.msra.mxu0 0.0
    %91 = vmatprep.subr.mxu0 0.0
    %92 = vmatpush1.msra.mxu0 0.0
    %93 = vmatprep.subr.mxu0 0.0
    %94 = vmatpush1.msra.mxu0 0.0
    %95 = vmatprep.subr.mxu0 0.0
    %96 = vmatpush1.msra.mxu0 0.0
    %97 = vmatprep.subr.mxu0 0.0
    %98 = vmatpush1.msra.mxu0 0.0
    %99 = vmatprep.subr.mxu0 0.0
    %100 = vmatpush1.msra.mxu0 0.0
    %101 = vmatprep.subr.mxu0 0.0
    %102 = vmatpush1.msra.mxu0 0.0
    %103 = vmatprep.subr.mxu0 0.0
    %104 = vmatpush1.msra.mxu0 0.0
    %105 = vmatprep.subr.mxu0 0.0
    %106 = vmatpush1.msra.mxu0 0.0
    %107 = vmatprep.subr.mxu0 0.0
    %108 = vmatpush1.msra.mxu0 0.0
    %109 = vmatprep.subr.mxu0 0.0
    %110 = vmatpush1.msra.mxu0 0.0
    %111 = vmatprep.subr.mxu0 0.0
    %112 = vmatpush1.msra.mxu0 0.0
    %113 = vmatprep.subr.mxu0 0.0
    %114 = vmatpush1.msra.mxu0 0.0
    %115 = vmatprep.subr.mxu0 0.0
    %116 = vmatpush1.msra.mxu0 0.0
    %117 = vmatprep.subr.mxu0 0.0
    %118 = vmatpush1.msra.mxu0 0.0
    %119 = vmatprep.subr.mxu0 0.0
    %120 = vmatpush1.msra.mxu0 0.0
    %121 = vmatprep.subr.mxu0 0.0
    %122 = vmatpush1.msra.mxu0 0.0
    %123 = vmatprep.subr.mxu0 0.0
    %124 = vmatpush1.msra.mxu0 0.0
    %125 = vmatprep.subr.mxu0 0.0
    %126 = vmatpush1.msra.mxu0 0.0
    %127 = vmatprep.subr.mxu0 0.0
    %128 = vmatpush1.msra.mxu0 0.0
    %129 = vmatprep.subr.mxu0 0.0
    %130 = vmatpush1.msra.mxu0 0.0
    %131 = vmatprep.subr.mxu0 0.0
    %132 = vmatpush1.msra.mxu0 0.0
    %133 = vmatprep.subr.mxu0 0.0
    %134 = vmatpush1.msra.mxu0 0.0
    %135 = vmatprep.subr.mxu0 0.0
    %136 = vmatpush1.msra.mxu0 0.0
    %137 = vmatprep.subr.mxu0 0.0
    %138 = vmatpush1.msra.mxu0 0.0
    %139 = vmatprep.subr.mxu0 0.0
    %140 = vmatpush1.msra.mxu0 0.0
    %141 = vmatprep.subr.mxu0 0.0
    %142 = vmatpush1.msra.mxu0 0.0
    %143 = vmatprep.mubr.f32.mxu0 0.0
    %144 = vmatmul.mubr.f32.gmra.mrb[0].mxu0 %v74
    %v145 = vpop.f32.mrb[0].mxu0
    %v146 = vadd.f32 %v71, %v145
    %v147 = vpop.f32.mrb[0].mxu0
    %148 = vmatprep.mubr.f32.mxu0 0.0
    %149 = vmatmul.mubr.f32.gmra.mrb[0].mxu0 %v77
    %v150 = vpop.f32.mrb[0].mxu0
    %v151 = vadd.f32 %v71, %v150
    %v152 = vpop.f32.mrb[0].mxu0
    %153 = vdwg.mxu0
    %v154 = vld [vmem:[#allocation8 + $0x28] sm:$0xff]
    %v155 = vld [vmem:[#allocation8 + $0x30] sm:$0xff]
    %v156 = vld [vmem:[#allocation8 + $0x38] sm:$0xff]
    %v157 = vld [vmem:[#allocation8 + $0x40] sm:$0xff]
    %159 = vrot.lane.b32.xlu0 %v146, 96
    %v160 = vpop.permute.xlu0 %159
    %vm161 = vcmask 64512
    %v162 = vsel %vm161, %v146, 0
    %v164 = vsel %vm161, %v160, 0
    %166 = vmatprep.subr.mxu0 0.0
    %167 = vmatpush1.xpose.msra.mxu0 %v164
    %168 = vmatprep.subr.mxu0 0.0
    %169 = vmatpush1.xpose.msra.mxu0 0.0
    %170 = vmatprep.subr.mxu0 0.0
    %171 = vmatpush1.xpose.msra.mxu0 0.0
    %172 = vmatprep.subr.mxu0 0.0
    %173 = vmatpush1.xpose.msra.mxu0 0.0
    %174 = vmatprep.subr.mxu0 0.0
    %175 = vmatpush1.xpose.msra.mxu0 0.0
    %176 = vmatprep.subr.mxu0 0.0
    %177 = vmatpush1.xpose.msra.mxu0 0.0
    %178 = vmatprep.subr.mxu0 0.0
    %179 = vmatpush1.xpose.msra.mxu0 0.0
    %180 = vmatprep.subr.mxu0 0.0
    %181 = vmatpush1.xpose.msra.mxu0 0.0
    %182 = vmatprep.subr.mxu0 0.0
    %183 = vmatpush1.xpose.msra.mxu0 0.0
    %184 = vmatprep.subr.mxu0 0.0
    %185 = vmatpush1.xpose.msra.mxu0 0.0
    %186 = vmatprep.subr.mxu0 0.0
    %187 = vmatpush1.xpose.msra.mxu0 0.0
    %188 = vmatprep.subr.mxu0 0.0
    %189 = vmatpush1.xpose.msra.mxu0 0.0
    %190 = vmatprep.subr.mxu0 0.0
    %191 = vmatpush1.xpose.msra.mxu0 0.0
    %192 = vmatprep.subr.mxu0 0.0
    %193 = vmatpush1.xpose.msra.mxu0 0.0
    %194 = vmatprep.subr.mxu0 0.0
    %195 = vmatpush1.xpose.msra.mxu0 0.0
    %196 = vmatprep.subr.mxu0 0.0
    %197 = vmatpush1.xpose.msra.mxu0 0.0
    %198 = vmatprep.subr.mxu0 0.0
    %199 = vmatpush1.xpose.msra.mxu0 0.0
    %200 = vmatprep.subr.mxu0 0.0
    %201 = vmatpush1.xpose.msra.mxu0 0.0
    %202 = vmatprep.subr.mxu0 0.0
    %203 = vmatpush1.xpose.msra.mxu0 0.0
    %204 = vmatprep.subr.mxu0 0.0
    %205 = vmatpush1.xpose.msra.mxu0 0.0
    %206 = vmatprep.subr.mxu0 0.0
    %207 = vmatpush1.xpose.msra.mxu0 0.0
    %208 = vmatprep.subr.mxu0 0.0
    %209 = vmatpush1.xpose.msra.mxu0 0.0
    %210 = vmatprep.subr.mxu0 0.0
    %211 = vmatpush1.xpose.msra.mxu0 0.0
    %212 = vmatprep.subr.mxu0 0.0
    %213 = vmatpush1.xpose.msra.mxu0 0.0
    %214 = vmatprep.subr.mxu0 0.0
    %215 = vmatpush1.xpose.msra.mxu0 0.0
    %216 = vmatprep.subr.mxu0 0.0
    %217 = vmatpush1.xpose.msra.mxu0 0.0
    %218 = vmatprep.subr.mxu0 0.0
    %219 = vmatpush1.xpose.msra.mxu0 0.0
    %220 = vmatprep.subr.mxu0 0.0
    %221 = vmatpush1.xpose.msra.mxu0 0.0
    %222 = vmatprep.subr.mxu0 0.0
    %223 = vmatpush1.xpose.msra.mxu0 0.0
    %224 = vmatprep.subr.mxu0 0.0
    %225 = vmatpush1.xpose.msra.mxu0 0.0
    %226 = vmatprep.subr.mxu0 0.0
    %227 = vmatpush1.xpose.msra.mxu0 0.0
    %228 = vmatprep.subr.mxu0 0.0
    %229 = vmatpush1.xpose.msra.mxu0 0.0
    %230 = vmatprep.mubr.f32.mxu0 0.0
    %231 = vmatmul.mubr.f32.gmra.mrb[0].mxu0 %v162
    %v232 = vpop.f32.mrb[0].mxu0
    %v233 = vadd.f32 0.0, %v232
    %v234 = vpop.f32.mrb[0].mxu0
    %235 = vdwg.mxu0
    %v236 = vmul.f32 %v233, 0.35355338
    %v237 = vsel %vm161, %v236, -inf
    %238 = vmax.xlane.f32.xlu0 %v237
    %v239 = vpop.xlane.xlu0 %238
    %v240 = vsub.f32 %v236, %v239
    %v241 = vmul.f32 %v240, 1.442695
    %v242 = vpow.pop %v241
    %v243 = vsel %vm161, %v242, 0.0
    %244 = vadd.xlane.f32.xlu0 %v243
    %v245 = vpop.xlane.xlu0 %244
    %v246 = vrcp.pop %v245
    %v247 = vmul.f32 %v242, %v246
    %248 = vrot.lane.b32.xlu0 %v146, 64
    %v249 = vpop.permute.xlu0 %248
    %v252 = vsel %vm161, %v247, 0
    %254 = vmatprep.subr.mxu0 0.0
    %255 = vmatpush1.msra.mxu0 %v249
    %256 = vmatprep.subr.mxu0 0.0
    %257 = vmatpush1.msra.mxu0 0.0
    %258 = vmatprep.subr.mxu0 0.0
    %259 = vmatpush1.msra.mxu0 0.0
    %260 = vmatprep.subr.mxu0 0.0
    %261 = vmatpush1.msra.mxu0 0.0
    %262 = vmatprep.subr.mxu0 0.0
    %263 = vmatpush1.msra.mxu0 0.0
    %264 = vmatprep.subr.mxu0 0.0
    %265 = vmatpush1.msra.mxu0 0.0
    %266 = vmatprep.subr.mxu0 0.0
    %267 = vmatpush1.msra.mxu0 0.0
    %268 = vmatprep.subr.mxu0 0.0
    %269 = vmatpush1.msra.mxu0 0.0
    %270 = vmatprep.subr.mxu0 0.0
    %271 = vmatpush1.msra.mxu0 0.0
    %272 = vmatprep.subr.mxu0 0.0
    %273 = vmatpush1.msra.mxu0 0.0
    %274 = vmatprep.subr.mxu0 0.0
    %275 = vmatpush1.msra.mxu0 0.0
    %276 = vmatprep.subr.mxu0 0.0
    %277 = vmatpush1.msra.mxu0 0.0
    %278 = vmatprep.subr.mxu0 0.0
    %279 = vmatpush1.msra.mxu0 0.0
    %280 = vmatprep.subr.mxu0 0.0
    %281 = vmatpush1.msra.mxu0 0.0
    %282 = vmatprep.subr.mxu0 0.0
    %283 = vmatpush1.msra.mxu0 0.0
    %284 = vmatprep.subr.mxu0 0.0
    %285 = vmatpush1.msra.mxu0 0.0
    %286 = vmatprep.subr.mxu0 0.0
    %287 = vmatpush1.msra.mxu0 0.0
    %288 = vmatprep.subr.mxu0 0.0
    %289 = vmatpush1.msra.mxu0 0.0
    %290 = vmatprep.subr.mxu0 0.0
    %291 = vmatpush1.msra.mxu0 0.0
    %292 = vmatprep.subr.mxu0 0.0
    %293 = vmatpush1.msra.mxu0 0.0
    %294 = vmatprep.subr.mxu0 0.0
    %295 = vmatpush1.msra.mxu0 0.0
    %296 = vmatprep.subr.mxu0 0.0
    %297 = vmatpush1.msra.mxu0 0.0
    %298 = vmatprep.subr.mxu0 0.0
    %299 = vmatpush1.msra.mxu0 0.0
    %300 = vmatprep.subr.mxu0 0.0
    %301 = vmatpush1.msra.mxu0 0.0
    %302 = vmatprep.subr.mxu0 0.0
    %303 = vmatpush1.msra.mxu0 0.0
    %304 = vmatprep.subr.mxu0 0.0
    %305 = vmatpush1.msra.mxu0 0.0
    %306 = vmatprep.subr.mxu0 0.0
    %307 = vmatpush1.msra.mxu0 0.0
    %308 = vmatprep.subr.mxu0 0.0
    %309 = vmatpush1.msra.mxu0 0.0
    %310 = vmatprep.subr.mxu0 0.0
    %311 = vmatpush1.msra.mxu0 0.0
    %312 = vmatprep.subr.mxu0 0.0
    %313 = vmatpush1.msra.mxu0 0.0
    %314 = vmatprep.subr.mxu0 0.0
    %315 = vmatpush1.msra.mxu0 0.0
    %316 = vmatprep.subr.mxu0 0.0
    %317 = vmatpush1.msra.mxu0 0.0
    %318 = vmatprep.mubr.f32.mxu0 0.0
    %319 = vmatmul.mubr.f32.gmra.mrb[0].mxu0 %v252
    %v320 = vpop.f32.mrb[0].mxu0
    %v321 = vadd.f32 0.0, %v320
    %v322 = vpop.f32.mrb[0].mxu0
    %323 = vdwg.mxu0
    %324 = vrot.lane.b32.xlu0 %v146, 120
    %v325 = vpop.permute.xlu0 %324
    %326 = vrot.lane.b32.xlu0 %v146, 88
    %v327 = vpop.permute.xlu0 %326
    %v328 = vsel %vm161, %v325, 0
    %v330 = vsel %vm161, %v327, 0
    %332 = vmatprep.subr.mxu0 0.0
    %333 = vmatpush1.xpose.msra.mxu0 %v330
    %334 = vmatprep.subr.mxu0 0.0
    %335 = vmatpush1.xpose.msra.mxu0 0.0
    %336 = vmatprep.subr.mxu0 0.0
    %337 = vmatpush1.xpose.msra.mxu0 0.0
    %338 = vmatprep.subr.mxu0 0.0
    %339 = vmatpush1.xpose.msra.mxu0 0.0
    %340 = vmatprep.subr.mxu0 0.0
    %341 = vmatpush1.xpose.msra.mxu0 0.0
    %342 = vmatprep.subr.mxu0 0.0
    %343 = vmatpush1.xpose.msra.mxu0 0.0
    %344 = vmatprep.subr.mxu0 0.0
    %345 = vmatpush1.xpose.msra.mxu0 0.0
    %346 = vmatprep.subr.mxu0 0.0
    %347 = vmatpush1.xpose.msra.mxu0 0.0
    %348 = vmatprep.subr.mxu0 0.0
    %349 = vmatpush1.xpose.msra.mxu0 0.0
    %350 = vmatprep.subr.mxu0 0.0
    %351 = vmatpush1.xpose.msra.mxu0 0.0
    %352 = vmatprep.subr.mxu0 0.0
    %353 = vmatpush1.xpose.msra.mxu0 0.0
    %354 = vmatprep.subr.mxu0 0.0
    %355 = vmatpush1.xpose.msra.mxu0 0.0
    %356 = vmatprep.subr.mxu0 0.0
    %357 = vmatpush1.xpose.msra.mxu0 0.0
    %358 = vmatprep.subr.mxu0 0.0
    %359 = vmatpush1.xpose.msra.mxu0 0.0
    %360 = vmatprep.subr.mxu0 0.0
    %361 = vmatpush1.xpose.msra.mxu0 0.0
    %362 = vmatprep.subr.mxu0 0.0
    %363 = vmatpush1.xpose.msra.mxu0 0.0
    %364 = vmatprep.subr.mxu0 0.0
    %365 = vmatpush1.xpose.msra.mxu0 0.0
    %366 = vmatprep.subr.mxu0 0.0
    %367 = vmatpush1.xpose.msra.mxu0 0.0
    %368 = vmatprep.subr.mxu0 0.0
    %369 = vmatpush1.xpose.msra.mxu0 0.0
    %370 = vmatprep.subr.mxu0 0.0
    %371 = vmatpush1.xpose.msra.mxu0 0.0
    %372 = vmatprep.subr.mxu0 0.0
    %373 = vmatpush1.xpose.msra.mxu0 0.0
    %374 = vmatprep.subr.mxu0 0.0
    %375 = vmatpush1.xpose.msra.mxu0 0.0
    %376 = vmatprep.subr.mxu0 0.0
    %377 = vmatpush1.xpose.msra.mxu0 0.0
    %378 = vmatprep.subr.mxu0 0.0
    %379 = vmatpush1.xpose.msra.mxu0 0.0
    %380 = vmatprep.subr.mxu0 0.0
    %381 = vmatpush1.xpose.msra.mxu0 0.0
    %382 = vmatprep.subr.mxu0 0.0
    %383 = vmatpush1.xpose.msra.mxu0 0.0
    %384 = vmatprep.subr.mxu0 0.0
    %385 = vmatpush1.xpose.msra.mxu0 0.0
    %386 = vmatprep.subr.mxu0 0.0
    %387 = vmatpush1.xpose.msra.mxu0 0.0
    %388 = vmatprep.subr.mxu0 0.0
    %389 = vmatpush1.xpose.msra.mxu0 0.0
    %390 = vmatprep.subr.mxu0 0.0
    %391 = vmatpush1.xpose.msra.mxu0 0.0
    %392 = vmatprep.subr.mxu0 0.0
    %393 = vmatpush1.xpose.msra.mxu0 0.0
    %394 = vmatprep.subr.mxu0 0.0
    %395 = vmatpush1.xpose.msra.mxu0 0.0
    %396 = vmatprep.mubr.f32.mxu0 0.0
    %397 = vmatmul.mubr.f32.gmra.mrb[0].mxu0 %v328
    %v398 = vpop.f32.mrb[0].mxu0
    %v399 = vadd.f32 0.0, %v398
    %v400 = vpop.f32.mrb[0].mxu0
    %401 = vdwg.mxu0
    %v402 = vmul.f32 %v399, 0.35355338
    %v403 = vsel %vm161, %v402, -inf
    %404 = vmax.xlane.f32.xlu0 %v403
    %v405 = vpop.xlane.xlu0 %404
    %v406 = vsub.f32 %v402, %v405
    %v407 = vmul.f32 %v406, 1.442695
    %v408 = vpow.pop %v407
    %v409 = vsel %vm161, %v408, 0.0
    %410 = vadd.xlane.f32.xlu0 %v409
    %v411 = vpop.xlane.xlu0 %410
    %v412 = vrcp.pop %v411
    %v413 = vmul.f32 %v408, %v412
    %414 = vrot.lane.b32.xlu0 %v146, 56
    %v415 = vpop.permute.xlu0 %414
    %v418 = vsel %vm161, %v413, 0
    %420 = vmatprep.subr.mxu0 0.0
    %421 = vmatpush1.msra.mxu0 %v415
    %422 = vmatprep.subr.mxu0 0.0
    %423 = vmatpush1.msra.mxu0 0.0
    %424 = vmatprep.subr.mxu0 0.0
    %425 = vmatpush1.msra.mxu0 0.0
    %426 = vmatprep.subr.mxu0 0.0
    %427 = vmatpush1.msra.mxu0 0.0
    %428 = vmatprep.subr.mxu0 0.0
    %429 = vmatpush1.msra.mxu0 0.0
    %430 = vmatprep.subr.mxu0 0.0
    %431 = vmatpush1.msra.mxu0 0.0
    %432 = vmatprep.subr.mxu0 0.0
    %433 = vmatpush1.msra.mxu0 0.0
    %434 = vmatprep.subr.mxu0 0.0
    %435 = vmatpush1.msra.mxu0 0.0
    %436 = vmatprep.subr.mxu0 0.0
    %437 = vmatpush1.msra.mxu0 0.0
    %438 = vmatprep.subr.mxu0 0.0
    %439 = vmatpush1.msra.mxu0 0.0
    %440 = vmatprep.subr.mxu0 0.0
    %441 = vmatpush1.msra.mxu0 0.0
    %442 = vmatprep.subr.mxu0 0.0
    %443 = vmatpush1.msra.mxu0 0.0
    %444 = vmatprep.subr.mxu0 0.0
    %445 = vmatpush1.msra.mxu0 0.0
    %446 = vmatprep.subr.mxu0 0.0
    %447 = vmatpush1.msra.mxu0 0.0
    %448 = vmatprep.subr.mxu0 0.0
    %449 = vmatpush1.msra.mxu0 0.0
    %450 = vmatprep.subr.mxu0 0.0
    %451 = vmatpush1.msra.mxu0 0.0
    %452 = vmatprep.subr.mxu0 0.0
    %453 = vmatpush1.msra.mxu0 0.0
    %454 = vmatprep.subr.mxu0 0.0
    %455 = vmatpush1.msra.mxu0 0.0
    %456 = vmatprep.subr.mxu0 0.0
    %457 = vmatpush1.msra.mxu0 0.0
    %458 = vmatprep.subr.mxu0 0.0
    %459 = vmatpush1.msra.mxu0 0.0
    %460 = vmatprep.subr.mxu0 0.0
    %461 = vmatpush1.msra.mxu0 0.0
    %462 = vmatprep.subr.mxu0 0.0
    %463 = vmatpush1.msra.mxu0 0.0
    %464 = vmatprep.subr.mxu0 0.0
    %465 = vmatpush1.msra.mxu0 0.0
    %466 = vmatprep.subr.mxu0 0.0
    %467 = vmatpush1.msra.mxu0 0.0
    %468 = vmatprep.subr.mxu0 0.0
    %469 = vmatpush1.msra.mxu0 0.0
    %470 = vmatprep.subr.mxu0 0.0
    %471 = vmatpush1.msra.mxu0 0.0
    %472 = vmatprep.subr.mxu0 0.0
    %473 = vmatpush1.msra.mxu0 0.0
    %474 = vmatprep.subr.mxu0 0.0
    %475 = vmatpush1.msra.mxu0 0.0
    %476 = vmatprep.subr.mxu0 0.0
    %477 = vmatpush1.msra.mxu0 0.0
    %478 = vmatprep.subr.mxu0 0.0
    %479 = vmatpush1.msra.mxu0 0.0
    %480 = vmatprep.subr.mxu0 0.0
    %481 = vmatpush1.msra.mxu0 0.0
    %482 = vmatprep.subr.mxu0 0.0
    %483 = vmatpush1.msra.mxu0 0.0
    %484 = vmatprep.mubr.f32.mxu0 0.0
    %485 = vmatmul.mubr.f32.gmra.mrb[0].mxu0 %v418
    %v486 = vpop.f32.mrb[0].mxu0
    %v487 = vadd.f32 0.0, %v486
    %v488 = vpop.f32.mrb[0].mxu0
    %489 = vdwg.mxu0
    %490 = vrot.lane.b32.xlu0 %v146, 112
    %v491 = vpop.permute.xlu0 %490
    %492 = vrot.lane.b32.xlu0 %v146, 80
    %v493 = vpop.permute.xlu0 %492
    %v494 = vsel %vm161, %v491, 0
    %v496 = vsel %vm161, %v493, 0
    %498 = vmatprep.subr.mxu0 0.0
    %499 = vmatpush1.xpose.msra.mxu0 %v496
    %500 = vmatprep.subr.mxu0 0.0
    %501 = vmatpush1.xpose.msra.mxu0 0.0
    %502 = vmatprep.subr.mxu0 0.0
    %503 = vmatpush1.xpose.msra.mxu0 0.0
    %504 = vmatprep.subr.mxu0 0.0
    %505 = vmatpush1.xpose.msra.mxu0 0.0
    %506 = vmatprep.subr.mxu0 0.0
    %507 = vmatpush1.xpose.msra.mxu0 0.0
    %508 = vmatprep.subr.mxu0 0.0
    %509 = vmatpush1.xpose.msra.mxu0 0.0
    %510 = vmatprep.subr.mxu0 0.0
    %511 = vmatpush1.xpose.msra.mxu0 0.0
    %512 = vmatprep.subr.mxu0 0.0
    %513 = vmatpush1.xpose.msra.mxu0 0.0
    %514 = vmatprep.subr.mxu0 0.0
    %515 = vmatpush1.xpose.msra.mxu0 0.0
    %516 = vmatprep.subr.mxu0 0.0
    %517 = vmatpush1.xpose.msra.mxu0 0.0
    %518 = vmatprep.subr.mxu0 0.0
    %519 = vmatpush1.xpose.msra.mxu0 0.0
    %520 = vmatprep.subr.mxu0 0.0
    %521 = vmatpush1.xpose.msra.mxu0 0.0
    %522 = vmatprep.subr.mxu0 0.0
    %523 = vmatpush1.xpose.msra.mxu0 0.0
    %524 = vmatprep.subr.mxu0 0.0
    %525 = vmatpush1.xpose.msra.mxu0 0.0
    %526 = vmatprep.subr.mxu0 0.0
    %527 = vmatpush1.xpose.msra.mxu0 0.0
    %528 = vmatprep.subr.mxu0 0.0
    %529 = vmatpush1.xpose.msra.mxu0 0.0
    %530 = vmatprep.subr.mxu0 0.0
    %531 = vmatpush1.xpose.msra.mxu0 0.0
    %532 = vmatprep.subr.mxu0 0.0
    %533 = vmatpush1.xpose.msra.mxu0 0.0
    %534 = vmatprep.subr.mxu0 0.0
    %535 = vmatpush1.xpose.msra.mxu0 0.0
    %536 = vmatprep.subr.mxu0 0.0
    %537 = vmatpush1.xpose.msra.mxu0 0.0
    %538 = vmatprep.subr.mxu0 0.0
    %539 = vmatpush1.xpose.msra.mxu0 0.0
    %540 = vmatprep.subr.mxu0 0.0
    %541 = vmatpush1.xpose.msra.mxu0 0.0
    %542 = vmatprep.subr.mxu0 0.0
    %543 = vmatpush1.xpose.msra.mxu0 0.0
    %544 = vmatprep.subr.mxu0 0.0
    %545 = vmatpush1.xpose.msra.mxu0 0.0
    %546 = vmatprep.subr.mxu0 0.0
    %547 = vmatpush1.xpose.msra.mxu0 0.0
    %548 = vmatprep.subr.mxu0 0.0
    %549 = vmatpush1.xpose.msra.mxu0 0.0
    %550 = vmatprep.subr.mxu0 0.0
    %551 = vmatpush1.xpose.msra.mxu0 0.0
    %552 = vmatprep.subr.mxu0 0.0
    %553 = vmatpush1.xpose.msra.mxu0 0.0
    %554 = vmatprep.subr.mxu0 0.0
    %555 = vmatpush1.xpose.msra.mxu0 0.0
    %556 = vmatprep.subr.mxu0 0.0
    %557 = vmatpush1.xpose.msra.mxu0 0.0
    %558 = vmatprep.subr.mxu0 0.0
    %559 = vmatpush1.xpose.msra.mxu0 0.0
    %560 = vmatprep.subr.mxu0 0.0
    %561 = vmatpush1.xpose.msra.mxu0 0.0
    %562 = vmatprep.mubr.f32.mxu0 0.0
    %563 = vmatmul.mubr.f32.gmra.mrb[0].mxu0 %v494
    %v564 = vpop.f32.mrb[0].mxu0
    %v565 = vadd.f32 0.0, %v564
    %v566 = vpop.f32.mrb[0].mxu0
    %567 = vdwg.mxu0
    %v568 = vmul.f32 %v565, 0.35355338
    %v569 = vsel %vm161, %v568, -inf
    %570 = vmax.xlane.f32.xlu0 %v569
    %v571 = vpop.xlane.xlu0 %570
    %v572 = vsub.f32 %v568, %v571
    %v573 = vmul.f32 %v572, 1.442695
    %v574 = vpow.pop %v573
    %v575 = vsel %vm161, %v574, 0.0
    %576 = vadd.xlane.f32.xlu0 %v575
    %v577 = vpop.xlane.xlu0 %576
    %v578 = vrcp.pop %v577
    %v579 = vmul.f32 %v574, %v578
    %580 = vrot.lane.b32.xlu0 %v146, 48
    %v581 = vpop.permute.xlu0 %580
    %v584 = vsel %vm161, %v579, 0
    %586 = vmatprep.subr.mxu0 0.0
    %587 = vmatpush1.msra.mxu0 %v581
    %588 = vmatprep.subr.mxu0 0.0
    %589 = vmatpush1.msra.mxu0 0.0
    %590 = vmatprep.subr.mxu0 0.0
    %591 = vmatpush1.msra.mxu0 0.0
    %592 = vmatprep.subr.mxu0 0.0
    %593 = vmatpush1.msra.mxu0 0.0
    %594 = vmatprep.subr.mxu0 0.0
    %595 = vmatpush1.msra.mxu0 0.0
    %596 = vmatprep.subr.mxu0 0.0
    %597 = vmatpush1.msra.mxu0 0.0
    %598 = vmatprep.subr.mxu0 0.0
    %599 = vmatpush1.msra.mxu0 0.0
    %600 = vmatprep.subr.mxu0 0.0
    %601 = vmatpush1.msra.mxu0 0.0
    %602 = vmatprep.subr.mxu0 0.0
    %603 = vmatpush1.msra.mxu0 0.0
    %604 = vmatprep.subr.mxu0 0.0
    %605 = vmatpush1.msra.mxu0 0.0
    %606 = vmatprep.subr.mxu0 0.0
    %607 = vmatpush1.msra.mxu0 0.0
    %608 = vmatprep.subr.mxu0 0.0
    %609 = vmatpush1.msra.mxu0 0.0
    %610 = vmatprep.subr.mxu0 0.0
    %611 = vmatpush1.msra.mxu0 0.0
    %612 = vmatprep.subr.mxu0 0.0
    %613 = vmatpush1.msra.mxu0 0.0
    %614 = vmatprep.subr.mxu0 0.0
    %615 = vmatpush1.msra.mxu0 0.0
    %616 = vmatprep.subr.mxu0 0.0
    %617 = vmatpush1.msra.mxu0 0.0
    %618 = vmatprep.subr.mxu0 0.0
    %619 = vmatpush1.msra.mxu0 0.0
    %620 = vmatprep.subr.mxu0 0.0
    %621 = vmatpush1.msra.mxu0 0.0
    %622 = vmatprep.subr.mxu0 0.0
    %623 = vmatpush1.msra.mxu0 0.0
    %624 = vmatprep.subr.mxu0 0.0
    %625 = vmatpush1.msra.mxu0 0.0
    %626 = vmatprep.subr.mxu0 0.0
    %627 = vmatpush1.msra.mxu0 0.0
    %628 = vmatprep.subr.mxu0 0.0
    %629 = vmatpush1.msra.mxu0 0.0
    %630 = vmatprep.subr.mxu0 0.0
    %631 = vmatpush1.msra.mxu0 0.0
    %632 = vmatprep.subr.mxu0 0.0
    %633 = vmatpush1.msra.mxu0 0.0
    %634 = vmatprep.subr.mxu0 0.0
    %635 = vmatpush1.msra.mxu0 0.0
    %636 = vmatprep.subr.mxu0 0.0
    %637 = vmatpush1.msra.mxu0 0.0
    %638 = vmatprep.subr.mxu0 0.0
    %639 = vmatpush1.msra.mxu0 0.0
    %640 = vmatprep.subr.mxu0 0.0
    %641 = vmatpush1.msra.mxu0 0.0
    %642 = vmatprep.subr.mxu0 0.0
    %643 = vmatpush1.msra.mxu0 0.0
    %644 = vmatprep.subr.mxu0 0.0
    %645 = vmatpush1.msra.mxu0 0.0
    %646 = vmatprep.subr.mxu0 0.0
    %647 = vmatpush1.msra.mxu0 0.0
    %648 = vmatprep.subr.mxu0 0.0
    %649 = vmatpush1.msra.mxu0 0.0
    %650 = vmatprep.mubr.f32.mxu0 0.0
    %651 = vmatmul.mubr.f32.gmra.mrb[0].mxu0 %v584
    %v652 = vpop.f32.mrb[0].mxu0
    %v653 = vadd.f32 0.0, %v652
    %v654 = vpop.f32.mrb[0].mxu0
    %655 = vdwg.mxu0
    %656 = vrot.lane.b32.xlu0 %v146, 104
    %v657 = vpop.permute.xlu0 %656
    %658 = vrot.lane.b32.xlu0 %v146, 72
    %v659 = vpop.permute.xlu0 %658
    %v660 = vsel %vm161, %v657, 0
    %v662 = vsel %vm161, %v659, 0
    %664 = vmatprep.subr.mxu0 0.0
    %665 = vmatpush1.xpose.msra.mxu0 %v662
    %666 = vmatprep.subr.mxu0 0.0
    %667 = vmatpush1.xpose.msra.mxu0 0.0
    %668 = vmatprep.subr.mxu0 0.0
    %669 = vmatpush1.xpose.msra.mxu0 0.0
    %670 = vmatprep.subr.mxu0 0.0
    %671 = vmatpush1.xpose.msra.mxu0 0.0
    %672 = vmatprep.subr.mxu0 0.0
    %673 = vmatpush1.xpose.msra.mxu0 0.0
    %674 = vmatprep.subr.mxu0 0.0
    %675 = vmatpush1.xpose.msra.mxu0 0.0
    %676 = vmatprep.subr.mxu0 0.0
    %677 = vmatpush1.xpose.msra.mxu0 0.0
    %678 = vmatprep.subr.mxu0 0.0
    %679 = vmatpush1.xpose.msra.mxu0 0.0
    %680 = vmatprep.subr.mxu0 0.0
    %681 = vmatpush1.xpose.msra.mxu0 0.0
    %682 = vmatprep.subr.mxu0 0.0
    %683 = vmatpush1.xpose.msra.mxu0 0.0
    %684 = vmatprep.subr.mxu0 0.0
    %685 = vmatpush1.xpose.msra.mxu0 0.0
    %686 = vmatprep.subr.mxu0 0.0
    %687 = vmatpush1.xpose.msra.mxu0 0.0
    %688 = vmatprep.subr.mxu0 0.0
    %689 = vmatpush1.xpose.msra.mxu0 0.0
    %690 = vmatprep.subr.mxu0 0.0
    %691 = vmatpush1.xpose.msra.mxu0 0.0
    %692 = vmatprep.subr.mxu0 0.0
    %693 = vmatpush1.xpose.msra.mxu0 0.0
    %694 = vmatprep.subr.mxu0 0.0
    %695 = vmatpush1.xpose.msra.mxu0 0.0
    %696 = vmatprep.subr.mxu0 0.0
    %697 = vmatpush1.xpose.msra.mxu0 0.0
    %698 = vmatprep.subr.mxu0 0.0
    %699 = vmatpush1.xpose.msra.mxu0 0.0
    %700 = vmatprep.subr.mxu0 0.0
    %701 = vmatpush1.xpose.msra.mxu0 0.0
    %702 = vmatprep.subr.mxu0 0.0
    %703 = vmatpush1.xpose.msra.mxu0 0.0
    %704 = vmatprep.subr.mxu0 0.0
    %705 = vmatpush1.xpose.msra.mxu0 0.0
    %706 = vmatprep.subr.mxu0 0.0
    %707 = vmatpush1.xpose.msra.mxu0 0.0
    %708 = vmatprep.subr.mxu0 0.0
    %709 = vmatpush1.xpose.msra.mxu0 0.0
    %710 = vmatprep.subr.mxu0 0.0
    %711 = vmatpush1.xpose.msra.mxu0 0.0
    %712 = vmatprep.subr.mxu0 0.0
    %713 = vmatpush1.xpose.msra.mxu0 0.0
    %714 = vmatprep.subr.mxu0 0.0
    %715 = vmatpush1.xpose.msra.mxu0 0.0
    %716 = vmatprep.subr.mxu0 0.0
    %717 = vmatpush1.xpose.msra.mxu0 0.0
    %718 = vmatprep.subr.mxu0 0.0
    %719 = vmatpush1.xpose.msra.mxu0 0.0
    %720 = vmatprep.subr.mxu0 0.0
    %721 = vmatpush1.xpose.msra.mxu0 0.0
    %722 = vmatprep.subr.mxu0 0.0
    %723 = vmatpush1.xpose.msra.mxu0 0.0
    %724 = vmatprep.subr.mxu0 0.0
    %725 = vmatpush1.xpose.msra.mxu0 0.0
    %726 = vmatprep.subr.mxu0 0.0
    %727 = vmatpush1.xpose.msra.mxu0 0.0
    %728 = vmatprep.mubr.f32.mxu0 0.0
    %729 = vmatmul.mubr.f32.gmra.mrb[0].mxu0 %v660
    %v730 = vpop.f32.mrb[0].mxu0
    %v731 = vadd.f32 0.0, %v730
    %v732 = vpop.f32.mrb[0].mxu0
    %733 = vdwg.mxu0
    %v734 = vmul.f32 %v731, 0.35355338
    %v735 = vsel %vm161, %v734, -inf
    %736 = vmax.xlane.f32.xlu0 %v735
    %v737 = vpop.xlane.xlu0 %736
    %v738 = vsub.f32 %v734, %v737
    %v739 = vmul.f32 %v738, 1.442695
    %v740 = vpow.pop %v739
    %v741 = vsel %vm161, %v740, 0.0
    %742 = vadd.xlane.f32.xlu0 %v741
    %v743 = vpop.xlane.xlu0 %742
    %v744 = vrcp.pop %v743
    %v745 = vmul.f32 %v740, %v744
    %746 = vrot.lane.b32.xlu0 %v146, 40
    %v747 = vpop.permute.xlu0 %746
    %v750 = vsel %vm161, %v745, 0
    %752 = vmatprep.subr.mxu0 0.0
    %753 = vmatpush1.msra.mxu0 %v747
    %754 = vmatprep.subr.mxu0 0.0
    %755 = vmatpush1.msra.mxu0 0.0
    %756 = vmatprep.subr.mxu0 0.0
    %757 = vmatpush1.msra.mxu0 0.0
    %758 = vmatprep.subr.mxu0 0.0
    %759 = vmatpush1.msra.mxu0 0.0
    %760 = vmatprep.subr.mxu0 0.0
    %761 = vmatpush1.msra.mxu0 0.0
    %762 = vmatprep.subr.mxu0 0.0
    %763 = vmatpush1.msra.mxu0 0.0
    %764 = vmatprep.subr.mxu0 0.0
    %765 = vmatpush1.msra.mxu0 0.0
    %766 = vmatprep.subr.mxu0 0.0
    %767 = vmatpush1.msra.mxu0 0.0
    %768 = vmatprep.subr.mxu0 0.0
    %769 = vmatpush1.msra.mxu0 0.0
    %770 = vmatprep.subr.mxu0 0.0
    %771 = vmatpush1.msra.mxu0 0.0
    %772 = vmatprep.subr.mxu0 0.0
    %773 = vmatpush1.msra.mxu0 0.0
    %774 = vmatprep.subr.mxu0 0.0
    %775 = vmatpush1.msra.mxu0 0.0
    %776 = vmatprep.subr.mxu0 0.0
    %777 = vmatpush1.msra.mxu0 0.0
    %778 = vmatprep.subr.mxu0 0.0
    %779 = vmatpush1.msra.mxu0 0.0
    %780 = vmatprep.subr.mxu0 0.0
    %781 = vmatpush1.msra.mxu0 0.0
    %782 = vmatprep.subr.mxu0 0.0
    %783 = vmatpush1.msra.mxu0 0.0
    %784 = vmatprep.subr.mxu0 0.0
    %785 = vmatpush1.msra.mxu0 0.0
    %786 = vmatprep.subr.mxu0 0.0
    %787 = vmatpush1.msra.mxu0 0.0
    %788 = vmatprep.subr.mxu0 0.0
    %789 = vmatpush1.msra.mxu0 0.0
    %790 = vmatprep.subr.mxu0 0.0
    %791 = vmatpush1.msra.mxu0 0.0
    %792 = vmatprep.subr.mxu0 0.0
    %793 = vmatpush1.msra.mxu0 0.0
    %794 = vmatprep.subr.mxu0 0.0
    %795 = vmatpush1.msra.mxu0 0.0
    %796 = vmatprep.subr.mxu0 0.0
    %797 = vmatpush1.msra.mxu0 0.0
    %798 = vmatprep.subr.mxu0 0.0
    %799 = vmatpush1.msra.mxu0 0.0
    %800 = vmatprep.subr.mxu0 0.0
    %801 = vmatpush1.msra.mxu0 0.0
    %802 = vmatprep.subr.mxu0 0.0
    %803 = vmatpush1.msra.mxu0 0.0
    %804 = vmatprep.subr.mxu0 0.0
    %805 = vmatpush1.msra.mxu0 0.0
    %806 = vmatprep.subr.mxu0 0.0
    %807 = vmatpush1.msra.mxu0 0.0
    %808 = vmatprep.subr.mxu0 0.0
    %809 = vmatpush1.msra.mxu0 0.0
    %810 = vmatprep.subr.mxu0 0.0
    %811 = vmatpush1.msra.mxu0 0.0
    %812 = vmatprep.subr.mxu0 0.0
    %813 = vmatpush1.msra.mxu0 0.0
    %814 = vmatprep.subr.mxu0 0.0
    %815 = vmatpush1.msra.mxu0 0.0
    %816 = vmatprep.mubr.f32.mxu0 0.0
    %817 = vmatmul.mubr.f32.gmra.mrb[0].mxu0 %v750
    %v818 = vpop.f32.mrb[0].mxu0
    %v819 = vadd.f32 0.0, %v818
    %v820 = vpop.f32.mrb[0].mxu0
    %821 = vdwg.mxu0
    %823 = vrot.lane.b32.xlu0 %v487, 8
    %v824 = vpop.permute.xlu0 %823
    %827 = vrot.lane.b32.xlu0 %v653, 16
    %v828 = vpop.permute.xlu0 %827
    %831 = vrot.lane.b32.xlu0 %v819, 24
    %v832 = vpop.permute.xlu0 %831
    %v834 = vsel %vm161, %v321, %v824
    %vm835 = vcmask 130048
    %v836 = vsel %vm835, %v834, %v828
    %vm837 = vcmask 195584
    %v838 = vsel %vm837, %v836, %v832
    %v840 = vsel %vm72, %v838, 0
    %842 = vmatprep.subr.mxu0 0.0
    %843 = vmatpush1.msra.mxu0 %v154
    %844 = vmatprep.subr.mxu0 0.0
    %845 = vmatpush1.msra.mxu0 %v155
    %846 = vmatprep.subr.mxu0 0.0
    %847 = vmatpush1.msra.mxu0 %v156
    %848 = vmatprep.subr.mxu0 0.0
    %849 = vmatpush1.msra.mxu0 %v157
    %850 = vmatprep.subr.mxu0 0.0
    %851 = vmatpush1.msra.mxu0 0.0
    %852 = vmatprep.subr.mxu0 0.0
    %853 = vmatpush1.msra.mxu0 0.0
    %854 = vmatprep.subr.mxu0 0.0
    %855 = vmatpush1.msra.mxu0 0.0
    %856 = vmatprep.subr.mxu0 0.0
    %857 = vmatpush1.msra.mxu0 0.0
    %858 = vmatprep.subr.mxu0 0.0
    %859 = vmatpush1.msra.mxu0 0.0
    %860 = vmatprep.subr.mxu0 0.0
    %861 = vmatpush1.msra.mxu0 0.0
    %862 = vmatprep.subr.mxu0 0.0
    %863 = vmatpush1.msra.mxu0 0.0
    %864 = vmatprep.subr.mxu0 0.0
    %865 = vmatpush1.msra.mxu0 0.0
    %866 = vmatprep.subr.mxu0 0.0
    %867 = vmatpush1.msra.mxu0 0.0
    %868 = vmatprep.subr.mxu0 0.0
    %869 = vmatpush1.msra.mxu0 0.0
    %870 = vmatprep.subr.mxu0 0.0
    %871 = vmatpush1.msra.mxu0 0.0
    %872 = vmatprep.subr.mxu0 0.0
    %873 = vmatpush1.msra.mxu0 0.0
    %874 = vmatprep.subr.mxu0 0.0
    %875 = vmatpush1.msra.mxu0 0.0
    %876 = vmatprep.subr.mxu0 0.0
    %877 = vmatpush1.msra.mxu0 0.0
    %878 = vmatprep.subr.mxu0 0.0
    %879 = vmatpush1.msra.mxu0 0.0
    %880 = vmatprep.subr.mxu0 0.0
    %881 = vmatpush1.msra.mxu0 0.0
    %882 = vmatprep.subr.mxu0 0.0
    %883 = vmatpush1.msra.mxu0 0.0
    %884 = vmatprep.subr.mxu0 0.0
    %885 = vmatpush1.msra.mxu0 0.0
    %886 = vmatprep.subr.mxu0 0.0
    %887 = vmatpush1.msra.mxu0 0.0
    %888 = vmatprep.subr.mxu0 0.0
    %889 = vmatpush1.msra.mxu0 0.0
    %890 = vmatprep.subr.mxu0 0.0
    %891 = vmatpush1.msra.mxu0 0.0
    %892 = vmatprep.subr.mxu0 0.0
    %893 = vmatpush1.msra.mxu0 0.0
    %894 = vmatprep.subr.mxu0 0.0
    %895 = vmatpush1.msra.mxu0 0.0
    %896 = vmatprep.subr.mxu0 0.0
    %897 = vmatpush1.msra.mxu0 0.0
    %898 = vmatprep.subr.mxu0 0.0
    %899 = vmatpush1.msra.mxu0 0.0
    %900 = vmatprep.subr.mxu0 0.0
    %901 = vmatpush1.msra.mxu0 0.0
    %902 = vmatprep.subr.mxu0 0.0
    %903 = vmatpush1.msra.mxu0 0.0
    %904 = vmatprep.subr.mxu0 0.0
    %905 = vmatpush1.msra.mxu0 0.0
    %906 = vmatprep.mubr.f32.mxu0 0.0
    %907 = vmatmul.mubr.f32.gmra.mrb[0].mxu0 %v840
    %v908 = vpop.f32.mrb[0].mxu0
    %v909 = vadd.f32 0.0, %v908
    %v910 = vpop.f32.mrb[0].mxu0
    %911 = vdwg.mxu0
    %912 = vst.msk [vmem:[#allocation2] sm:$0xff] %vm72, %v909
    %914 = vrot.lane.b32.xlu0 %v151, 96
    %v915 = vpop.permute.xlu0 %914
    %v916 = vsel %vm161, %v151, 0
    %v918 = vsel %vm161, %v915, 0
    %920 = vmatprep.subr.mxu0 0.0
    %921 = vmatpush1.xpose.msra.mxu0 %v918
    %922 = vmatprep.subr.mxu0 0.0
    %923 = vmatpush1.xpose.msra.mxu0 0.0
    %924 = vmatprep.subr.mxu0 0.0
    %925 = vmatpush1.xpose.msra.mxu0 0.0
    %926 = vmatprep.subr.mxu0 0.0
    %927 = vmatpush1.xpose.msra.mxu0 0.0
    %928 = vmatprep.subr.mxu0 0.0
    %929 = vmatpush1.xpose.msra.mxu0 0.0
    %930 = vmatprep.subr.mxu0 0.0
    %931 = vmatpush1.xpose.msra.mxu0 0.0
    %932 = vmatprep.subr.mxu0 0.0
    %933 = vmatpush1.xpose.msra.mxu0 0.0
    %934 = vmatprep.subr.mxu0 0.0
    %935 = vmatpush1.xpose.msra.mxu0 0.0
    %936 = vmatprep.subr.mxu0 0.0
    %937 = vmatpush1.xpose.msra.mxu0 0.0
    %938 = vmatprep.subr.mxu0 0.0
    %939 = vmatpush1.xpose.msra.mxu0 0.0
    %940 = vmatprep.subr.mxu0 0.0
    %941 = vmatpush1.xpose.msra.mxu0 0.0
    %942 = vmatprep.subr.mxu0 0.0
    %943 = vmatpush1.xpose.msra.mxu0 0.0
    %944 = vmatprep.subr.mxu0 0.0
    %945 = vmatpush1.xpose.msra.mxu0 0.0
    %946 = vmatprep.subr.mxu0 0.0
    %947 = vmatpush1.xpose.msra.mxu0 0.0
    %948 = vmatprep.subr.mxu0 0.0
    %949 = vmatpush1.xpose.msra.mxu0 0.0
    %950 = vmatprep.subr.mxu0 0.0
    %951 = vmatpush1.xpose.msra.mxu0 0.0
    %952 = vmatprep.subr.mxu0 0.0
    %953 = vmatpush1.xpose.msra.mxu0 0.0
    %954 = vmatprep.subr.mxu0 0.0
    %955 = vmatpush1.xpose.msra.mxu0 0.0
    %956 = vmatprep.subr.mxu0 0.0
    %957 = vmatpush1.xpose.msra.mxu0 0.0
    %958 = vmatprep.subr.mxu0 0.0
    %959 = vmatpush1.xpose.msra.mxu0 0.0
    %960 = vmatprep.subr.mxu0 0.0
    %961 = vmatpush1.xpose.msra.mxu0 0.0
    %962 = vmatprep.subr.mxu0 0.0
    %963 = vmatpush1.xpose.msra.mxu0 0.0
    %964 = vmatprep.subr.mxu0 0.0
    %965 = vmatpush1.xpose.msra.mxu0 0.0
    %966 = vmatprep.subr.mxu0 0.0
    %967 = vmatpush1.xpose.msra.mxu0 0.0
    %968 = vmatprep.subr.mxu0 0.0
    %969 = vmatpush1.xpose.msra.mxu0 0.0
    %970 = vmatprep.subr.mxu0 0.0
    %971 = vmatpush1.xpose.msra.mxu0 0.0
    %972 = vmatprep.subr.mxu0 0.0
    %973 = vmatpush1.xpose.msra.mxu0 0.0
    %974 = vmatprep.subr.mxu0 0.0
    %975 = vmatpush1.xpose.msra.mxu0 0.0
    %976 = vmatprep.subr.mxu0 0.0
    %977 = vmatpush1.xpose.msra.mxu0 0.0
    %978 = vmatprep.subr.mxu0 0.0
    %979 = vmatpush1.xpose.msra.mxu0 0.0
    %980 = vmatprep.subr.mxu0 0.0
    %981 = vmatpush1.xpose.msra.mxu0 0.0
    %982 = vmatprep.subr.mxu0 0.0
    %983 = vmatpush1.xpose.msra.mxu0 0.0
    %984 = vmatprep.mubr.f32.mxu0 0.0
    %985 = vmatmul.mubr.f32.gmra.mrb[0].mxu0 %v916
    %v986 = vpop.f32.mrb[0].mxu0
    %v987 = vadd.f32 0.0, %v986
    %v988 = vpop.f32.mrb[0].mxu0
    %989 = vdwg.mxu0
    %v990 = vmul.f32 %v987, 0.35355338
    %v991 = vsel %vm161, %v990, -inf
    %992 = vmax.xlane.f32.xlu0 %v991
    %v993 = vpop.xlane.xlu0 %992
    %v994 = vsub.f32 %v990, %v993
    %v995 = vmul.f32 %v994, 1.442695
    %v996 = vpow.pop %v995
    %v997 = vsel %vm161, %v996, 0.0
    %998 = vadd.xlane.f32.xlu0 %v997
    %v999 = vpop.xlane.xlu0 %998
    %v1000 = vrcp.pop %v999
    %v1001 = vmul.f32 %v996, %v1000
    %1002 = vrot.lane.b32.xlu0 %v151, 64
    %v1003 = vpop.permute.xlu0 %1002
    %v1006 = vsel %vm161, %v1001, 0
    %1008 = vmatprep.subr.mxu0 0.0
    %1009 = vmatpush1.msra.mxu0 %v1003
    %1010 = vmatprep.subr.mxu0 0.0
    %1011 = vmatpush1.msra.mxu0 0.0
    %1012 = vmatprep.subr.mxu0 0.0
    %1013 = vmatpush1.msra.mxu0 0.0
    %1014 = vmatprep.subr.mxu0 0.0
    %1015 = vmatpush1.msra.mxu0 0.0
    %1016 = vmatprep.subr.mxu0 0.0
    %1017 = vmatpush1.msra.mxu0 0.0
    %1018 = vmatprep.subr.mxu0 0.0
    %1019 = vmatpush1.msra.mxu0 0.0
    %1020 = vmatprep.subr.mxu0 0.0
    %1021 = vmatpush1.msra.mxu0 0.0
    %1022 = vmatprep.subr.mxu0 0.0
    %1023 = vmatpush1.msra.mxu0 0.0
    %1024 = vmatprep.subr.mxu0 0.0
    %1025 = vmatpush1.msra.mxu0 0.0
    %1026 = vmatprep.subr.mxu0 0.0
    %1027 = vmatpush1.msra.mxu0 0.0
    %1028 = vmatprep.subr.mxu0 0.0
    %1029 = vmatpush1.msra.mxu0 0.0
    %1030 = vmatprep.subr.mxu0 0.0
    %1031 = vmatpush1.msra.mxu0 0.0
    %1032 = vmatprep.subr.mxu0 0.0
    %1033 = vmatpush1.msra.mxu0 0.0
    %1034 = vmatprep.subr.mxu0 0.0
    %1035 = vmatpush1.msra.mxu0 0.0
    %1036 = vmatprep.subr.mxu0 0.0
    %1037 = vmatpush1.msra.mxu0 0.0
    %1038 = vmatprep.subr.mxu0 0.0
    %1039 = vmatpush1.msra.mxu0 0.0
    %1040 = vmatprep.subr.mxu0 0.0
    %1041 = vmatpush1.msra.mxu0 0.0
    %1042 = vmatprep.subr.mxu0 0.0
    %1043 = vmatpush1.msra.mxu0 0.0
    %1044 = vmatprep.subr.mxu0 0.0
    %1045 = vmatpush1.msra.mxu0 0.0
    %1046 = vmatprep.subr.mxu0 0.0
    %1047 = vmatpush1.msra.mxu0 0.0
    %1048 = vmatprep.subr.mxu0 0.0
    %1049 = vmatpush1.msra.mxu0 0.0
    %1050 = vmatprep.subr.mxu0 0.0
    %1051 = vmatpush1.msra.mxu0 0.0
    %1052 = vmatprep.subr.mxu0 0.0
    %1053 = vmatpush1.msra.mxu0 0.0
    %1054 = vmatprep.subr.mxu0 0.0
    %1055 = vmatpush1.msra.mxu0 0.0
    %1056 = vmatprep.subr.mxu0 0.0
    %1057 = vmatpush1.msra.mxu0 0.0
    %1058 = vmatprep.subr.mxu0 0.0
    %1059 = vmatpush1.msra.mxu0 0.0
    %1060 = vmatprep.subr.mxu0 0.0
    %1061 = vmatpush1.msra.mxu0 0.0
    %1062 = vmatprep.subr.mxu0 0.0
    %1063 = vmatpush1.msra.mxu0 0.0
    %1064 = vmatprep.subr.mxu0 0.0
    %1065 = vmatpush1.msra.mxu0 0.0
    %1066 = vmatprep.subr.mxu0 0.0
    %1067 = vmatpush1.msra.mxu0 0.0
    %1068 = vmatprep.subr.mxu0 0.0
    %1069 = vmatpush1.msra.mxu0 0.0
    %1070 = vmatprep.subr.mxu0 0.0
    %1071 = vmatpush1.msra.mxu0 0.0
    %1072 = vmatprep.mubr.f32.mxu0 0.0
    %1073 = vmatmul.mubr.f32.gmra.mrb[0].mxu0 %v1006
    %v1074 = vpop.f32.mrb[0].mxu0
    %v1075 = vadd.f32 0.0, %v1074
    %v1076 = vpop.f32.mrb[0].mxu0
    %1077 = vdwg.mxu0
    %1078 = vrot.lane.b32.xlu0 %v151, 120
    %v1079 = vpop.permute.xlu0 %1078
    %1080 = vrot.lane.b32.xlu0 %v151, 88
    %v1081 = vpop.permute.xlu0 %1080
    %v1082 = vsel %vm161, %v1079, 0
    %v1084 = vsel %vm161, %v1081, 0
    %1086 = vmatprep.subr.mxu0 0.0
    %1087 = vmatpush1.xpose.msra.mxu0 %v1084
    %1088 = vmatprep.subr.mxu0 0.0
    %1089 = vmatpush1.xpose.msra.mxu0 0.0
    %1090 = vmatprep.subr.mxu0 0.0
    %1091 = vmatpush1.xpose.msra.mxu0 0.0
    %1092 = vmatprep.subr.mxu0 0.0
    %1093 = vmatpush1.xpose.msra.mxu0 0.0
    %1094 = vmatprep.subr.mxu0 0.0
    %1095 = vmatpush1.xpose.msra.mxu0 0.0
    %1096 = vmatprep.subr.mxu0 0.0
    %1097 = vmatpush1.xpose.msra.mxu0 0.0
    %1098 = vmatprep.subr.mxu0 0.0
    %1099 = vmatpush1.xpose.msra.mxu0 0.0
    %1100 = vmatprep.subr.mxu0 0.0
    %1101 = vmatpush1.xpose.msra.mxu0 0.0
    %1102 = vmatprep.subr.mxu0 0.0
    %1103 = vmatpush1.xpose.msra.mxu0 0.0
    %1104 = vmatprep.subr.mxu0 0.0
    %1105 = vmatpush1.xpose.msra.mxu0 0.0
    %1106 = vmatprep.subr.mxu0 0.0
    %1107 = vmatpush1.xpose.msra.mxu0 0.0
    %1108 = vmatprep.subr.mxu0 0.0
    %1109 = vmatpush1.xpose.msra.mxu0 0.0
    %1110 = vmatprep.subr.mxu0 0.0
    %1111 = vmatpush1.xpose.msra.mxu0 0.0
    %1112 = vmatprep.subr.mxu0 0.0
    %1113 = vmatpush1.xpose.msra.mxu0 0.0
    %1114 = vmatprep.subr.mxu0 0.0
    %1115 = vmatpush1.xpose.msra.mxu0 0.0
    %1116 = vmatprep.subr.mxu0 0.0
    %1117 = vmatpush1.xpose.msra.mxu0 0.0
    %1118 = vmatprep.subr.mxu0 0.0
    %1119 = vmatpush1.xpose.msra.mxu0 0.0
    %1120 = vmatprep.subr.mxu0 0.0
    %1121 = vmatpush1.xpose.msra.mxu0 0.0
    %1122 = vmatprep.subr.mxu0 0.0
    %1123 = vmatpush1.xpose.msra.mxu0 0.0
    %1124 = vmatprep.subr.mxu0 0.0
    %1125 = vmatpush1.xpose.msra.mxu0 0.0
    %1126 = vmatprep.subr.mxu0 0.0
    %1127 = vmatpush1.xpose.msra.mxu0 0.0
    %1128 = vmatprep.subr.mxu0 0.0
    %1129 = vmatpush1.xpose.msra.mxu0 0.0
    %1130 = vmatprep.subr.mxu0 0.0
    %1131 = vmatpush1.xpose.msra.mxu0 0.0
    %1132 = vmatprep.subr.mxu0 0.0
    %1133 = vmatpush1.xpose.msra.mxu0 0.0
    %1134 = vmatprep.subr.mxu0 0.0
    %1135 = vmatpush1.xpose.msra.mxu0 0.0
    %1136 = vmatprep.subr.mxu0 0.0
    %1137 = vmatpush1.xpose.msra.mxu0 0.0
    %1138 = vmatprep.subr.mxu0 0.0
    %1139 = vmatpush1.xpose.msra.mxu0 0.0
    %1140 = vmatprep.subr.mxu0 0.0
    %1141 = vmatpush1.xpose.msra.mxu0 0.0
    %1142 = vmatprep.subr.mxu0 0.0
    %1143 = vmatpush1.xpose.msra.mxu0 0.0
    %1144 = vmatprep.subr.mxu0 0.0
    %1145 = vmatpush1.xpose.msra.mxu0 0.0
    %1146 = vmatprep.subr.mxu0 0.0
    %1147 = vmatpush1.xpose.msra.mxu0 0.0
    %1148 = vmatprep.subr.mxu0 0.0
    %1149 = vmatpush1.xpose.msra.mxu0 0.0
    %1150 = vmatprep.mubr.f32.mxu0 0.0
    %1151 = vmatmul.mubr.f32.gmra.mrb[0].mxu0 %v1082
    %v1152 = vpop.f32.mrb[0].mxu0
    %v1153 = vadd.f32 0.0, %v1152
    %v1154 = vpop.f32.mrb[0].mxu0
    %1155 = vdwg.mxu0
    %v1156 = vmul.f32 %v1153, 0.35355338
    %v1157 = vsel %vm161, %v1156, -inf
    %1158 = vmax.xlane.f32.xlu0 %v1157
    %v1159 = vpop.xlane.xlu0 %1158
    %v1160 = vsub.f32 %v1156, %v1159
    %v1161 = vmul.f32 %v1160, 1.442695
    %v1162 = vpow.pop %v1161
    %v1163 = vsel %vm161, %v1162, 0.0
    %1164 = vadd.xlane.f32.xlu0 %v1163
    %v1165 = vpop.xlane.xlu0 %1164
    %v1166 = vrcp.pop %v1165
    %v1167 = vmul.f32 %v1162, %v1166
    %1168 = vrot.lane.b32.xlu0 %v151, 56
    %v1169 = vpop.permute.xlu0 %1168
    %v1172 = vsel %vm161, %v1167, 0
    %1174 = vmatprep.subr.mxu0 0.0
    %1175 = vmatpush1.msra.mxu0 %v1169
    %1176 = vmatprep.subr.mxu0 0.0
    %1177 = vmatpush1.msra.mxu0 0.0
    %1178 = vmatprep.subr.mxu0 0.0
    %1179 = vmatpush1.msra.mxu0 0.0
    %1180 = vmatprep.subr.mxu0 0.0
    %1181 = vmatpush1.msra.mxu0 0.0
    %1182 = vmatprep.subr.mxu0 0.0
    %1183 = vmatpush1.msra.mxu0 0.0
    %1184 = vmatprep.subr.mxu0 0.0
    %1185 = vmatpush1.msra.mxu0 0.0
    %1186 = vmatprep.subr.mxu0 0.0
    %1187 = vmatpush1.msra.mxu0 0.0
    %1188 = vmatprep.subr.mxu0 0.0
    %1189 = vmatpush1.msra.mxu0 0.0
    %1190 = vmatprep.subr.mxu0 0.0
    %1191 = vmatpush1.msra.mxu0 0.0
    %1192 = vmatprep.subr.mxu0 0.0
    %1193 = vmatpush1.msra.mxu0 0.0
    %1194 = vmatprep.subr.mxu0 0.0
    %1195 = vmatpush1.msra.mxu0 0.0
    %1196 = vmatprep.subr.mxu0 0.0
    %1197 = vmatpush1.msra.mxu0 0.0
    %1198 = vmatprep.subr.mxu0 0.0
    %1199 = vmatpush1.msra.mxu0 0.0
    %1200 = vmatprep.subr.mxu0 0.0
    %1201 = vmatpush1.msra.mxu0 0.0
    %1202 = vmatprep.subr.mxu0 0.0
    %1203 = vmatpush1.msra.mxu0 0.0
    %1204 = vmatprep.subr.mxu0 0.0
    %1205 = vmatpush1.msra.mxu0 0.0
    %1206 = vmatprep.subr.mxu0 0.0
    %1207 = vmatpush1.msra.mxu0 0.0
    %1208 = vmatprep.subr.mxu0 0.0
    %1209 = vmatpush1.msra.mxu0 0.0
    %1210 = vmatprep.subr.mxu0 0.0
    %1211 = vmatpush1.msra.mxu0 0.0
    %1212 = vmatprep.subr.mxu0 0.0
    %1213 = vmatpush1.msra.mxu0 0.0
    %1214 = vmatprep.subr.mxu0 0.0
    %1215 = vmatpush1.msra.mxu0 0.0
    %1216 = vmatprep.subr.mxu0 0.0
    %1217 = vmatpush1.msra.mxu0 0.0
    %1218 = vmatprep.subr.mxu0 0.0
    %1219 = vmatpush1.msra.mxu0 0.0
    %1220 = vmatprep.subr.mxu0 0.0
    %1221 = vmatpush1.msra.mxu0 0.0
    %1222 = vmatprep.subr.mxu0 0.0
    %1223 = vmatpush1.msra.mxu0 0.0
    %1224 = vmatprep.subr.mxu0 0.0
    %1225 = vmatpush1.msra.mxu0 0.0
    %1226 = vmatprep.subr.mxu0 0.0
    %1227 = vmatpush1.msra.mxu0 0.0
    %1228 = vmatprep.subr.mxu0 0.0
    %1229 = vmatpush1.msra.mxu0 0.0
    %1230 = vmatprep.subr.mxu0 0.0
    %1231 = vmatpush1.msra.mxu0 0.0
    %1232 = vmatprep.subr.mxu0 0.0
    %1233 = vmatpush1.msra.mxu0 0.0
    %1234 = vmatprep.subr.mxu0 0.0
    %1235 = vmatpush1.msra.mxu0 0.0
    %1236 = vmatprep.subr.mxu0 0.0
    %1237 = vmatpush1.msra.mxu0 0.0
    %1238 = vmatprep.mubr.f32.mxu0 0.0
    %1239 = vmatmul.mubr.f32.gmra.mrb[0].mxu0 %v1172
    %v1240 = vpop.f32.mrb[0].mxu0
    %v1241 = vadd.f32 0.0, %v1240
    %v1242 = vpop.f32.mrb[0].mxu0
    %1243 = vdwg.mxu0
    %1244 = vrot.lane.b32.xlu0 %v151, 112
    %v1245 = vpop.permute.xlu0 %1244
    %1246 = vrot.lane.b32.xlu0 %v151, 80
    %v1247 = vpop.permute.xlu0 %1246
    %v1248 = vsel %vm161, %v1245, 0
    %v1250 = vsel %vm161, %v1247, 0
    %1252 = vmatprep.subr.mxu0 0.0
    %1253 = vmatpush1.xpose.msra.mxu0 %v1250
    %1254 = vmatprep.subr.mxu0 0.0
    %1255 = vmatpush1.xpose.msra.mxu0 0.0
    %1256 = vmatprep.subr.mxu0 0.0
    %1257 = vmatpush1.xpose.msra.mxu0 0.0
    %1258 = vmatprep.subr.mxu0 0.0
    %1259 = vmatpush1.xpose.msra.mxu0 0.0
    %1260 = vmatprep.subr.mxu0 0.0
    %1261 = vmatpush1.xpose.msra.mxu0 0.0
    %1262 = vmatprep.subr.mxu0 0.0
    %1263 = vmatpush1.xpose.msra.mxu0 0.0
    %1264 = vmatprep.subr.mxu0 0.0
    %1265 = vmatpush1.xpose.msra.mxu0 0.0
    %1266 = vmatprep.subr.mxu0 0.0
    %1267 = vmatpush1.xpose.msra.mxu0 0.0
    %1268 = vmatprep.subr.mxu0 0.0
    %1269 = vmatpush1.xpose.msra.mxu0 0.0
    %1270 = vmatprep.subr.mxu0 0.0
    %1271 = vmatpush1.xpose.msra.mxu0 0.0
    %1272 = vmatprep.subr.mxu0 0.0
    %1273 = vmatpush1.xpose.msra.mxu0 0.0
    %1274 = vmatprep.subr.mxu0 0.0
    %1275 = vmatpush1.xpose.msra.mxu0 0.0
    %1276 = vmatprep.subr.mxu0 0.0
    %1277 = vmatpush1.xpose.msra.mxu0 0.0
    %1278 = vmatprep.subr.mxu0 0.0
    %1279 = vmatpush1.xpose.msra.mxu0 0.0
    %1280 = vmatprep.subr.mxu0 0.0
    %1281 = vmatpush1.xpose.msra.mxu0 0.0
    %1282 = vmatprep.subr.mxu0 0.0
    %1283 = vmatpush1.xpose.msra.mxu0 0.0
    %1284 = vmatprep.subr.mxu0 0.0
    %1285 = vmatpush1.xpose.msra.mxu0 0.0
    %1286 = vmatprep.subr.mxu0 0.0
    %1287 = vmatpush1.xpose.msra.mxu0 0.0
    %1288 = vmatprep.subr.mxu0 0.0
    %1289 = vmatpush1.xpose.msra.mxu0 0.0
    %1290 = vmatprep.subr.mxu0 0.0
    %1291 = vmatpush1.xpose.msra.mxu0 0.0
    %1292 = vmatprep.subr.mxu0 0.0
    %1293 = vmatpush1.xpose.msra.mxu0 0.0
    %1294 = vmatprep.subr.mxu0 0.0
    %1295 = vmatpush1.xpose.msra.mxu0 0.0
    %1296 = vmatprep.subr.mxu0 0.0
    %1297 = vmatpush1.xpose.msra.mxu0 0.0
    %1298 = vmatprep.subr.mxu0 0.0
    %1299 = vmatpush1.xpose.msra.mxu0 0.0
    %1300 = vmatprep.subr.mxu0 0.0
    %1301 = vmatpush1.xpose.msra.mxu0 0.0
    %1302 = vmatprep.subr.mxu0 0.0
    %1303 = vmatpush1.xpose.msra.mxu0 0.0
    %1304 = vmatprep.subr.mxu0 0.0
    %1305 = vmatpush1.xpose.msra.mxu0 0.0
    %1306 = vmatprep.subr.mxu0 0.0
    %1307 = vmatpush1.xpose.msra.mxu0 0.0
    %1308 = vmatprep.subr.mxu0 0.0
    %1309 = vmatpush1.xpose.msra.mxu0 0.0
    %1310 = vmatprep.subr.mxu0 0.0
    %1311 = vmatpush1.xpose.msra.mxu0 0.0
    %1312 = vmatprep.subr.mxu0 0.0
    %1313 = vmatpush1.xpose.msra.mxu0 0.0
    %1314 = vmatprep.subr.mxu0 0.0
    %1315 = vmatpush1.xpose.msra.mxu0 0.0
    %1316 = vmatprep.mubr.f32.mxu0 0.0
    %1317 = vmatmul.mubr.f32.gmra.mrb[0].mxu0 %v1248
    %v1318 = vpop.f32.mrb[0].mxu0
    %v1319 = vadd.f32 0.0, %v1318
    %v1320 = vpop.f32.mrb[0].mxu0
    %1321 = vdwg.mxu0
    %v1322 = vmul.f32 %v1319, 0.35355338
    %v1323 = vsel %vm161, %v1322, -inf
    %1324 = vmax.xlane.f32.xlu0 %v1323
    %v1325 = vpop.xlane.xlu0 %1324
    %v1326 = vsub.f32 %v1322, %v1325
    %v1327 = vmul.f32 %v1326, 1.442695
    %v1328 = vpow.pop %v1327
    %v1329 = vsel %vm161, %v1328, 0.0
    %1330 = vadd.xlane.f32.xlu0 %v1329
    %v1331 = vpop.xlane.xlu0 %1330
    %v1332 = vrcp.pop %v1331
    %v1333 = vmul.f32 %v1328, %v1332
    %1334 = vrot.lane.b32.xlu0 %v151, 48
    %v1335 = vpop.permute.xlu0 %1334
    %v1338 = vsel %vm161, %v1333, 0
    %1340 = vmatprep.subr.mxu0 0.0
    %1341 = vmatpush1.msra.mxu0 %v1335
    %1342 = vmatprep.subr.mxu0 0.0
    %1343 = vmatpush1.msra.mxu0 0.0
    %1344 = vmatprep.subr.mxu0 0.0
    %1345 = vmatpush1.msra.mxu0 0.0
    %1346 = vmatprep.subr.mxu0 0.0
    %1347 = vmatpush1.msra.mxu0 0.0
    %1348 = vmatprep.subr.mxu0 0.0
    %1349 = vmatpush1.msra.mxu0 0.0
    %1350 = vmatprep.subr.mxu0 0.0
    %1351 = vmatpush1.msra.mxu0 0.0
    %1352 = vmatprep.subr.mxu0 0.0
    %1353 = vmatpush1.msra.mxu0 0.0
    %1354 = vmatprep.subr.mxu0 0.0
    %1355 = vmatpush1.msra.mxu0 0.0
    %1356 = vmatprep.subr.mxu0 0.0
    %1357 = vmatpush1.msra.mxu0 0.0
    %1358 = vmatprep.subr.mxu0 0.0
    %1359 = vmatpush1.msra.mxu0 0.0
    %1360 = vmatprep.subr.mxu0 0.0
    %1361 = vmatpush1.msra.mxu0 0.0
    %1362 = vmatprep.subr.mxu0 0.0
    %1363 = vmatpush1.msra.mxu0 0.0
    %1364 = vmatprep.subr.mxu0 0.0
    %1365 = vmatpush1.msra.mxu0 0.0
    %1366 = vmatprep.subr.mxu0 0.0
    %1367 = vmatpush1.msra.mxu0 0.0
    %1368 = vmatprep.subr.mxu0 0.0
    %1369 = vmatpush1.msra.mxu0 0.0
    %1370 = vmatprep.subr.mxu0 0.0
    %1371 = vmatpush1.msra.mxu0 0.0
    %1372 = vmatprep.subr.mxu0 0.0
    %1373 = vmatpush1.msra.mxu0 0.0
    %1374 = vmatprep.subr.mxu0 0.0
    %1375 = vmatpush1.msra.mxu0 0.0
    %1376 = vmatprep.subr.mxu0 0.0
    %1377 = vmatpush1.msra.mxu0 0.0
    %1378 = vmatprep.subr.mxu0 0.0
    %1379 = vmatpush1.msra.mxu0 0.0
    %1380 = vmatprep.subr.mxu0 0.0
    %1381 = vmatpush1.msra.mxu0 0.0
    %1382 = vmatprep.subr.mxu0 0.0
    %1383 = vmatpush1.msra.mxu0 0.0
    %1384 = vmatprep.subr.mxu0 0.0
    %1385 = vmatpush1.msra.mxu0 0.0
    %1386 = vmatprep.subr.mxu0 0.0
    %1387 = vmatpush1.msra.mxu0 0.0
    %1388 = vmatprep.subr.mxu0 0.0
    %1389 = vmatpush1.msra.mxu0 0.0
    %1390 = vmatprep.subr.mxu0 0.0
    %1391 = vmatpush1.msra.mxu0 0.0
    %1392 = vmatprep.subr.mxu0 0.0
    %1393 = vmatpush1.msra.mxu0 0.0
    %1394 = vmatprep.subr.mxu0 0.0
    %1395 = vmatpush1.msra.mxu0 0.0
    %1396 = vmatprep.subr.mxu0 0.0
    %1397 = vmatpush1.msra.mxu0 0.0
    %1398 = vmatprep.subr.mxu0 0.0
    %1399 = vmatpush1.msra.mxu0 0.0
    %1400 = vmatprep.subr.mxu0 0.0
    %1401 = vmatpush1.msra.mxu0 0.0
    %1402 = vmatprep.subr.mxu0 0.0
    %1403 = vmatpush1.msra.mxu0 0.0
    %1404 = vmatprep.mubr.f32.mxu0 0.0
    %1405 = vmatmul.mubr.f32.gmra.mrb[0].mxu0 %v1338
    %v1406 = vpop.f32.mrb[0].mxu0
    %v1407 = vadd.f32 0.0, %v1406
    %v1408 = vpop.f32.mrb[0].mxu0
    %1409 = vdwg.mxu0
    %1410 = vrot.lane.b32.xlu0 %v151, 104
    %v1411 = vpop.permute.xlu0 %1410
    %1412 = vrot.lane.b32.xlu0 %v151, 72
    %v1413 = vpop.permute.xlu0 %1412
    %v1414 = vsel %vm161, %v1411, 0
    %v1416 = vsel %vm161, %v1413, 0
    %1418 = vmatprep.subr.mxu0 0.0
    %1419 = vmatpush1.xpose.msra.mxu0 %v1416
    %1420 = vmatprep.subr.mxu0 0.0
    %1421 = vmatpush1.xpose.msra.mxu0 0.0
    %1422 = vmatprep.subr.mxu0 0.0
    %1423 = vmatpush1.xpose.msra.mxu0 0.0
    %1424 = vmatprep.subr.mxu0 0.0
    %1425 = vmatpush1.xpose.msra.mxu0 0.0
    %1426 = vmatprep.subr.mxu0 0.0
    %1427 = vmatpush1.xpose.msra.mxu0 0.0
    %1428 = vmatprep.subr.mxu0 0.0
    %1429 = vmatpush1.xpose.msra.mxu0 0.0
    %1430 = vmatprep.subr.mxu0 0.0
    %1431 = vmatpush1.xpose.msra.mxu0 0.0
    %1432 = vmatprep.subr.mxu0 0.0
    %1433 = vmatpush1.xpose.msra.mxu0 0.0
    %1434 = vmatprep.subr.mxu0 0.0
    %1435 = vmatpush1.xpose.msra.mxu0 0.0
    %1436 = vmatprep.subr.mxu0 0.0
    %1437 = vmatpush1.xpose.msra.mxu0 0.0
    %1438 = vmatprep.subr.mxu0 0.0
    %1439 = vmatpush1.xpose.msra.mxu0 0.0
    %1440 = vmatprep.subr.mxu0 0.0
    %1441 = vmatpush1.xpose.msra.mxu0 0.0
    %1442 = vmatprep.subr.mxu0 0.0
    %1443 = vmatpush1.xpose.msra.mxu0 0.0
    %1444 = vmatprep.subr.mxu0 0.0
    %1445 = vmatpush1.xpose.msra.mxu0 0.0
    %1446 = vmatprep.subr.mxu0 0.0
    %1447 = vmatpush1.xpose.msra.mxu0 0.0
    %1448 = vmatprep.subr.mxu0 0.0
    %1449 = vmatpush1.xpose.msra.mxu0 0.0
    %1450 = vmatprep.subr.mxu0 0.0
    %1451 = vmatpush1.xpose.msra.mxu0 0.0
    %1452 = vmatprep.subr.mxu0 0.0
    %1453 = vmatpush1.xpose.msra.mxu0 0.0
    %1454 = vmatprep.subr.mxu0 0.0
    %1455 = vmatpush1.xpose.msra.mxu0 0.0
    %1456 = vmatprep.subr.mxu0 0.0
    %1457 = vmatpush1.xpose.msra.mxu0 0.0
    %1458 = vmatprep.subr.mxu0 0.0
    %1459 = vmatpush1.xpose.msra.mxu0 0.0
    %1460 = vmatprep.subr.mxu0 0.0
    %1461 = vmatpush1.xpose.msra.mxu0 0.0
    %1462 = vmatprep.subr.mxu0 0.0
    %1463 = vmatpush1.xpose.msra.mxu0 0.0
    %1464 = vmatprep.subr.mxu0 0.0
    %1465 = vmatpush1.xpose.msra.mxu0 0.0
    %1466 = vmatprep.subr.mxu0 0.0
    %1467 = vmatpush1.xpose.msra.mxu0 0.0
    %1468 = vmatprep.subr.mxu0 0.0
    %1469 = vmatpush1.xpose.msra.mxu0 0.0
    %1470 = vmatprep.subr.mxu0 0.0
    %1471 = vmatpush1.xpose.msra.mxu0 0.0
    %1472 = vmatprep.subr.mxu0 0.0
    %1473 = vmatpush1.xpose.msra.mxu0 0.0
    %1474 = vmatprep.subr.mxu0 0.0
    %1475 = vmatpush1.xpose.msra.mxu0 0.0
    %1476 = vmatprep.subr.mxu0 0.0
    %1477 = vmatpush1.xpose.msra.mxu0 0.0
    %1478 = vmatprep.subr.mxu0 0.0
    %1479 = vmatpush1.xpose.msra.mxu0 0.0
    %1480 = vmatprep.subr.mxu0 0.0
    %1481 = vmatpush1.xpose.msra.mxu0 0.0
    %1482 = vmatprep.mubr.f32.mxu0 0.0
    %1483 = vmatmul.mubr.f32.gmra.mrb[0].mxu0 %v1414
    %v1484 = vpop.f32.mrb[0].mxu0
    %v1485 = vadd.f32 0.0, %v1484
    %v1486 = vpop.f32.mrb[0].mxu0
    %1487 = vdwg.mxu0
    %v1488 = vmul.f32 %v1485, 0.35355338
    %v1489 = vsel %vm161, %v1488, -inf
    %1490 = vmax.xlane.f32.xlu0 %v1489
    %v1491 = vpop.xlane.xlu0 %1490
    %v1492 = vsub.f32 %v1488, %v1491
    %v1493 = vmul.f32 %v1492, 1.442695
    %v1494 = vpow.pop %v1493
    %v1495 = vsel %vm161, %v1494, 0.0
    %1496 = vadd.xlane.f32.xlu0 %v1495
    %v1497 = vpop.xlane.xlu0 %1496
    %v1498 = vrcp.pop %v1497
    %v1499 = vmul.f32 %v1494, %v1498
    %1500 = vrot.lane.b32.xlu0 %v151, 40
    %v1501 = vpop.permute.xlu0 %1500
    %v1504 = vsel %vm161, %v1499, 0
    %1506 = vmatprep.subr.mxu0 0.0
    %1507 = vmatpush1.msra.mxu0 %v1501
    %1508 = vmatprep.subr.mxu0 0.0
    %1509 = vmatpush1.msra.mxu0 0.0
    %1510 = vmatprep.subr.mxu0 0.0
    %1511 = vmatpush1.msra.mxu0 0.0
    %1512 = vmatprep.subr.mxu0 0.0
    %1513 = vmatpush1.msra.mxu0 0.0
    %1514 = vmatprep.subr.mxu0 0.0
    %1515 = vmatpush1.msra.mxu0 0.0
    %1516 = vmatprep.subr.mxu0 0.0
    %1517 = vmatpush1.msra.mxu0 0.0
    %1518 = vmatprep.subr.mxu0 0.0
    %1519 = vmatpush1.msra.mxu0 0.0
    %1520 = vmatprep.subr.mxu0 0.0
    %1521 = vmatpush1.msra.mxu0 0.0
    %1522 = vmatprep.subr.mxu0 0.0
    %1523 = vmatpush1.msra.mxu0 0.0
    %1524 = vmatprep.subr.mxu0 0.0
    %1525 = vmatpush1.msra.mxu0 0.0
    %1526 = vmatprep.subr.mxu0 0.0
    %1527 = vmatpush1.msra.mxu0 0.0
    %1528 = vmatprep.subr.mxu0 0.0
    %1529 = vmatpush1.msra.mxu0 0.0
    %1530 = vmatprep.subr.mxu0 0.0
    %1531 = vmatpush1.msra.mxu0 0.0
    %1532 = vmatprep.subr.mxu0 0.0
    %1533 = vmatpush1.msra.mxu0 0.0
    %1534 = vmatprep.subr.mxu0 0.0
    %1535 = vmatpush1.msra.mxu0 0.0
    %1536 = vmatprep.subr.mxu0 0.0
    %1537 = vmatpush1.msra.mxu0 0.0
    %1538 = vmatprep.subr.mxu0 0.0
    %1539 = vmatpush1.msra.mxu0 0.0
    %1540 = vmatprep.subr.mxu0 0.0
    %1541 = vmatpush1.msra.mxu0 0.0
    %1542 = vmatprep.subr.mxu0 0.0
    %1543 = vmatpush1.msra.mxu0 0.0
    %1544 = vmatprep.subr.mxu0 0.0
    %1545 = vmatpush1.msra.mxu0 0.0
    %1546 = vmatprep.subr.mxu0 0.0
    %1547 = vmatpush1.msra.mxu0 0.0
    %1548 = vmatprep.subr.mxu0 0.0
    %1549 = vmatpush1.msra.mxu0 0.0
    %1550 = vmatprep.subr.mxu0 0.0
    %1551 = vmatpush1.msra.mxu0 0.0
    %1552 = vmatprep.subr.mxu0 0.0
    %1553 = vmatpush1.msra.mxu0 0.0
    %1554 = vmatprep.subr.mxu0 0.0
    %1555 = vmatpush1.msra.mxu0 0.0
    %1556 = vmatprep.subr.mxu0 0.0
    %1557 = vmatpush1.msra.mxu0 0.0
    %1558 = vmatprep.subr.mxu0 0.0
    %1559 = vmatpush1.msra.mxu0 0.0
    %1560 = vmatprep.subr.mxu0 0.0
    %1561 = vmatpush1.msra.mxu0 0.0
    %1562 = vmatprep.subr.mxu0 0.0
    %1563 = vmatpush1.msra.mxu0 0.0
    %1564 = vmatprep.subr.mxu0 0.0
    %1565 = vmatpush1.msra.mxu0 0.0
    %1566 = vmatprep.subr.mxu0 0.0
    %1567 = vmatpush1.msra.mxu0 0.0
    %1568 = vmatprep.subr.mxu0 0.0
    %1569 = vmatpush1.msra.mxu0 0.0
    %1570 = vmatprep.mubr.f32.mxu0 0.0
    %1571 = vmatmul.mubr.f32.gmra.mrb[0].mxu0 %v1504
    %v1572 = vpop.f32.mrb[0].mxu0
    %v1573 = vadd.f32 0.0, %v1572
    %v1574 = vpop.f32.mrb[0].mxu0
    %1575 = vdwg.mxu0
    %1577 = vrot.lane.b32.xlu0 %v1241, 8
    %v1578 = vpop.permute.xlu0 %1577
    %1581 = vrot.lane.b32.xlu0 %v1407, 16
    %v1582 = vpop.permute.xlu0 %1581
    %1585 = vrot.lane.b32.xlu0 %v1573, 24
    %v1586 = vpop.permute.xlu0 %1585
    %v1588 = vsel %vm161, %v1075, %v1578
    %v1589 = vsel %vm835, %v1588, %v1582
    %v1590 = vsel %vm837, %v1589, %v1586
    %v1592 = vsel %vm72, %v1590, 0
    %1594 = vmatprep.subr.mxu0 0.0
    %1595 = vmatpush1.msra.mxu0 %v154
    %1596 = vmatprep.subr.mxu0 0.0
    %1597 = vmatpush1.msra.mxu0 %v155
    %1598 = vmatprep.subr.mxu0 0.0
    %1599 = vmatpush1.msra.mxu0 %v156
    %1600 = vmatprep.subr.mxu0 0.0
    %1601 = vmatpush1.msra.mxu0 %v157
    %1602 = vmatprep.subr.mxu0 0.0
    %1603 = vmatpush1.msra.mxu0 0.0
    %1604 = vmatprep.subr.mxu0 0.0
    %1605 = vmatpush1.msra.mxu0 0.0
    %1606 = vmatprep.subr.mxu0 0.0
    %1607 = vmatpush1.msra.mxu0 0.0
    %1608 = vmatprep.subr.mxu0 0.0
    %1609 = vmatpush1.msra.mxu0 0.0
    %1610 = vmatprep.subr.mxu0 0.0
    %1611 = vmatpush1.msra.mxu0 0.0
    %1612 = vmatprep.subr.mxu0 0.0
    %1613 = vmatpush1.msra.mxu0 0.0
    %1614 = vmatprep.subr.mxu0 0.0
    %1615 = vmatpush1.msra.mxu0 0.0
    %1616 = vmatprep.subr.mxu0 0.0
    %1617 = vmatpush1.msra.mxu0 0.0
    %1618 = vmatprep.subr.mxu0 0.0
    %1619 = vmatpush1.msra.mxu0 0.0
    %1620 = vmatprep.subr.mxu0 0.0
    %1621 = vmatpush1.msra.mxu0 0.0
    %1622 = vmatprep.subr.mxu0 0.0
    %1623 = vmatpush1.msra.mxu0 0.0
    %1624 = vmatprep.subr.mxu0 0.0
    %1625 = vmatpush1.msra.mxu0 0.0
    %1626 = vmatprep.subr.mxu0 0.0
    %1627 = vmatpush1.msra.mxu0 0.0
    %1628 = vmatprep.subr.mxu0 0.0
    %1629 = vmatpush1.msra.mxu0 0.0
    %1630 = vmatprep.subr.mxu0 0.0
    %1631 = vmatpush1.msra.mxu0 0.0
    %1632 = vmatprep.subr.mxu0 0.0
    %1633 = vmatpush1.msra.mxu0 0.0
    %1634 = vmatprep.subr.mxu0 0.0
    %1635 = vmatpush1.msra.mxu0 0.0
    %1636 = vmatprep.subr.mxu0 0.0
    %1637 = vmatpush1.msra.mxu0 0.0
    %1638 = vmatprep.subr.mxu0 0.0
    %1639 = vmatpush1.msra.mxu0 0.0
    %1640 = vmatprep.subr.mxu0 0.0
    %1641 = vmatpush1.msra.mxu0 0.0
    %1642 = vmatprep.subr.mxu0 0.0
    %1643 = vmatpush1.msra.mxu0 0.0
    %1644 = vmatprep.subr.mxu0 0.0
    %1645 = vmatpush1.msra.mxu0 0.0
    %1646 = vmatprep.subr.mxu0 0.0
    %1647 = vmatpush1.msra.mxu0 0.0
    %1648 = vmatprep.subr.mxu0 0.0
    %1649 = vmatpush1.msra.mxu0 0.0
    %1650 = vmatprep.subr.mxu0 0.0
    %1651 = vmatpush1.msra.mxu0 0.0
    %1652 = vmatprep.subr.mxu0 0.0
    %1653 = vmatpush1.msra.mxu0 0.0
    %1654 = vmatprep.subr.mxu0 0.0
    %1655 = vmatpush1.msra.mxu0 0.0
    %1656 = vmatprep.subr.mxu0 0.0
    %1657 = vmatpush1.msra.mxu0 0.0
    %1658 = vmatprep.mubr.f32.mxu0 0.0
    %1659 = vmatmul.mubr.f32.gmra.mrb[0].mxu0 %v1592
    %v1660 = vpop.f32.mrb[0].mxu0
    %v1661 = vadd.f32 0.0, %v1660
    %v1662 = vpop.f32.mrb[0].mxu0
    %1663 = vdwg.mxu0
    %1664 = vst.msk [vmem:[#allocation2 + $0x8] sm:$0xff] %vm72, %v1661
    %v1665 = vld [vmem:[#allocation8 + $0x48] sm:$0x1]
    %v1666 = vld [vmem:[#allocation2] sm:$0xff]
    %v1667 = vld [vmem:[#allocation2 + $0x8] sm:$0xff]
    %v1668 = vadd.f32 %v56, %v1666
    %v1669 = vadd.f32 %v57, %v1667
    %v1670 = vlaneseq
    %v1671 = vshrl.u32 %v1670, 7
    %v1672 = vsub.s32 0, %v1671
    %v1673 = vrot.slane %v1665, %v1672
    %v1674 = vadd.f32 %v1668, %v1673
    %v1675 = vadd.f32 %v1669, %v1673
    %v1676 = vsel %vm72, %v1674, 0.0
    %1677 = vadd.xlane.f32.xlu0 %v1676
    %v1678 = vpop.xlane.xlu0 %1677
    %v1679 = vsel %vm72, %v1675, 0.0
    %1680 = vadd.xlane.f32.xlu0 %v1679
    %v1681 = vpop.xlane.xlu0 %1680
    %v1682 = vrcp.pop 32.0
    %v1683 = vmul.f32 %v1678, %v1682
    %v1684 = vmul.f32 %v1681, %v1682
    %v1685 = vsub.f32 %v1674, %v1683
    %v1686 = vsub.f32 %v1675, %v1684
    %v1687 = vmul.f32 %v1685, %v1685
    %v1688 = vmul.f32 %v1686, %v1686
    %v1689 = vsel %vm72, %v1687, 0.0
    %1690 = vadd.xlane.f32.xlu0 %v1689
    %v1691 = vpop.xlane.xlu0 %1690
    %v1692 = vsel %vm72, %v1688, 0.0
    %1693 = vadd.xlane.f32.xlu0 %v1692
    %v1694 = vpop.xlane.xlu0 %1693
    %v1695 = vmul.f32 %v1691, %v1682
    %v1696 = vmul.f32 %v1694, %v1682
    %v1697 = vadd.f32 %v1695, 1e-05
    %v1698 = vadd.f32 %v1696, 1e-05
    %v1699 = vrsqrt.pop %v1697
    %v1700 = vrsqrt.pop %v1698
    %v1701 = vmul.f32 %v1685, %v1699
    %v1702 = vmul.f32 %v1686, %v1700
    %v1703 = vlaneseq
    %v1704 = vshrl.u32 %v1703, 7
    %v1705 = vsub.s32 0, %v1704
    %v1706 = vrot.slane %v62, %v1705
    %v1707 = vmul.f32 %v1701, %v1706
    %v1708 = vmul.f32 %v1702, %v1706
    %v1709 = vlaneseq
    %v1710 = vshrl.u32 %v1709, 7
    %v1711 = vsub.s32 1, %v1710
    %v1712 = vrot.slane %v62, %v1711
    %v1713 = vadd.f32 %v1707, %v1712
    %v1714 = vadd.f32 %v1708, %v1712
    %v1715 = vld [vmem:[#allocation8 + $0x50] sm:$0xff]
    %v1716 = vld [vmem:[#allocation8 + $0x58] sm:$0xff]
    %v1717 = vld [vmem:[#allocation8 + $0x60] sm:$0xff]
    %v1718 = vld [vmem:[#allocation8 + $0x68] sm:$0xff]
    %v1719 = vld [vmem:[#allocation8 + $0x70] sm:$0x1]
    %v1720 = vlaneseq
    %v1721 = vshrl.u32 %v1720, 7
    %v1722 = vsub.s32 0, %v1721
    %v1723 = vrot.slane %v1719, %v1722
    %v1725 = vsel %vm72, %v1713, 0
    %v1728 = vsel %vm72, %v1714, 0
    %1730 = vmatprep.subr.mxu0 0.0
    %1731 = vmatpush1.msra.mxu0 %v1715
    %1732 = vmatprep.subr.mxu0 0.0
    %1733 = vmatpush1.msra.mxu0 %v1716
    %1734 = vmatprep.subr.mxu0 0.0
    %1735 = vmatpush1.msra.mxu0 %v1717
    %1736 = vmatprep.subr.mxu0 0.0
    %1737 = vmatpush1.msra.mxu0 %v1718
    %1738 = vmatprep.subr.mxu0 0.0
    %1739 = vmatpush1.msra.mxu0 0.0
    %1740 = vmatprep.subr.mxu0 0.0
    %1741 = vmatpush1.msra.mxu0 0.0
    %1742 = vmatprep.subr.mxu0 0.0
    %1743 = vmatpush1.msra.mxu0 0.0
    %1744 = vmatprep.subr.mxu0 0.0
    %1745 = vmatpush1.msra.mxu0 0.0
    %1746 = vmatprep.subr.mxu0 0.0
    %1747 = vmatpush1.msra.mxu0 0.0
    %1748 = vmatprep.subr.mxu0 0.0
    %1749 = vmatpush1.msra.mxu0 0.0
    %1750 = vmatprep.subr.mxu0 0.0
    %1751 = vmatpush1.msra.mxu0 0.0
    %1752 = vmatprep.subr.mxu0 0.0
    %1753 = vmatpush1.msra.mxu0 0.0
    %1754 = vmatprep.subr.mxu0 0.0
    %1755 = vmatpush1.msra.mxu0 0.0
    %1756 = vmatprep.subr.mxu0 0.0
    %1757 = vmatpush1.msra.mxu0 0.0
    %1758 = vmatprep.subr.mxu0 0.0
    %1759 = vmatpush1.msra.mxu0 0.0
    %1760 = vmatprep.subr.mxu0 0.0
    %1761 = vmatpush1.msra.mxu0 0.0
    %1762 = vmatprep.subr.mxu0 0.0
    %1763 = vmatpush1.msra.mxu0 0.0
    %1764 = vmatprep.subr.mxu0 0.0
    %1765 = vmatpush1.msra.mxu0 0.0
    %1766 = vmatprep.subr.mxu0 0.0
    %1767 = vmatpush1.msra.mxu0 0.0
    %1768 = vmatprep.subr.mxu0 0.0
    %1769 = vmatpush1.msra.mxu0 0.0
    %1770 = vmatprep.subr.mxu0 0.0
    %1771 = vmatpush1.msra.mxu0 0.0
    %1772 = vmatprep.subr.mxu0 0.0
    %1773 = vmatpush1.msra.mxu0 0.0
    %1774 = vmatprep.subr.mxu0 0.0
    %1775 = vmatpush1.msra.mxu0 0.0
    %1776 = vmatprep.subr.mxu0 0.0
    %1777 = vmatpush1.msra.mxu0 0.0
    %1778 = vmatprep.subr.mxu0 0.0
    %1779 = vmatpush1.msra.mxu0 0.0
    %1780 = vmatprep.subr.mxu0 0.0
    %1781 = vmatpush1.msra.mxu0 0.0
    %1782 = vmatprep.subr.mxu0 0.0
    %1783 = vmatpush1.msra.mxu0 0.0
    %1784 = vmatprep.subr.mxu0 0.0
    %1785 = vmatpush1.msra.mxu0 0.0
    %1786 = vmatprep.subr.mxu0 0.0
    %1787 = vmatpush1.msra.mxu0 0.0
    %1788 = vmatprep.subr.mxu0 0.0
    %1789 = vmatpush1.msra.mxu0 0.0
    %1790 = vmatprep.subr.mxu0 0.0
    %1791 = vmatpush1.msra.mxu0 0.0
    %1792 = vmatprep.subr.mxu0 0.0
    %1793 = vmatpush1.msra.mxu0 0.0
    %1794 = vmatprep.mubr.f32.mxu0 0.0
    %1795 = vmatmul.mubr.f32.gmra.mrb[0].mxu0 %v1725
    %v1796 = vpop.f32.mrb[0].mxu0
    %v1797 = vadd.f32 %v1723, %v1796
    %v1798 = vpop.f32.mrb[0].mxu0
    %1799 = vmatprep.mubr.f32.mxu0 0.0
    %1800 = vmatmul.mubr.f32.gmra.mrb[0].mxu0 %v1728
    %v1801 = vpop.f32.mrb[0].mxu0
    %v1802 = vadd.f32 %v1723, %v1801
    %v1803 = vpop.f32.mrb[0].mxu0
    %1804 = vdwg.mxu0
    %v1805 = vld [vmem:[#allocation8 + $0x78] sm:$0xff]
    %v1806 = vld [vmem:[#allocation8 + $0x80] sm:$0xff]
    %v1807 = vld [vmem:[#allocation8 + $0x88] sm:$0xff]
    %v1808 = vld [vmem:[#allocation8 + $0x90] sm:$0xff]
    %v1809 = vld [vmem:[#allocation8 + $0x98] sm:$0x1]
    %v1810 = vlaneseq
    %v1811 = vshrl.u32 %v1810, 7
    %v1812 = vsub.s32 0, %v1811
    %v1813 = vrot.slane %v1809, %v1812
    %v1815 = vsel %vm72, %v58, 0
    %v1818 = vsel %vm72, %v59, 0
    %v1821 = vsel %vm72, %v60, 0
    %v1824 = vsel %vm72, %v61, 0
    %1826 = vmatprep.subr.mxu0 0.0
    %1827 = vmatpush1.msra.mxu0 %v1805
    %1828 = vmatprep.subr.mxu0 0.0
    %1829 = vmatpush1.msra.mxu0 %v1806
    %1830 = vmatprep.subr.mxu0 0.0
    %1831 = vmatpush1.msra.mxu0 %v1807
    %1832 = vmatprep.subr.mxu0 0.0
    %1833 = vmatpush1.msra.mxu0 %v1808
    %1834 = vmatprep.subr.mxu0 0.0
    %1835 = vmatpush1.msra.mxu0 0.0
    %1836 = vmatprep.subr.mxu0 0.0
    %1837 = vmatpush1.msra.mxu0 0.0
    %1838 = vmatprep.subr.mxu0 0.0
    %1839 = vmatpush1.msra.mxu0 0.0
    %1840 = vmatprep.subr.mxu0 0.0
    %1841 = vmatpush1.msra.mxu0 0.0
    %1842 = vmatprep.subr.mxu0 0.0
    %1843 = vmatpush1.msra.mxu0 0.0
    %1844 = vmatprep.subr.mxu0 0.0
    %1845 = vmatpush1.msra.mxu0 0.0
    %1846 = vmatprep.subr.mxu0 0.0
    %1847 = vmatpush1.msra.mxu0 0.0
    %1848 = vmatprep.subr.mxu0 0.0
    %1849 = vmatpush1.msra.mxu0 0.0
    %1850 = vmatprep.subr.mxu0 0.0
    %1851 = vmatpush1.msra.mxu0 0.0
    %1852 = vmatprep.subr.mxu0 0.0
    %1853 = vmatpush1.msra.mxu0 0.0
    %1854 = vmatprep.subr.mxu0 0.0
    %1855 = vmatpush1.msra.mxu0 0.0
    %1856 = vmatprep.subr.mxu0 0.0
    %1857 = vmatpush1.msra.mxu0 0.0
    %1858 = vmatprep.subr.mxu0 0.0
    %1859 = vmatpush1.msra.mxu0 0.0
    %1860 = vmatprep.subr.mxu0 0.0
    %1861 = vmatpush1.msra.mxu0 0.0
    %1862 = vmatprep.subr.mxu0 0.0
    %1863 = vmatpush1.msra.mxu0 0.0
    %1864 = vmatprep.subr.mxu0 0.0
    %1865 = vmatpush1.msra.mxu0 0.0
    %1866 = vmatprep.subr.mxu0 0.0
    %1867 = vmatpush1.msra.mxu0 0.0
    %1868 = vmatprep.subr.mxu0 0.0
    %1869 = vmatpush1.msra.mxu0 0.0
    %1870 = vmatprep.subr.mxu0 0.0
    %1871 = vmatpush1.msra.mxu0 0.0
    %1872 = vmatprep.subr.mxu0 0.0
    %1873 = vmatpush1.msra.mxu0 0.0
    %1874 = vmatprep.subr.mxu0 0.0
    %1875 = vmatpush1.msra.mxu0 0.0
    %1876 = vmatprep.subr.mxu0 0.0
    %1877 = vmatpush1.msra.mxu0 0.0
    %1878 = vmatprep.subr.mxu0 0.0
    %1879 = vmatpush1.msra.mxu0 0.0
    %1880 = vmatprep.subr.mxu0 0.0
    %1881 = vmatpush1.msra.mxu0 0.0
    %1882 = vmatprep.subr.mxu0 0.0
    %1883 = vmatpush1.msra.mxu0 0.0
    %1884 = vmatprep.subr.mxu0 0.0
    %1885 = vmatpush1.msra.mxu0 0.0
    %1886 = vmatprep.subr.mxu0 0.0
    %1887 = vmatpush1.msra.mxu0 0.0
    %1888 = vmatprep.subr.mxu0 0.0
    %1889 = vmatpush1.msra.mxu0 0.0
    %1890 = vmatprep.mubr.f32.mxu0 0.0
    %1891 = vmatmul.mubr.f32.gmra.mrb[0].mxu0 %v1815
    %v1892 = vpop.f32.mrb[0].mxu0
    %v1893 = vadd.f32 %v1813, %v1892
    %v1894 = vpop.f32.mrb[0].mxu0
    %1895 = vmatprep.mubr.f32.mxu0 0.0
    %1896 = vmatmul.mubr.f32.gmra.mrb[0].mxu0 %v1818
    %v1897 = vpop.f32.mrb[0].mxu0
    %v1898 = vadd.f32 %v1813, %v1897
    %v1899 = vpop.f32.mrb[0].mxu0
    %1900 = vmatprep.mubr.f32.mxu0 0.0
    %1901 = vmatmul.mubr.f32.gmra.mrb[0].mxu0 %v1821
    %v1902 = vpop.f32.mrb[0].mxu0
    %v1903 = vadd.f32 %v1813, %v1902
    %v1904 = vpop.f32.mrb[0].mxu0
    %1905 = vmatprep.mubr.f32.mxu0 0.0
    %1906 = vmatmul.mubr.f32.gmra.mrb[0].mxu0 %v1824
    %v1907 = vpop.f32.mrb[0].mxu0
    %v1908 = vadd.f32 %v1813, %v1907
    %v1909 = vpop.f32.mrb[0].mxu0
    %1910 = vdwg.mxu0
    %v1911 = vld [vmem:[#allocation8 + $0xa0] sm:$0xff]
    %v1912 = vld [vmem:[#allocation8 + $0xa8] sm:$0xff]
    %v1913 = vld [vmem:[#allocation8 + $0xb0] sm:$0xff]
    %v1914 = vld [vmem:[#allocation8 + $0xb8] sm:$0xff]
    %v1916 = vsel %vm161, %v1797, 0
    %v1919 = vsel %vm161, %v1893, 0
    %v1922 = vsel %vm161, %v1898, 0
    %1924 = vmatprep.subr.mxu0 0.0
    %1925 = vmatpush1.xpose.msra.mxu0 %v1919
    %1926 = vmatprep.subr.mxu0 0.0
    %1927 = vmatpush1.xpose.msra.mxu0 %v1922
    %1928 = vmatprep.subr.mxu0 0.0
    %1929 = vmatpush1.xpose.msra.mxu0 0.0
    %1930 = vmatprep.subr.mxu0 0.0
    %1931 = vmatpush1.xpose.msra.mxu0 0.0
    %1932 = vmatprep.subr.mxu0 0.0
    %1933 = vmatpush1.xpose.msra.mxu0 0.0
    %1934 = vmatprep.subr.mxu0 0.0
    %1935 = vmatpush1.xpose.msra.mxu0 0.0
    %1936 = vmatprep.subr.mxu0 0.0
    %1937 = vmatpush1.xpose.msra.mxu0 0.0
    %1938 = vmatprep.subr.mxu0 0.0
    %1939 = vmatpush1.xpose.msra.mxu0 0.0
    %1940 = vmatprep.subr.mxu0 0.0
    %1941 = vmatpush1.xpose.msra.mxu0 0.0
    %1942 = vmatprep.subr.mxu0 0.0
    %1943 = vmatpush1.xpose.msra.mxu0 0.0
    %1944 = vmatprep.subr.mxu0 0.0
    %1945 = vmatpush1.xpose.msra.mxu0 0.0
    %1946 = vmatprep.subr.mxu0 0.0
    %1947 = vmatpush1.xpose.msra.mxu0 0.0
    %1948 = vmatprep.subr.mxu0 0.0
    %1949 = vmatpush1.xpose.msra.mxu0 0.0
    %1950 = vmatprep.subr.mxu0 0.0
    %1951 = vmatpush1.xpose.msra.mxu0 0.0
    %1952 = vmatprep.subr.mxu0 0.0
    %1953 = vmatpush1.xpose.msra.mxu0 0.0
    %1954 = vmatprep.subr.mxu0 0.0
    %1955 = vmatpush1.xpose.msra.mxu0 0.0
    %1956 = vmatprep.subr.mxu0 0.0
    %1957 = vmatpush1.xpose.msra.mxu0 0.0
    %1958 = vmatprep.subr.mxu0 0.0
    %1959 = vmatpush1.xpose.msra.mxu0 0.0
    %1960 = vmatprep.subr.mxu0 0.0
    %1961 = vmatpush1.xpose.msra.mxu0 0.0
    %1962 = vmatprep.subr.mxu0 0.0
    %1963 = vmatpush1.xpose.msra.mxu0 0.0
    %1964 = vmatprep.subr.mxu0 0.0
    %1965 = vmatpush1.xpose.msra.mxu0 0.0
    %1966 = vmatprep.subr.mxu0 0.0
    %1967 = vmatpush1.xpose.msra.mxu0 0.0
    %1968 = vmatprep.subr.mxu0 0.0
    %1969 = vmatpush1.xpose.msra.mxu0 0.0
    %1970 = vmatprep.subr.mxu0 0.0
    %1971 = vmatpush1.xpose.msra.mxu0 0.0
    %1972 = vmatprep.subr.mxu0 0.0
    %1973 = vmatpush1.xpose.msra.mxu0 0.0
    %1974 = vmatprep.subr.mxu0 0.0
    %1975 = vmatpush1.xpose.msra.mxu0 0.0
    %1976 = vmatprep.subr.mxu0 0.0
    %1977 = vmatpush1.xpose.msra.mxu0 0.0
    %1978 = vmatprep.subr.mxu0 0.0
    %1979 = vmatpush1.xpose.msra.mxu0 0.0
    %1980 = vmatprep.subr.mxu0 0.0
    %1981 = vmatpush1.xpose.msra.mxu0 0.0
    %1982 = vmatprep.subr.mxu0 0.0
    %1983 = vmatpush1.xpose.msra.mxu0 0.0
    %1984 = vmatprep.subr.mxu0 0.0
    %1985 = vmatpush1.xpose.msra.mxu0 0.0
    %1986 = vmatprep.subr.mxu0 0.0
    %1987 = vmatpush1.xpose.msra.mxu0 0.0
    %1988 = vmatprep.mubr.f32.mxu0 0.0
    %1989 = vmatmul.mubr.f32.gmra.mrb[0].mxu0 %v1916
    %v1990 = vpop.f32.mrb[0].mxu0
    %v1991 = vadd.f32 0.0, %v1990
    %v1992 = vpop.f32.mrb[0].mxu0
    %1993 = vdwg.mxu0
    %v1994 = vmul.f32 %v1991, 0.35355338
    %v1995 = vsel %vm835, %v1994, -inf
    %1996 = vmax.xlane.f32.xlu0 %v1995
    %v1997 = vpop.xlane.xlu0 %1996
    %v1998 = vsub.f32 %v1994, %v1997
    %v1999 = vmul.f32 %v1998, 1.442695
    %v2000 = vpow.pop %v1999
    %v2001 = vsel %vm835, %v2000, 0.0
    %2002 = vadd.xlane.f32.xlu0 %v2001
    %v2003 = vpop.xlane.xlu0 %2002
    %v2004 = vrcp.pop %v2003
    %v2005 = vmul.f32 %v2000, %v2004
    %2006 = vrot.lane.b32.xlu0 %v1893, 96
    %v2007 = vpop.permute.xlu0 %2006
    %2008 = vrot.lane.b32.xlu0 %v1898, 96
    %v2009 = vpop.permute.xlu0 %2008
    %v2013 = vsel %vm835, %v2005, 0
    %2015 = vmatprep.subr.mxu0 0.0
    %2016 = vmatpush1.msra.mxu0 %v2007
    %2017 = vmatprep.subr.mxu0 0.0
    %2018 = vmatpush1.msra.mxu0 %v2009
    %2019 = vmatprep.subr.mxu0 0.0
    %2020 = vmatpush1.msra.mxu0 0.0
    %2021 = vmatprep.subr.mxu0 0.0
    %2022 = vmatpush1.msra.mxu0 0.0
    %2023 = vmatprep.subr.mxu0 0.0
    %2024 = vmatpush1.msra.mxu0 0.0
    %2025 = vmatprep.subr.mxu0 0.0
    %2026 = vmatpush1.msra.mxu0 0.0
    %2027 = vmatprep.subr.mxu0 0.0
    %2028 = vmatpush1.msra.mxu0 0.0
    %2029 = vmatprep.subr.mxu0 0.0
    %2030 = vmatpush1.msra.mxu0 0.0
    %2031 = vmatprep.subr.mxu0 0.0
    %2032 = vmatpush1.msra.mxu0 0.0
    %2033 = vmatprep.subr.mxu0 0.0
    %2034 = vmatpush1.msra.mxu0 0.0
    %2035 = vmatprep.subr.mxu0 0.0
    %2036 = vmatpush1.msra.mxu0 0.0
    %2037 = vmatprep.subr.mxu0 0.0
    %2038 = vmatpush1.msra.mxu0 0.0
    %2039 = vmatprep.subr.mxu0 0.0
    %2040 = vmatpush1.msra.mxu0 0.0
    %2041 = vmatprep.subr.mxu0 0.0
    %2042 = vmatpush1.msra.mxu0 0.0
    %2043 = vmatprep.subr.mxu0 0.0
    %2044 = vmatpush1.msra.mxu0 0.0
    %2045 = vmatprep.subr.mxu0 0.0
    %2046 = vmatpush1.msra.mxu0 0.0
    %2047 = vmatprep.subr.mxu0 0.0
    %2048 = vmatpush1.msra.mxu0 0.0
    %2049 = vmatprep.subr.mxu0 0.0
    %2050 = vmatpush1.msra.mxu0 0.0
    %2051 = vmatprep.subr.mxu0 0.0
    %2052 = vmatpush1.msra.mxu0 0.0
    %2053 = vmatprep.subr.mxu0 0.0
    %2054 = vmatpush1.msra.mxu0 0.0
    %2055 = vmatprep.subr.mxu0 0.0
    %2056 = vmatpush1.msra.mxu0 0.0
    %2057 = vmatprep.subr.mxu0 0.0
    %2058 = vmatpush1.msra.mxu0 0.0
    %2059 = vmatprep.subr.mxu0 0.0
    %2060 = vmatpush1.msra.mxu0 0.0
    %2061 = vmatprep.subr.mxu0 0.0
    %2062 = vmatpush1.msra.mxu0 0.0
    %2063 = vmatprep.subr.mxu0 0.0
    %2064 = vmatpush1.msra.mxu0 0.0
    %2065 = vmatprep.subr.mxu0 0.0
    %2066 = vmatpush1.msra.mxu0 0.0
    %2067 = vmatprep.subr.mxu0 0.0
    %2068 = vmatpush1.msra.mxu0 0.0
    %2069 = vmatprep.subr.mxu0 0.0
    %2070 = vmatpush1.msra.mxu0 0.0
    %2071 = vmatprep.subr.mxu0 0.0
    %2072 = vmatpush1.msra.mxu0 0.0
    %2073 = vmatprep.subr.mxu0 0.0
    %2074 = vmatpush1.msra.mxu0 0.0
    %2075 = vmatprep.subr.mxu0 0.0
    %2076 = vmatpush1.msra.mxu0 0.0
    %2077 = vmatprep.subr.mxu0 0.0
    %2078 = vmatpush1.msra.mxu0 0.0
    %2079 = vmatprep.mubr.f32.mxu0 0.0
    %2080 = vmatmul.mubr.f32.gmra.mrb[0].mxu0 %v2013
    %v2081 = vpop.f32.mrb[0].mxu0
    %v2082 = vadd.f32 0.0, %v2081
    %v2083 = vpop.f32.mrb[0].mxu0
    %2084 = vdwg.mxu0
    %2085 = vrot.lane.b32.xlu0 %v1797, 120
    %v2086 = vpop.permute.xlu0 %2085
    %2087 = vrot.lane.b32.xlu0 %v1893, 120
    %v2088 = vpop.permute.xlu0 %2087
    %2089 = vrot.lane.b32.xlu0 %v1898, 120
    %v2090 = vpop.permute.xlu0 %2089
    %v2091 = vsel %vm161, %v2086, 0
    %v2093 = vsel %vm161, %v2088, 0
    %v2095 = vsel %vm161, %v2090, 0
    %2097 = vmatprep.subr.mxu0 0.0
    %2098 = vmatpush1.xpose.msra.mxu0 %v2093
    %2099 = vmatprep.subr.mxu0 0.0
    %2100 = vmatpush1.xpose.msra.mxu0 %v2095
    %2101 = vmatprep.subr.mxu0 0.0
    %2102 = vmatpush1.xpose.msra.mxu0 0.0
    %2103 = vmatprep.subr.mxu0 0.0
    %2104 = vmatpush1.xpose.msra.mxu0 0.0
    %2105 = vmatprep.subr.mxu0 0.0
    %2106 = vmatpush1.xpose.msra.mxu0 0.0
    %2107 = vmatprep.subr.mxu0 0.0
    %2108 = vmatpush1.xpose.msra.mxu0 0.0
    %2109 = vmatprep.subr.mxu0 0.0
    %2110 = vmatpush1.xpose.msra.mxu0 0.0
    %2111 = vmatprep.subr.mxu0 0.0
    %2112 = vmatpush1.xpose.msra.mxu0 0.0
    %2113 = vmatprep.subr.mxu0 0.0
    %2114 = vmatpush1.xpose.msra.mxu0 0.0
    %2115 = vmatprep.subr.mxu0 0.0
    %2116 = vmatpush1.xpose.msra.mxu0 0.0
    %2117 = vmatprep.subr.mxu0 0.0
    %2118 = vmatpush1.xpose.msra.mxu0 0.0
    %2119 = vmatprep.subr.mxu0 0.0
    %2120 = vmatpush1.xpose.msra.mxu0 0.0
    %2121 = vmatprep.subr.mxu0 0.0
    %2122 = vmatpush1.xpose.msra.mxu0 0.0
    %2123 = vmatprep.subr.mxu0 0.0
    %2124 = vmatpush1.xpose.msra.mxu0 0.0
    %2125 = vmatprep.subr.mxu0 0.0
    %2126 = vmatpush1.xpose.msra.mxu0 0.0
    %2127 = vmatprep.subr.mxu0 0.0
    %2128 = vmatpush1.xpose.msra.mxu0 0.0
    %2129 = vmatprep.subr.mxu0 0.0
    %2130 = vmatpush1.xpose.msra.mxu0 0.0
    %2131 = vmatprep.subr.mxu0 0.0
    %2132 = vmatpush1.xpose.msra.mxu0 0.0
    %2133 = vmatprep.subr.mxu0 0.0
    %2134 = vmatpush1.xpose.msra.mxu0 0.0
    %2135 = vmatprep.subr.mxu0 0.0
    %2136 = vmatpush1.xpose.msra.mxu0 0.0
    %2137 = vmatprep.subr.mxu0 0.0
    %2138 = vmatpush1.xpose.msra.mxu0 0.0
    %2139 = vmatprep.subr.mxu0 0.0
    %2140 = vmatpush1.xpose.msra.mxu0 0.0
    %2141 = vmatprep.subr.mxu0 0.0
    %2142 = vmatpush1.xpose.msra.mxu0 0.0
    %2143 = vmatprep.subr.mxu0 0.0
    %2144 = vmatpush1.xpose.msra.mxu0 0.0
    %2145 = vmatprep.subr.mxu0 0.0
    %2146 = vmatpush1.xpose.msra.mxu0 0.0
    %2147 = vmatprep.subr.mxu0 0.0
    %2148 = vmatpush1.xpose.msra.mxu0 0.0
    %2149 = vmatprep.subr.mxu0 0.0
    %2150 = vmatpush1.xpose.msra.mxu0 0.0
    %2151 = vmatprep.subr.mxu0 0.0
    %2152 = vmatpush1.xpose.msra.mxu0 0.0
    %2153 = vmatprep.subr.mxu0 0.0
    %2154 = vmatpush1.xpose.msra.mxu0 0.0
    %2155 = vmatprep.subr.mxu0 0.0
    %2156 = vmatpush1.xpose.msra.mxu0 0.0
    %2157 = vmatprep.subr.mxu0 0.0
    %2158 = vmatpush1.xpose.msra.mxu0 0.0
    %2159 = vmatprep.subr.mxu0 0.0
    %2160 = vmatpush1.xpose.msra.mxu0 0.0
    %2161 = vmatprep.mubr.f32.mxu0 0.0
    %2162 = vmatmul.mubr.f32.gmra.mrb[0].mxu0 %v2091
    %v2163 = vpop.f32.mrb[0].mxu0
    %v2164 = vadd.f32 0.0, %v2163
    %v2165 = vpop.f32.mrb[0].mxu0
    %2166 = vdwg.mxu0
    %v2167 = vmul.f32 %v2164, 0.35355338
    %v2168 = vsel %vm835, %v2167, -inf
    %2169 = vmax.xlane.f32.xlu0 %v2168
    %v2170 = vpop.xlane.xlu0 %2169
    %v2171 = vsub.f32 %v2167, %v2170
    %v2172 = vmul.f32 %v2171, 1.442695
    %v2173 = vpow.pop %v2172
    %v2174 = vsel %vm835, %v2173, 0.0
    %2175 = vadd.xlane.f32.xlu0 %v2174
    %v2176 = vpop.xlane.xlu0 %2175
    %v2177 = vrcp.pop %v2176
    %v2178 = vmul.f32 %v2173, %v2177
    %2179 = vrot.lane.b32.xlu0 %v1893, 88
    %v2180 = vpop.permute.xlu0 %2179
    %2181 = vrot.lane.b32.xlu0 %v1898, 88
    %v2182 = vpop.permute.xlu0 %2181
    %v2186 = vsel %vm835, %v2178, 0
    %2188 = vmatprep.subr.mxu0 0.0
    %2189 = vmatpush1.msra.mxu0 %v2180
    %2190 = vmatprep.subr.mxu0 0.0
    %2191 = vmatpush1.msra.mxu0 %v2182
    %2192 = vmatprep.subr.mxu0 0.0
    %2193 = vmatpush1.msra.mxu0 0.0
    %2194 = vmatprep.subr.mxu0 0.0
    %2195 = vmatpush1.msra.mxu0 0.0
    %2196 = vmatprep.subr.mxu0 0.0
    %2197 = vmatpush1.msra.mxu0 0.0
    %2198 = vmatprep.subr.mxu0 0.0
    %2199 = vmatpush1.msra.mxu0 0.0
    %2200 = vmatprep.subr.mxu0 0.0
    %2201 = vmatpush1.msra.mxu0 0.0
    %2202 = vmatprep.subr.mxu0 0.0
    %2203 = vmatpush1.msra.mxu0 0.0
    %2204 = vmatprep.subr.mxu0 0.0
    %2205 = vmatpush1.msra.mxu0 0.0
    %2206 = vmatprep.subr.mxu0 0.0
    %2207 = vmatpush1.msra.mxu0 0.0
    %2208 = vmatprep.subr.mxu0 0.0
    %2209 = vmatpush1.msra.mxu0 0.0
    %2210 = vmatprep.subr.mxu0 0.0
    %2211 = vmatpush1.msra.mxu0 0.0
    %2212 = vmatprep.subr.mxu0 0.0
    %2213 = vmatpush1.msra.mxu0 0.0
    %2214 = vmatprep.subr.mxu0 0.0
    %2215 = vmatpush1.msra.mxu0 0.0
    %2216 = vmatprep.subr.mxu0 0.0
    %2217 = vmatpush1.msra.mxu0 0.0
    %2218 = vmatprep.subr.mxu0 0.0
    %2219 = vmatpush1.msra.mxu0 0.0
    %2220 = vmatprep.subr.mxu0 0.0
    %2221 = vmatpush1.msra.mxu0 0.0
    %2222 = vmatprep.subr.mxu0 0.0
    %2223 = vmatpush1.msra.mxu0 0.0
    %2224 = vmatprep.subr.mxu0 0.0
    %2225 = vmatpush1.msra.mxu0 0.0
    %2226 = vmatprep.subr.mxu0 0.0
    %2227 = vmatpush1.msra.mxu0 0.0
    %2228 = vmatprep.subr.mxu0 0.0
    %2229 = vmatpush1.msra.mxu0 0.0
    %2230 = vmatprep.subr.mxu0 0.0
    %2231 = vmatpush1.msra.mxu0 0.0
    %2232 = vmatprep.subr.mxu0 0.0
    %2233 = vmatpush1.msra.mxu0 0.0
    %2234 = vmatprep.subr.mxu0 0.0
    %2235 = vmatpush1.msra.mxu0 0.0
    %2236 = vmatprep.subr.mxu0 0.0
    %2237 = vmatpush1.msra.mxu0 0.0
    %2238 = vmatprep.subr.mxu0 0.0
    %2239 = vmatpush1.msra.mxu0 0.0
    %2240 = vmatprep.subr.mxu0 0.0
    %2241 = vmatpush1.msra.mxu0 0.0
    %2242 = vmatprep.subr.mxu0 0.0
    %2243 = vmatpush1.msra.mxu0 0.0
    %2244 = vmatprep.subr.mxu0 0.0
    %2245 = vmatpush1.msra.mxu0 0.0
    %2246 = vmatprep.subr.mxu0 0.0
    %2247 = vmatpush1.msra.mxu0 0.0
    %2248 = vmatprep.subr.mxu0 0.0
    %2249 = vmatpush1.msra.mxu0 0.0
    %2250 = vmatprep.subr.mxu0 0.0
    %2251 = vmatpush1.msra.mxu0 0.0
    %2252 = vmatprep.mubr.f32.mxu0 0.0
    %2253 = vmatmul.mubr.f32.gmra.mrb[0].mxu0 %v2186
    %v2254 = vpop.f32.mrb[0].mxu0
    %v2255 = vadd.f32 0.0, %v2254
    %v2256 = vpop.f32.mrb[0].mxu0
    %2257 = vdwg.mxu0
    %2258 = vrot.lane.b32.xlu0 %v1797, 112
    %v2259 = vpop.permute.xlu0 %2258
    %2260 = vrot.lane.b32.xlu0 %v1893, 112
    %v2261 = vpop.permute.xlu0 %2260
    %2262 = vrot.lane.b32.xlu0 %v1898, 112
    %v2263 = vpop.permute.xlu0 %2262
    %v2264 = vsel %vm161, %v2259, 0
    %v2266 = vsel %vm161, %v2261, 0
    %v2268 = vsel %vm161, %v2263, 0
    %2270 = vmatprep.subr.mxu0 0.0
    %2271 = vmatpush1.xpose.msra.mxu0 %v2266
    %2272 = vmatprep.subr.mxu0 0.0
    %2273 = vmatpush1.xpose.msra.mxu0 %v2268
    %2274 = vmatprep.subr.mxu0 0.0
    %2275 = vmatpush1.xpose.msra.mxu0 0.0
    %2276 = vmatprep.subr.mxu0 0.0
    %2277 = vmatpush1.xpose.msra.mxu0 0.0
    %2278 = vmatprep.subr.mxu0 0.0
    %2279 = vmatpush1.xpose.msra.mxu0 0.0
    %2280 = vmatprep.subr.mxu0 0.0
    %2281 = vmatpush1.xpose.msra.mxu0 0.0
    %2282 = vmatprep.subr.mxu0 0.0
    %2283 = vmatpush1.xpose.msra.mxu0 0.0
    %2284 = vmatprep.subr.mxu0 0.0
    %2285 = vmatpush1.xpose.msra.mxu0 0.0
    %2286 = vmatprep.subr.mxu0 0.0
    %2287 = vmatpush1.xpose.msra.mxu0 0.0
    %2288 = vmatprep.subr.mxu0 0.0
    %2289 = vmatpush1.xpose.msra.mxu0 0.0
    %2290 = vmatprep.subr.mxu0 0.0
    %2291 = vmatpush1.xpose.msra.mxu0 0.0
    %2292 = vmatprep.subr.mxu0 0.0
    %2293 = vmatpush1.xpose.msra.mxu0 0.0
    %2294 = vmatprep.subr.mxu0 0.0
    %2295 = vmatpush1.xpose.msra.mxu0 0.0
    %2296 = vmatprep.subr.mxu0 0.0
    %2297 = vmatpush1.xpose.msra.mxu0 0.0
    %2298 = vmatprep.subr.mxu0 0.0
    %2299 = vmatpush1.xpose.msra.mxu0 0.0
    %2300 = vmatprep.subr.mxu0 0.0
    %2301 = vmatpush1.xpose.msra.mxu0 0.0
    %2302 = vmatprep.subr.mxu0 0.0
    %2303 = vmatpush1.xpose.msra.mxu0 0.0
    %2304 = vmatprep.subr.mxu0 0.0
    %2305 = vmatpush1.xpose.msra.mxu0 0.0
    %2306 = vmatprep.subr.mxu0 0.0
    %2307 = vmatpush1.xpose.msra.mxu0 0.0
    %2308 = vmatprep.subr.mxu0 0.0
    %2309 = vmatpush1.xpose.msra.mxu0 0.0
    %2310 = vmatprep.subr.mxu0 0.0
    %2311 = vmatpush1.xpose.msra.mxu0 0.0
    %2312 = vmatprep.subr.mxu0 0.0
    %2313 = vmatpush1.xpose.msra.mxu0 0.0
    %2314 = vmatprep.subr.mxu0 0.0
    %2315 = vmatpush1.xpose.msra.mxu0 0.0
    %2316 = vmatprep.subr.mxu0 0.0
    %2317 = vmatpush1.xpose.msra.mxu0 0.0
    %2318 = vmatprep.subr.mxu0 0.0
    %2319 = vmatpush1.xpose.msra.mxu0 0.0
    %2320 = vmatprep.subr.mxu0 0.0
    %2321 = vmatpush1.xpose.msra.mxu0 0.0
    %2322 = vmatprep.subr.mxu0 0.0
    %2323 = vmatpush1.xpose.msra.mxu0 0.0
    %2324 = vmatprep.subr.mxu0 0.0
    %2325 = vmatpush1.xpose.msra.mxu0 0.0
    %2326 = vmatprep.subr.mxu0 0.0
    %2327 = vmatpush1.xpose.msra.mxu0 0.0
    %2328 = vmatprep.subr.mxu0 0.0
    %2329 = vmatpush1.xpose.msra.mxu0 0.0
    %2330 = vmatprep.subr.mxu0 0.0
    %2331 = vmatpush1.xpose.msra.mxu0 0.0
    %2332 = vmatprep.subr.mxu0 0.0
    %2333 = vmatpush1.xpose.msra.mxu0 0.0
    %2334 = vmatprep.mubr.f32.mxu0 0.0
    %2335 = vmatmul.mubr.f32.gmra.mrb[0].mxu0 %v2264
    %v2336 = vpop.f32.mrb[0].mxu0
    %v2337 = vadd.f32 0.0, %v2336
    %v2338 = vpop.f32.mrb[0].mxu0
    %2339 = vdwg.mxu0
    %v2340 = vmul.f32 %v2337, 0.35355338
    %v2341 = vsel %vm835, %v2340, -inf
    %2342 = vmax.xlane.f32.xlu0 %v2341
    %v2343 = vpop.xlane.xlu0 %2342
    %v2344 = vsub.f32 %v2340, %v2343
    %v2345 = vmul.f32 %v2344, 1.442695
    %v2346 = vpow.pop %v2345
    %v2347 = vsel %vm835, %v2346, 0.0
    %2348 = vadd.xlane.f32.xlu0 %v2347
    %v2349 = vpop.xlane.xlu0 %2348
    %v2350 = vrcp.pop %v2349
    %v2351 = vmul.f32 %v2346, %v2350
    %2352 = vrot.lane.b32.xlu0 %v1893, 80
    %v2353 = vpop.permute.xlu0 %2352
    %2354 = vrot.lane.b32.xlu0 %v1898, 80
    %v2355 = vpop.permute.xlu0 %2354
    %v2359 = vsel %vm835, %v2351, 0
    %2361 = vmatprep.subr.mxu0 0.0
    %2362 = vmatpush1.msra.mxu0 %v2353
    %2363 = vmatprep.subr.mxu0 0.0
    %2364 = vmatpush1.msra.mxu0 %v2355
    %2365 = vmatprep.subr.mxu0 0.0
    %2366 = vmatpush1.msra.mxu0 0.0
    %2367 = vmatprep.subr.mxu0 0.0
    %2368 = vmatpush1.msra.mxu0 0.0
    %2369 = vmatprep.subr.mxu0 0.0
    %2370 = vmatpush1.msra.mxu0 0.0
    %2371 = vmatprep.subr.mxu0 0.0
    %2372 = vmatpush1.msra.mxu0 0.0
    %2373 = vmatprep.subr.mxu0 0.0
    %2374 = vmatpush1.msra.mxu0 0.0
    %2375 = vmatprep.subr.mxu0 0.0
    %2376 = vmatpush1.msra.mxu0 0.0
    %2377 = vmatprep.subr.mxu0 0.0
    %2378 = vmatpush1.msra.mxu0 0.0
    %2379 = vmatprep.subr.mxu0 0.0
    %2380 = vmatpush1.msra.mxu0 0.0
    %2381 = vmatprep.subr.mxu0 0.0
    %2382 = vmatpush1.msra.mxu0 0.0
    %2383 = vmatprep.subr.mxu0 0.0
    %2384 = vmatpush1.msra.mxu0 0.0
    %2385 = vmatprep.subr.mxu0 0.0
    %2386 = vmatpush1.msra.mxu0 0.0
    %2387 = vmatprep.subr.mxu0 0.0
    %2388 = vmatpush1.msra.mxu0 0.0
    %2389 = vmatprep.subr.mxu0 0.0
    %2390 = vmatpush1.msra.mxu0 0.0
    %2391 = vmatprep.subr.mxu0 0.0
    %2392 = vmatpush1.msra.mxu0 0.0
    %2393 = vmatprep.subr.mxu0 0.0
    %2394 = vmatpush1.msra.mxu0 0.0
    %2395 = vmatprep.subr.mxu0 0.0
    %2396 = vmatpush1.msra.mxu0 0.0
    %2397 = vmatprep.subr.mxu0 0.0
    %2398 = vmatpush1.msra.mxu0 0.0
    %2399 = vmatprep.subr.mxu0 0.0
    %2400 = vmatpush1.msra.mxu0 0.0
    %2401 = vmatprep.subr.mxu0 0.0
    %2402 = vmatpush1.msra.mxu0 0.0
    %2403 = vmatprep.subr.mxu0 0.0
    %2404 = vmatpush1.msra.mxu0 0.0
    %2405 = vmatprep.subr.mxu0 0.0
    %2406 = vmatpush1.msra.mxu0 0.0
    %2407 = vmatprep.subr.mxu0 0.0
    %2408 = vmatpush1.msra.mxu0 0.0
    %2409 = vmatprep.subr.mxu0 0.0
    %2410 = vmatpush1.msra.mxu0 0.0
    %2411 = vmatprep.subr.mxu0 0.0
    %2412 = vmatpush1.msra.mxu0 0.0
    %2413 = vmatprep.subr.mxu0 0.0
    %2414 = vmatpush1.msra.mxu0 0.0
    %2415 = vmatprep.subr.mxu0 0.0
    %2416 = vmatpush1.msra.mxu0 0.0
    %2417 = vmatprep.subr.mxu0 0.0
    %2418 = vmatpush1.msra.mxu0 0.0
    %2419 = vmatprep.subr.mxu0 0.0
    %2420 = vmatpush1.msra.mxu0 0.0
    %2421 = vmatprep.subr.mxu0 0.0
    %2422 = vmatpush1.msra.mxu0 0.0
    %2423 = vmatprep.subr.mxu0 0.0
    %2424 = vmatpush1.msra.mxu0 0.0
    %2425 = vmatprep.mubr.f32.mxu0 0.0
    %2426 = vmatmul.mubr.f32.gmra.mrb[0].mxu0 %v2359
    %v2427 = vpop.f32.mrb[0].mxu0
    %v2428 = vadd.f32 0.0, %v2427
    %v2429 = vpop.f32.mrb[0].mxu0
    %2430 = vdwg.mxu0
    %2431 = vrot.lane.b32.xlu0 %v1797, 104
    %v2432 = vpop.permute.xlu0 %2431
    %2433 = vrot.lane.b32.xlu0 %v1893, 104
    %v2434 = vpop.permute.xlu0 %2433
    %2435 = vrot.lane.b32.xlu0 %v1898, 104
    %v2436 = vpop.permute.xlu0 %2435
    %v2437 = vsel %vm161, %v2432, 0
    %v2439 = vsel %vm161, %v2434, 0
    %v2441 = vsel %vm161, %v2436, 0
    %2443 = vmatprep.subr.mxu0 0.0
    %2444 = vmatpush1.xpose.msra.mxu0 %v2439
    %2445 = vmatprep.subr.mxu0 0.0
    %2446 = vmatpush1.xpose.msra.mxu0 %v2441
    %2447 = vmatprep.subr.mxu0 0.0
    %2448 = vmatpush1.xpose.msra.mxu0 0.0
    %2449 = vmatprep.subr.mxu0 0.0
    %2450 = vmatpush1.xpose.msra.mxu0 0.0
    %2451 = vmatprep.subr.mxu0 0.0
    %2452 = vmatpush1.xpose.msra.mxu0 0.0
    %2453 = vmatprep.subr.mxu0 0.0
    %2454 = vmatpush1.xpose.msra.mxu0 0.0
    %2455 = vmatprep.subr.mxu0 0.0
    %2456 = vmatpush1.xpose.msra.mxu0 0.0
    %2457 = vmatprep.subr.mxu0 0.0
    %2458 = vmatpush1.xpose.msra.mxu0 0.0
    %2459 = vmatprep.subr.mxu0 0.0
    %2460 = vmatpush1.xpose.msra.mxu0 0.0
    %2461 = vmatprep.subr.mxu0 0.0
    %2462 = vmatpush1.xpose.msra.mxu0 0.0
    %2463 = vmatprep.subr.mxu0 0.0
    %2464 = vmatpush1.xpose.msra.mxu0 0.0
    %2465 = vmatprep.subr.mxu0 0.0
    %2466 = vmatpush1.xpose.msra.mxu0 0.0
    %2467 = vmatprep.subr.mxu0 0.0
    %2468 = vmatpush1.xpose.msra.mxu0 0.0
    %2469 = vmatprep.subr.mxu0 0.0
    %2470 = vmatpush1.xpose.msra.mxu0 0.0
    %2471 = vmatprep.subr.mxu0 0.0
    %2472 = vmatpush1.xpose.msra.mxu0 0.0
    %2473 = vmatprep.subr.mxu0 0.0
    %2474 = vmatpush1.xpose.msra.mxu0 0.0
    %2475 = vmatprep.subr.mxu0 0.0
    %2476 = vmatpush1.xpose.msra.mxu0 0.0
    %2477 = vmatprep.subr.mxu0 0.0
    %2478 = vmatpush1.xpose.msra.mxu0 0.0
    %2479 = vmatprep.subr.mxu0 0.0
    %2480 = vmatpush1.xpose.msra.mxu0 0.0
    %2481 = vmatprep.subr.mxu0 0.0
    %2482 = vmatpush1.xpose.msra.mxu0 0.0
    %2483 = vmatprep.subr.mxu0 0.0
    %2484 = vmatpush1.xpose.msra.mxu0 0.0
    %2485 = vmatprep.subr.mxu0 0.0
    %2486 = vmatpush1.xpose.msra.mxu0 0.0
    %2487 = vmatprep.subr.mxu0 0.0
    %2488 = vmatpush1.xpose.msra.mxu0 0.0
    %2489 = vmatprep.subr.mxu0 0.0
    %2490 = vmatpush1.xpose.msra.mxu0 0.0
    %2491 = vmatprep.subr.mxu0 0.0
    %2492 = vmatpush1.xpose.msra.mxu0 0.0
    %2493 = vmatprep.subr.mxu0 0.0
    %2494 = vmatpush1.xpose.msra.mxu0 0.0
    %2495 = vmatprep.subr.mxu0 0.0
    %2496 = vmatpush1.xpose.msra.mxu0 0.0
    %2497 = vmatprep.subr.mxu0 0.0
    %2498 = vmatpush1.xpose.msra.mxu0 0.0
    %2499 = vmatprep.subr.mxu0 0.0
    %2500 = vmatpush1.xpose.msra.mxu0 0.0
    %2501 = vmatprep.subr.mxu0 0.0
    %2502 = vmatpush1.xpose.msra.mxu0 0.0
    %2503 = vmatprep.subr.mxu0 0.0
    %2504 = vmatpush1.xpose.msra.mxu0 0.0
    %2505 = vmatprep.subr.mxu0 0.0
    %2506 = vmatpush1.xpose.msra.mxu0 0.0
    %2507 = vmatprep.mubr.f32.mxu0 0.0
    %2508 = vmatmul.mubr.f32.gmra.mrb[0].mxu0 %v2437
    %v2509 = vpop.f32.mrb[0].mxu0
    %v2510 = vadd.f32 0.0, %v2509
    %v2511 = vpop.f32.mrb[0].mxu0
    %2512 = vdwg.mxu0
    %v2513 = vmul.f32 %v2510, 0.35355338
    %v2514 = vsel %vm835, %v2513, -inf
    %2515 = vmax.xlane.f32.xlu0 %v2514
    %v2516 = vpop.xlane.xlu0 %2515
    %v2517 = vsub.f32 %v2513, %v2516
    %v2518 = vmul.f32 %v2517, 1.442695
    %v2519 = vpow.pop %v2518
    %v2520 = vsel %vm835, %v2519, 0.0
    %2521 = vadd.xlane.f32.xlu0 %v2520
    %v2522 = vpop.xlane.xlu0 %2521
    %v2523 = vrcp.pop %v2522
    %v2524 = vmul.f32 %v2519, %v2523
    %2525 = vrot.lane.b32.xlu0 %v1893, 72
    %v2526 = vpop.permute.xlu0 %2525
    %2527 = vrot.lane.b32.xlu0 %v1898, 72
    %v2528 = vpop.permute.xlu0 %2527
    %v2532 = vsel %vm835, %v2524, 0
    %2534 = vmatprep.subr.mxu0 0.0
    %2535 = vmatpush1.msra.mxu0 %v2526
    %2536 = vmatprep.subr.mxu0 0.0
    %2537 = vmatpush1.msra.mxu0 %v2528
    %2538 = vmatprep.subr.mxu0 0.0
    %2539 = vmatpush1.msra.mxu0 0.0
    %2540 = vmatprep.subr.mxu0 0.0
    %2541 = vmatpush1.msra.mxu0 0.0
    %2542 = vmatprep.subr.mxu0 0.0
    %2543 = vmatpush1.msra.mxu0 0.0
    %2544 = vmatprep.subr.mxu0 0.0
    %2545 = vmatpush1.msra.mxu0 0.0
    %2546 = vmatprep.subr.mxu0 0.0
    %2547 = vmatpush1.msra.mxu0 0.0
    %2548 = vmatprep.subr.mxu0 0.0
    %2549 = vmatpush1.msra.mxu0 0.0
    %2550 = vmatprep.subr.mxu0 0.0
    %2551 = vmatpush1.msra.mxu0 0.0
    %2552 = vmatprep.subr.mxu0 0.0
    %2553 = vmatpush1.msra.mxu0 0.0
    %2554 = vmatprep.subr.mxu0 0.0
    %2555 = vmatpush1.msra.mxu0 0.0
    %2556 = vmatprep.subr.mxu0 0.0
    %2557 = vmatpush1.msra.mxu0 0.0
    %2558 = vmatprep.subr.mxu0 0.0
    %2559 = vmatpush1.msra.mxu0 0.0
    %2560 = vmatprep.subr.mxu0 0.0
    %2561 = vmatpush1.msra.mxu0 0.0
    %2562 = vmatprep.subr.mxu0 0.0
    %2563 = vmatpush1.msra.mxu0 0.0
    %2564 = vmatprep.subr.mxu0 0.0
    %2565 = vmatpush1.msra.mxu0 0.0
    %2566 = vmatprep.subr.mxu0 0.0
    %2567 = vmatpush1.msra.mxu0 0.0
    %2568 = vmatprep.subr.mxu0 0.0
    %2569 = vmatpush1.msra.mxu0 0.0
    %2570 = vmatprep.subr.mxu0 0.0
    %2571 = vmatpush1.msra.mxu0 0.0
    %2572 = vmatprep.subr.mxu0 0.0
    %2573 = vmatpush1.msra.mxu0 0.0
    %2574 = vmatprep.subr.mxu0 0.0
    %2575 = vmatpush1.msra.mxu0 0.0
    %2576 = vmatprep.subr.mxu0 0.0
    %2577 = vmatpush1.msra.mxu0 0.0
    %2578 = vmatprep.subr.mxu0 0.0
    %2579 = vmatpush1.msra.mxu0 0.0
    %2580 = vmatprep.subr.mxu0 0.0
    %2581 = vmatpush1.msra.mxu0 0.0
    %2582 = vmatprep.subr.mxu0 0.0
    %2583 = vmatpush1.msra.mxu0 0.0
    %2584 = vmatprep.subr.mxu0 0.0
    %2585 = vmatpush1.msra.mxu0 0.0
    %2586 = vmatprep.subr.mxu0 0.0
    %2587 = vmatpush1.msra.mxu0 0.0
    %2588 = vmatprep.subr.mxu0 0.0
    %2589 = vmatpush1.msra.mxu0 0.0
    %2590 = vmatprep.subr.mxu0 0.0
    %2591 = vmatpush1.msra.mxu0 0.0
    %2592 = vmatprep.subr.mxu0 0.0
    %2593 = vmatpush1.msra.mxu0 0.0
    %2594 = vmatprep.subr.mxu0 0.0
    %2595 = vmatpush1.msra.mxu0 0.0
    %2596 = vmatprep.subr.mxu0 0.0
    %2597 = vmatpush1.msra.mxu0 0.0
    %2598 = vmatprep.mubr.f32.mxu0 0.0
    %2599 = vmatmul.mubr.f32.gmra.mrb[0].mxu0 %v2532
    %v2600 = vpop.f32.mrb[0].mxu0
    %v2601 = vadd.f32 0.0, %v2600
    %v2602 = vpop.f32.mrb[0].mxu0
    %2603 = vdwg.mxu0
    %2605 = vrot.lane.b32.xlu0 %v2255, 8
    %v2606 = vpop.permute.xlu0 %2605
    %2609 = vrot.lane.b32.xlu0 %v2428, 16
    %v2610 = vpop.permute.xlu0 %2609
    %2613 = vrot.lane.b32.xlu0 %v2601, 24
    %v2614 = vpop.permute.xlu0 %2613
    %v2616 = vsel %vm161, %v2082, %v2606
    %v2617 = vsel %vm835, %v2616, %v2610
    %v2618 = vsel %vm837, %v2617, %v2614
    %v2620 = vsel %vm72, %v2618, 0
    %2622 = vmatprep.subr.mxu0 0.0
    %2623 = vmatpush1.msra.mxu0 %v1911
    %2624 = vmatprep.subr.mxu0 0.0
    %2625 = vmatpush1.msra.mxu0 %v1912
    %2626 = vmatprep.subr.mxu0 0.0
    %2627 = vmatpush1.msra.mxu0 %v1913
    %2628 = vmatprep.subr.mxu0 0.0
    %2629 = vmatpush1.msra.mxu0 %v1914
    %2630 = vmatprep.subr.mxu0 0.0
    %2631 = vmatpush1.msra.mxu0 0.0
    %2632 = vmatprep.subr.mxu0 0.0
    %2633 = vmatpush1.msra.mxu0 0.0
    %2634 = vmatprep.subr.mxu0 0.0
    %2635 = vmatpush1.msra.mxu0 0.0
    %2636 = vmatprep.subr.mxu0 0.0
    %2637 = vmatpush1.msra.mxu0 0.0
    %2638 = vmatprep.subr.mxu0 0.0
    %2639 = vmatpush1.msra.mxu0 0.0
    %2640 = vmatprep.subr.mxu0 0.0
    %2641 = vmatpush1.msra.mxu0 0.0
    %2642 = vmatprep.subr.mxu0 0.0
    %2643 = vmatpush1.msra.mxu0 0.0
    %2644 = vmatprep.subr.mxu0 0.0
    %2645 = vmatpush1.msra.mxu0 0.0
    %2646 = vmatprep.subr.mxu0 0.0
    %2647 = vmatpush1.msra.mxu0 0.0
    %2648 = vmatprep.subr.mxu0 0.0
    %2649 = vmatpush1.msra.mxu0 0.0
    %2650 = vmatprep.subr.mxu0 0.0
    %2651 = vmatpush1.msra.mxu0 0.0
    %2652 = vmatprep.subr.mxu0 0.0
    %2653 = vmatpush1.msra.mxu0 0.0
    %2654 = vmatprep.subr.mxu0 0.0
    %2655 = vmatpush1.msra.mxu0 0.0
    %2656 = vmatprep.subr.mxu0 0.0
    %2657 = vmatpush1.msra.mxu0 0.0
    %2658 = vmatprep.subr.mxu0 0.0
    %2659 = vmatpush1.msra.mxu0 0.0
    %2660 = vmatprep.subr.mxu0 0.0
    %2661 = vmatpush1.msra.mxu0 0.0
    %2662 = vmatprep.subr.mxu0 0.0
    %2663 = vmatpush1.msra.mxu0 0.0
    %2664 = vmatprep.subr.mxu0 0.0
    %2665 = vmatpush1.msra.mxu0 0.0
    %2666 = vmatprep.subr.mxu0 0.0
    %2667 = vmatpush1.msra.mxu0 0.0
    %2668 = vmatprep.subr.mxu0 0.0
    %2669 = vmatpush1.msra.mxu0 0.0
    %2670 = vmatprep.subr.mxu0 0.0
    %2671 = vmatpush1.msra.mxu0 0.0
    %2672 = vmatprep.subr.mxu0 0.0
    %2673 = vmatpush1.msra.mxu0 0.0
    %2674 = vmatprep.subr.mxu0 0.0
    %2675 = vmatpush1.msra.mxu0 0.0
    %2676 = vmatprep.subr.mxu0 0.0
    %2677 = vmatpush1.msra.mxu0 0.0
    %2678 = vmatprep.subr.mxu0 0.0
    %2679 = vmatpush1.msra.mxu0 0.0
    %2680 = vmatprep.subr.mxu0 0.0
    %2681 = vmatpush1.msra.mxu0 0.0
    %2682 = vmatprep.subr.mxu0 0.0
    %2683 = vmatpush1.msra.mxu0 0.0
    %2684 = vmatprep.subr.mxu0 0.0
    %2685 = vmatpush1.msra.mxu0 0.0
    %2686 = vmatprep.mubr.f32.mxu0 0.0
    %2687 = vmatmul.mubr.f32.gmra.mrb[0].mxu0 %v2620
    %v2688 = vpop.f32.mrb[0].mxu0
    %v2689 = vadd.f32 0.0, %v2688
    %v2690 = vpop.f32.mrb[0].mxu0
    %2691 = vdwg.mxu0
    %2692 = vst.msk [vmem:[#allocation2] sm:$0xff] %vm72, %v2689
    %v2694 = vsel %vm161, %v1802, 0
    %v2697 = vsel %vm161, %v1903, 0
    %v2700 = vsel %vm161, %v1908, 0
    %2702 = vmatprep.subr.mxu0 0.0
    %2703 = vmatpush1.xpose.msra.mxu0 %v2697
    %2704 = vmatprep.subr.mxu0 0.0
    %2705 = vmatpush1.xpose.msra.mxu0 %v2700
    %2706 = vmatprep.subr.mxu0 0.0
    %2707 = vmatpush1.xpose.msra.mxu0 0.0
    %2708 = vmatprep.subr.mxu0 0.0
    %2709 = vmatpush1.xpose.msra.mxu0 0.0
    %2710 = vmatprep.subr.mxu0 0.0
    %2711 = vmatpush1.xpose.msra.mxu0 0.0
    %2712 = vmatprep.subr.mxu0 0.0
    %2713 = vmatpush1.xpose.msra.mxu0 0.0
    %2714 = vmatprep.subr.mxu0 0.0
    %2715 = vmatpush1.xpose.msra.mxu0 0.0
    %2716 = vmatprep.subr.mxu0 0.0
    %2717 = vmatpush1.xpose.msra.mxu0 0.0
    %2718 = vmatprep.subr.mxu0 0.0
    %2719 = vmatpush1.xpose.msra.mxu0 0.0
    %2720 = vmatprep.subr.mxu0 0.0
    %2721 = vmatpush1.xpose.msra.mxu0 0.0
    %2722 = vmatprep.subr.mxu0 0.0
    %2723 = vmatpush1.xpose.msra.mxu0 0.0
    %2724 = vmatprep.subr.mxu0 0.0
    %2725 = vmatpush1.xpose.msra.mxu0 0.0
    %2726 = vmatprep.subr.mxu0 0.0
    %2727 = vmatpush1.xpose.msra.mxu0 0.0
    %2728 = vmatprep.subr.mxu0 0.0
    %2729 = vmatpush1.xpose.msra.mxu0 0.0
    %2730 = vmatprep.subr.mxu0 0.0
    %2731 = vmatpush1.xpose.msra.mxu0 0.0
    %2732 = vmatprep.subr.mxu0 0.0
    %2733 = vmatpush1.xpose.msra.mxu0 0.0
    %2734 = vmatprep.subr.mxu0 0.0
    %2735 = vmatpush1.xpose.msra.mxu0 0.0
    %2736 = vmatprep.subr.mxu0 0.0
    %2737 = vmatpush1.xpose.msra.mxu0 0.0
    %2738 = vmatprep.subr.mxu0 0.0
    %2739 = vmatpush1.xpose.msra.mxu0 0.0
    %2740 = vmatprep.subr.mxu0 0.0
    %2741 = vmatpush1.xpose.msra.mxu0 0.0
    %2742 = vmatprep.subr.mxu0 0.0
    %2743 = vmatpush1.xpose.msra.mxu0 0.0
    %2744 = vmatprep.subr.mxu0 0.0
    %2745 = vmatpush1.xpose.msra.mxu0 0.0
    %2746 = vmatprep.subr.mxu0 0.0
    %2747 = vmatpush1.xpose.msra.mxu0 0.0
    %2748 = vmatprep.subr.mxu0 0.0
    %2749 = vmatpush1.xpose.msra.mxu0 0.0
    %2750 = vmatprep.subr.mxu0 0.0
    %2751 = vmatpush1.xpose.msra.mxu0 0.0
    %2752 = vmatprep.subr.mxu0 0.0
    %2753 = vmatpush1.xpose.msra.mxu0 0.0
    %2754 = vmatprep.subr.mxu0 0.0
    %2755 = vmatpush1.xpose.msra.mxu0 0.0
    %2756 = vmatprep.subr.mxu0 0.0
    %2757 = vmatpush1.xpose.msra.mxu0 0.0
    %2758 = vmatprep.subr.mxu0 0.0
    %2759 = vmatpush1.xpose.msra.mxu0 0.0
    %2760 = vmatprep.subr.mxu0 0.0
    %2761 = vmatpush1.xpose.msra.mxu0 0.0
    %2762 = vmatprep.subr.mxu0 0.0
    %2763 = vmatpush1.xpose.msra.mxu0 0.0
    %2764 = vmatprep.subr.mxu0 0.0
    %2765 = vmatpush1.xpose.msra.mxu0 0.0
    %2766 = vmatprep.mubr.f32.mxu0 0.0
    %2767 = vmatmul.mubr.f32.gmra.mrb[0].mxu0 %v2694
    %v2768 = vpop.f32.mrb[0].mxu0
    %v2769 = vadd.f32 0.0, %v2768
    %v2770 = vpop.f32.mrb[0].mxu0
    %2771 = vdwg.mxu0
    %v2772 = vmul.f32 %v2769, 0.35355338
    %v2773 = vsel %vm835, %v2772, -inf
    %2774 = vmax.xlane.f32.xlu0 %v2773
    %v2775 = vpop.xlane.xlu0 %2774
    %v2776 = vsub.f32 %v2772, %v2775
    %v2777 = vmul.f32 %v2776, 1.442695
    %v2778 = vpow.pop %v2777
    %v2779 = vsel %vm835, %v2778, 0.0
    %2780 = vadd.xlane.f32.xlu0 %v2779
    %v2781 = vpop.xlane.xlu0 %2780
    %v2782 = vrcp.pop %v2781
    %v2783 = vmul.f32 %v2778, %v2782
    %2784 = vrot.lane.b32.xlu0 %v1903, 96
    %v2785 = vpop.permute.xlu0 %2784
    %2786 = vrot.lane.b32.xlu0 %v1908, 96
    %v2787 = vpop.permute.xlu0 %2786
    %v2791 = vsel %vm835, %v2783, 0
    %2793 = vmatprep.subr.mxu0 0.0
    %2794 = vmatpush1.msra.mxu0 %v2785
    %2795 = vmatprep.subr.mxu0 0.0
    %2796 = vmatpush1.msra.mxu0 %v2787
    %2797 = vmatprep.subr.mxu0 0.0
    %2798 = vmatpush1.msra.mxu0 0.0
    %2799 = vmatprep.subr.mxu0 0.0
    %2800 = vmatpush1.msra.mxu0 0.0
    %2801 = vmatprep.subr.mxu0 0.0
    %2802 = vmatpush1.msra.mxu0 0.0
    %2803 = vmatprep.subr.mxu0 0.0
    %2804 = vmatpush1.msra.mxu0 0.0
    %2805 = vmatprep.subr.mxu0 0.0
    %2806 = vmatpush1.msra.mxu0 0.0
    %2807 = vmatprep.subr.mxu0 0.0
    %2808 = vmatpush1.msra.mxu0 0.0
    %2809 = vmatprep.subr.mxu0 0.0
    %2810 = vmatpush1.msra.mxu0 0.0
    %2811 = vmatprep.subr.mxu0 0.0
    %2812 = vmatpush1.msra.mxu0 0.0
    %2813 = vmatprep.subr.mxu0 0.0
    %2814 = vmatpush1.msra.mxu0 0.0
    %2815 = vmatprep.subr.mxu0 0.0
    %2816 = vmatpush1.msra.mxu0 0.0
    %2817 = vmatprep.subr.mxu0 0.0
    %2818 = vmatpush1.msra.mxu0 0.0
    %2819 = vmatprep.subr.mxu0 0.0
    %2820 = vmatpush1.msra.mxu0 0.0
    %2821 = vmatprep.subr.mxu0 0.0
    %2822 = vmatpush1.msra.mxu0 0.0
    %2823 = vmatprep.subr.mxu0 0.0
    %2824 = vmatpush1.msra.mxu0 0.0
    %2825 = vmatprep.subr.mxu0 0.0
    %2826 = vmatpush1.msra.mxu0 0.0
    %2827 = vmatprep.subr.mxu0 0.0
    %2828 = vmatpush1.msra.mxu0 0.0
    %2829 = vmatprep.subr.mxu0 0.0
    %2830 = vmatpush1.msra.mxu0 0.0
    %2831 = vmatprep.subr.mxu0 0.0
    %2832 = vmatpush1.msra.mxu0 0.0
    %2833 = vmatprep.subr.mxu0 0.0
    %2834 = vmatpush1.msra.mxu0 0.0
    %2835 = vmatprep.subr.mxu0 0.0
    %2836 = vmatpush1.msra.mxu0 0.0
    %2837 = vmatprep.subr.mxu0 0.0
    %2838 = vmatpush1.msra.mxu0 0.0
    %2839 = vmatprep.subr.mxu0 0.0
    %2840 = vmatpush1.msra.mxu0 0.0
    %2841 = vmatprep.subr.mxu0 0.0
    %2842 = vmatpush1.msra.mxu0 0.0
    %2843 = vmatprep.subr.mxu0 0.0
    %2844 = vmatpush1.msra.mxu0 0.0
    %2845 = vmatprep.subr.mxu0 0.0
    %2846 = vmatpush1.msra.mxu0 0.0
    %2847 = vmatprep.subr.mxu0 0.0
    %2848 = vmatpush1.msra.mxu0 0.0
    %2849 = vmatprep.subr.mxu0 0.0
    %2850 = vmatpush1.msra.mxu0 0.0
    %2851 = vmatprep.subr.mxu0 0.0
    %2852 = vmatpush1.msra.mxu0 0.0
    %2853 = vmatprep.subr.mxu0 0.0
    %2854 = vmatpush1.msra.mxu0 0.0
    %2855 = vmatprep.subr.mxu0 0.0
    %2856 = vmatpush1.msra.mxu0 0.0
    %2857 = vmatprep.mubr.f32.mxu0 0.0
    %2858 = vmatmul.mubr.f32.gmra.mrb[0].mxu0 %v2791
    %v2859 = vpop.f32.mrb[0].mxu0
    %v2860 = vadd.f32 0.0, %v2859
    %v2861 = vpop.f32.mrb[0].mxu0
    %2862 = vdwg.mxu0
    %2863 = vrot.lane.b32.xlu0 %v1802, 120
    %v2864 = vpop.permute.xlu0 %2863
    %2865 = vrot.lane.b32.xlu0 %v1903, 120
    %v2866 = vpop.permute.xlu0 %2865
    %2867 = vrot.lane.b32.xlu0 %v1908, 120
    %v2868 = vpop.permute.xlu0 %2867
    %v2869 = vsel %vm161, %v2864, 0
    %v2871 = vsel %vm161, %v2866, 0
    %v2873 = vsel %vm161, %v2868, 0
    %2875 = vmatprep.subr.mxu0 0.0
    %2876 = vmatpush1.xpose.msra.mxu0 %v2871
    %2877 = vmatprep.subr.mxu0 0.0
    %2878 = vmatpush1.xpose.msra.mxu0 %v2873
    %2879 = vmatprep.subr.mxu0 0.0
    %2880 = vmatpush1.xpose.msra.mxu0 0.0
    %2881 = vmatprep.subr.mxu0 0.0
    %2882 = vmatpush1.xpose.msra.mxu0 0.0
    %2883 = vmatprep.subr.mxu0 0.0
    %2884 = vmatpush1.xpose.msra.mxu0 0.0
    %2885 = vmatprep.subr.mxu0 0.0
    %2886 = vmatpush1.xpose.msra.mxu0 0.0
    %2887 = vmatprep.subr.mxu0 0.0
    %2888 = vmatpush1.xpose.msra.mxu0 0.0
    %2889 = vmatprep.subr.mxu0 0.0
    %2890 = vmatpush1.xpose.msra.mxu0 0.0
    %2891 = vmatprep.subr.mxu0 0.0
    %2892 = vmatpush1.xpose.msra.mxu0 0.0
    %2893 = vmatprep.subr.mxu0 0.0
    %2894 = vmatpush1.xpose.msra.mxu0 0.0
    %2895 = vmatprep.subr.mxu0 0.0
    %2896 = vmatpush1.xpose.msra.mxu0 0.0
    %2897 = vmatprep.subr.mxu0 0.0
    %2898 = vmatpush1.xpose.msra.mxu0 0.0
    %2899 = vmatprep.subr.mxu0 0.0
    %2900 = vmatpush1.xpose.msra.mxu0 0.0
    %2901 = vmatprep.subr.mxu0 0.0
    %2902 = vmatpush1.xpose.msra.mxu0 0.0
    %2903 = vmatprep.subr.mxu0 0.0
    %2904 = vmatpush1.xpose.msra.mxu0 0.0
    %2905 = vmatprep.subr.mxu0 0.0
    %2906 = vmatpush1.xpose.msra.mxu0 0.0
    %2907 = vmatprep.subr.mxu0 0.0
    %2908 = vmatpush1.xpose.msra.mxu0 0.0
    %2909 = vmatprep.subr.mxu0 0.0
    %2910 = vmatpush1.xpose.msra.mxu0 0.0
    %2911 = vmatprep.subr.mxu0 0.0
    %2912 = vmatpush1.xpose.msra.mxu0 0.0
    %2913 = vmatprep.subr.mxu0 0.0
    %2914 = vmatpush1.xpose.msra.mxu0 0.0
    %2915 = vmatprep.subr.mxu0 0.0
    %2916 = vmatpush1.xpose.msra.mxu0 0.0
    %2917 = vmatprep.subr.mxu0 0.0
    %2918 = vmatpush1.xpose.msra.mxu0 0.0
    %2919 = vmatprep.subr.mxu0 0.0
    %2920 = vmatpush1.xpose.msra.mxu0 0.0
    %2921 = vmatprep.subr.mxu0 0.0
    %2922 = vmatpush1.xpose.msra.mxu0 0.0
    %2923 = vmatprep.subr.mxu0 0.0
    %2924 = vmatpush1.xpose.msra.mxu0 0.0
    %2925 = vmatprep.subr.mxu0 0.0
    %2926 = vmatpush1.xpose.msra.mxu0 0.0
    %2927 = vmatprep.subr.mxu0 0.0
    %2928 = vmatpush1.xpose.msra.mxu0 0.0
    %2929 = vmatprep.subr.mxu0 0.0
    %2930 = vmatpush1.xpose.msra.mxu0 0.0
    %2931 = vmatprep.subr.mxu0 0.0
    %2932 = vmatpush1.xpose.msra.mxu0 0.0
    %2933 = vmatprep.subr.mxu0 0.0
    %2934 = vmatpush1.xpose.msra.mxu0 0.0
    %2935 = vmatprep.subr.mxu0 0.0
    %2936 = vmatpush1.xpose.msra.mxu0 0.0
    %2937 = vmatprep.subr.mxu0 0.0
    %2938 = vmatpush1.xpose.msra.mxu0 0.0
    %2939 = vmatprep.mubr.f32.mxu0 0.0
    %2940 = vmatmul.mubr.f32.gmra.mrb[0].mxu0 %v2869
    %v2941 = vpop.f32.mrb[0].mxu0
    %v2942 = vadd.f32 0.0, %v2941
    %v2943 = vpop.f32.mrb[0].mxu0
    %2944 = vdwg.mxu0
    %v2945 = vmul.f32 %v2942, 0.35355338
    %v2946 = vsel %vm835, %v2945, -inf
    %2947 = vmax.xlane.f32.xlu0 %v2946
    %v2948 = vpop.xlane.xlu0 %2947
    %v2949 = vsub.f32 %v2945, %v2948
    %v2950 = vmul.f32 %v2949, 1.442695
    %v2951 = vpow.pop %v2950
    %v2952 = vsel %vm835, %v2951, 0.0
    %2953 = vadd.xlane.f32.xlu0 %v2952
    %v2954 = vpop.xlane.xlu0 %2953
    %v2955 = vrcp.pop %v2954
    %v2956 = vmul.f32 %v2951, %v2955
    %2957 = vrot.lane.b32.xlu0 %v1903, 88
    %v2958 = vpop.permute.xlu0 %2957
    %2959 = vrot.lane.b32.xlu0 %v1908, 88
    %v2960 = vpop.permute.xlu0 %2959
    %v2964 = vsel %vm835, %v2956, 0
    %2966 = vmatprep.subr.mxu0 0.0
    %2967 = vmatpush1.msra.mxu0 %v2958
    %2968 = vmatprep.subr.mxu0 0.0
    %2969 = vmatpush1.msra.mxu0 %v2960
    %2970 = vmatprep.subr.mxu0 0.0
    %2971 = vmatpush1.msra.mxu0 0.0
    %2972 = vmatprep.subr.mxu0 0.0
    %2973 = vmatpush1.msra.mxu0 0.0
    %2974 = vmatprep.subr.mxu0 0.0
    %2975 = vmatpush1.msra.mxu0 0.0
    %2976 = vmatprep.subr.mxu0 0.0
    %2977 = vmatpush1.msra.mxu0 0.0
    %2978 = vmatprep.subr.mxu0 0.0
    %2979 = vmatpush1.msra.mxu0 0.0
    %2980 = vmatprep.subr.mxu0 0.0
    %2981 = vmatpush1.msra.mxu0 0.0
    %2982 = vmatprep.subr.mxu0 0.0
    %2983 = vmatpush1.msra.mxu0 0.0
    %2984 = vmatprep.subr.mxu0 0.0
    %2985 = vmatpush1.msra.mxu0 0.0
    %2986 = vmatprep.subr.mxu0 0.0
    %2987 = vmatpush1.msra.mxu0 0.0
    %2988 = vmatprep.subr.mxu0 0.0
    %2989 = vmatpush1.msra.mxu0 0.0
    %2990 = vmatprep.subr.mxu0 0.0
    %2991 = vmatpush1.msra.mxu0 0.0
    %2992 = vmatprep.subr.mxu0 0.0
    %2993 = vmatpush1.msra.mxu0 0.0
    %2994 = vmatprep.subr.mxu0 0.0
    %2995 = vmatpush1.msra.mxu0 0.0
    %2996 = vmatprep.subr.mxu0 0.0
    %2997 = vmatpush1.msra.mxu0 0.0
    %2998 = vmatprep.subr.mxu0 0.0
    %2999 = vmatpush1.msra.mxu0 0.0
    %3000 = vmatprep.subr.mxu0 0.0
    %3001 = vmatpush1.msra.mxu0 0.0
    %3002 = vmatprep.subr.mxu0 0.0
    %3003 = vmatpush1.msra.mxu0 0.0
    %3004 = vmatprep.subr.mxu0 0.0
    %3005 = vmatpush1.msra.mxu0 0.0
    %3006 = vmatprep.subr.mxu0 0.0
    %3007 = vmatpush1.msra.mxu0 0.0
    %3008 = vmatprep.subr.mxu0 0.0
    %3009 = vmatpush1.msra.mxu0 0.0
    %3010 = vmatprep.subr.mxu0 0.0
    %3011 = vmatpush1.msra.mxu0 0.0
    %3012 = vmatprep.subr.mxu0 0.0
    %3013 = vmatpush1.msra.mxu0 0.0
    %3014 = vmatprep.subr.mxu0 0.0
    %3015 = vmatpush1.msra.mxu0 0.0
    %3016 = vmatprep.subr.mxu0 0.0
    %3017 = vmatpush1.msra.mxu0 0.0
    %3018 = vmatprep.subr.mxu0 0.0
    %3019 = vmatpush1.msra.mxu0 0.0
    %3020 = vmatprep.subr.mxu0 0.0
    %3021 = vmatpush1.msra.mxu0 0.0
    %3022 = vmatprep.subr.mxu0 0.0
    %3023 = vmatpush1.msra.mxu0 0.0
    %3024 = vmatprep.subr.mxu0 0.0
    %3025 = vmatpush1.msra.mxu0 0.0
    %3026 = vmatprep.subr.mxu0 0.0
    %3027 = vmatpush1.msra.mxu0 0.0
    %3028 = vmatprep.subr.mxu0 0.0
    %3029 = vmatpush1.msra.mxu0 0.0
    %3030 = vmatprep.mubr.f32.mxu0 0.0
    %3031 = vmatmul.mubr.f32.gmra.mrb[0].mxu0 %v2964
    %v3032 = vpop.f32.mrb[0].mxu0
    %v3033 = vadd.f32 0.0, %v3032
    %v3034 = vpop.f32.mrb[0].mxu0
    %3035 = vdwg.mxu0
    %3036 = vrot.lane.b32.xlu0 %v1802, 112
    %v3037 = vpop.permute.xlu0 %3036
    %3038 = vrot.lane.b32.xlu0 %v1903, 112
    %v3039 = vpop.permute.xlu0 %3038
    %3040 = vrot.lane.b32.xlu0 %v1908, 112
    %v3041 = vpop.permute.xlu0 %3040
    %v3042 = vsel %vm161, %v3037, 0
    %v3044 = vsel %vm161, %v3039, 0
    %v3046 = vsel %vm161, %v3041, 0
    %3048 = vmatprep.subr.mxu0 0.0
    %3049 = vmatpush1.xpose.msra.mxu0 %v3044
    %3050 = vmatprep.subr.mxu0 0.0
    %3051 = vmatpush1.xpose.msra.mxu0 %v3046
    %3052 = vmatprep.subr.mxu0 0.0
    %3053 = vmatpush1.xpose.msra.mxu0 0.0
    %3054 = vmatprep.subr.mxu0 0.0
    %3055 = vmatpush1.xpose.msra.mxu0 0.0
    %3056 = vmatprep.subr.mxu0 0.0
    %3057 = vmatpush1.xpose.msra.mxu0 0.0
    %3058 = vmatprep.subr.mxu0 0.0
    %3059 = vmatpush1.xpose.msra.mxu0 0.0
    %3060 = vmatprep.subr.mxu0 0.0
    %3061 = vmatpush1.xpose.msra.mxu0 0.0
    %3062 = vmatprep.subr.mxu0 0.0
    %3063 = vmatpush1.xpose.msra.mxu0 0.0
    %3064 = vmatprep.subr.mxu0 0.0
    %3065 = vmatpush1.xpose.msra.mxu0 0.0
    %3066 = vmatprep.subr.mxu0 0.0
    %3067 = vmatpush1.xpose.msra.mxu0 0.0
    %3068 = vmatprep.subr.mxu0 0.0
    %3069 = vmatpush1.xpose.msra.mxu0 0.0
    %3070 = vmatprep.subr.mxu0 0.0
    %3071 = vmatpush1.xpose.msra.mxu0 0.0
    %3072 = vmatprep.subr.mxu0 0.0
    %3073 = vmatpush1.xpose.msra.mxu0 0.0
    %3074 = vmatprep.subr.mxu0 0.0
    %3075 = vmatpush1.xpose.msra.mxu0 0.0
    %3076 = vmatprep.subr.mxu0 0.0
    %3077 = vmatpush1.xpose.msra.mxu0 0.0
    %3078 = vmatprep.subr.mxu0 0.0
    %3079 = vmatpush1.xpose.msra.mxu0 0.0
    %3080 = vmatprep.subr.mxu0 0.0
    %3081 = vmatpush1.xpose.msra.mxu0 0.0
    %3082 = vmatprep.subr.mxu0 0.0
    %3083 = vmatpush1.xpose.msra.mxu0 0.0
    %3084 = vmatprep.subr.mxu0 0.0
    %3085 = vmatpush1.xpose.msra.mxu0 0.0
    %3086 = vmatprep.subr.mxu0 0.0
    %3087 = vmatpush1.xpose.msra.mxu0 0.0
    %3088 = vmatprep.subr.mxu0 0.0
    %3089 = vmatpush1.xpose.msra.mxu0 0.0
    %3090 = vmatprep.subr.mxu0 0.0
    %3091 = vmatpush1.xpose.msra.mxu0 0.0
    %3092 = vmatprep.subr.mxu0 0.0
    %3093 = vmatpush1.xpose.msra.mxu0 0.0
    %3094 = vmatprep.subr.mxu0 0.0
    %3095 = vmatpush1.xpose.msra.mxu0 0.0
    %3096 = vmatprep.subr.mxu0 0.0
    %3097 = vmatpush1.xpose.msra.mxu0 0.0
    %3098 = vmatprep.subr.mxu0 0.0
    %3099 = vmatpush1.xpose.msra.mxu0 0.0
    %3100 = vmatprep.subr.mxu0 0.0
    %3101 = vmatpush1.xpose.msra.mxu0 0.0
    %3102 = vmatprep.subr.mxu0 0.0
    %3103 = vmatpush1.xpose.msra.mxu0 0.0
    %3104 = vmatprep.subr.mxu0 0.0
    %3105 = vmatpush1.xpose.msra.mxu0 0.0
    %3106 = vmatprep.subr.mxu0 0.0
    %3107 = vmatpush1.xpose.msra.mxu0 0.0
    %3108 = vmatprep.subr.mxu0 0.0
    %3109 = vmatpush1.xpose.msra.mxu0 0.0
    %3110 = vmatprep.subr.mxu0 0.0
    %3111 = vmatpush1.xpose.msra.mxu0 0.0
    %3112 = vmatprep.mubr.f32.mxu0 0.0
    %3113 = vmatmul.mubr.f32.gmra.mrb[0].mxu0 %v3042
    %v3114 = vpop.f32.mrb[0].mxu0
    %v3115 = vadd.f32 0.0, %v3114
    %v3116 = vpop.f32.mrb[0].mxu0
    %3117 = vdwg.mxu0
    %v3118 = vmul.f32 %v3115, 0.35355338
    %v3119 = vsel %vm835, %v3118, -inf
    %3120 = vmax.xlane.f32.xlu0 %v3119
    %v3121 = vpop.xlane.xlu0 %3120
    %v3122 = vsub.f32 %v3118, %v3121
    %v3123 = vmul.f32 %v3122, 1.442695
    %v3124 = vpow.pop %v3123
    %v3125 = vsel %vm835, %v3124, 0.0
    %3126 = vadd.xlane.f32.xlu0 %v3125
    %v3127 = vpop.xlane.xlu0 %3126
    %v3128 = vrcp.pop %v3127
    %v3129 = vmul.f32 %v3124, %v3128
    %3130 = vrot.lane.b32.xlu0 %v1903, 80
    %v3131 = vpop.permute.xlu0 %3130
    %3132 = vrot.lane.b32.xlu0 %v1908, 80
    %v3133 = vpop.permute.xlu0 %3132
    %v3137 = vsel %vm835, %v3129, 0
    %3139 = vmatprep.subr.mxu0 0.0
    %3140 = vmatpush1.msra.mxu0 %v3131
    %3141 = vmatprep.subr.mxu0 0.0
    %3142 = vmatpush1.msra.mxu0 %v3133
    %3143 = vmatprep.subr.mxu0 0.0
    %3144 = vmatpush1.msra.mxu0 0.0
    %3145 = vmatprep.subr.mxu0 0.0
    %3146 = vmatpush1.msra.mxu0 0.0
    %3147 = vmatprep.subr.mxu0 0.0
    %3148 = vmatpush1.msra.mxu0 0.0
    %3149 = vmatprep.subr.mxu0 0.0
    %3150 = vmatpush1.msra.mxu0 0.0
    %3151 = vmatprep.subr.mxu0 0.0
    %3152 = vmatpush1.msra.mxu0 0.0
    %3153 = vmatprep.subr.mxu0 0.0
    %3154 = vmatpush1.msra.mxu0 0.0
    %3155 = vmatprep.subr.mxu0 0.0
    %3156 = vmatpush1.msra.mxu0 0.0
    %3157 = vmatprep.subr.mxu0 0.0
    %3158 = vmatpush1.msra.mxu0 0.0
    %3159 = vmatprep.subr.mxu0 0.0
    %3160 = vmatpush1.msra.mxu0 0.0
    %3161 = vmatprep.subr.mxu0 0.0
    %3162 = vmatpush1.msra.mxu0 0.0
    %3163 = vmatprep.subr.mxu0 0.0
    %3164 = vmatpush1.msra.mxu0 0.0
    %3165 = vmatprep.subr.mxu0 0.0
    %3166 = vmatpush1.msra.mxu0 0.0
    %3167 = vmatprep.subr.mxu0 0.0
    %3168 = vmatpush1.msra.mxu0 0.0
    %3169 = vmatprep.subr.mxu0 0.0
    %3170 = vmatpush1.msra.mxu0 0.0
    %3171 = vmatprep.subr.mxu0 0.0
    %3172 = vmatpush1.msra.mxu0 0.0
    %3173 = vmatprep.subr.mxu0 0.0
    %3174 = vmatpush1.msra.mxu0 0.0
    %3175 = vmatprep.subr.mxu0 0.0
    %3176 = vmatpush1.msra.mxu0 0.0
    %3177 = vmatprep.subr.mxu0 0.0
    %3178 = vmatpush1.msra.mxu0 0.0
    %3179 = vmatprep.subr.mxu0 0.0
    %3180 = vmatpush1.msra.mxu0 0.0
    %3181 = vmatprep.subr.mxu0 0.0
    %3182 = vmatpush1.msra.mxu0 0.0
    %3183 = vmatprep.subr.mxu0 0.0
    %3184 = vmatpush1.msra.mxu0 0.0
    %3185 = vmatprep.subr.mxu0 0.0
    %3186 = vmatpush1.msra.mxu0 0.0
    %3187 = vmatprep.subr.mxu0 0.0
    %3188 = vmatpush1.msra.mxu0 0.0
    %3189 = vmatprep.subr.mxu0 0.0
    %3190 = vmatpush1.msra.mxu0 0.0
    %3191 = vmatprep.subr.mxu0 0.0
    %3192 = vmatpush1.msra.mxu0 0.0
    %3193 = vmatprep.subr.mxu0 0.0
    %3194 = vmatpush1.msra.mxu0 0.0
    %3195 = vmatprep.subr.mxu0 0.0
    %3196 = vmatpush1.msra.mxu0 0.0
    %3197 = vmatprep.subr.mxu0 0.0
    %3198 = vmatpush1.msra.mxu0 0.0
    %3199 = vmatprep.subr.mxu0 0.0
    %3200 = vmatpush1.msra.mxu0 0.0
    %3201 = vmatprep.subr.mxu0 0.0
    %3202 = vmatpush1.msra.mxu0 0.0
    %3203 = vmatprep.mubr.f32.mxu0 0.0
    %3204 = vmatmul.mubr.f32.gmra.mrb[0].mxu0 %v3137
    %v3205 = vpop.f32.mrb[0].mxu0
    %v3206 = vadd.f32 0.0, %v3205
    %v3207 = vpop.f32.mrb[0].mxu0
    %3208 = vdwg.mxu0
    %3209 = vrot.lane.b32.xlu0 %v1802, 104
    %v3210 = vpop.permute.xlu0 %3209
    %3211 = vrot.lane.b32.xlu0 %v1903, 104
    %v3212 = vpop.permute.xlu0 %3211
    %3213 = vrot.lane.b32.xlu0 %v1908, 104
    %v3214 = vpop.permute.xlu0 %3213
    %v3215 = vsel %vm161, %v3210, 0
    %v3217 = vsel %vm161, %v3212, 0
    %v3219 = vsel %vm161, %v3214, 0
    %3221 = vmatprep.subr.mxu0 0.0
    %3222 = vmatpush1.xpose.msra.mxu0 %v3217
    %3223 = vmatprep.subr.mxu0 0.0
    %3224 = vmatpush1.xpose.msra.mxu0 %v3219
    %3225 = vmatprep.subr.mxu0 0.0
    %3226 = vmatpush1.xpose.msra.mxu0 0.0
    %3227 = vmatprep.subr.mxu0 0.0
    %3228 = vmatpush1.xpose.msra.mxu0 0.0
    %3229 = vmatprep.subr.mxu0 0.0
    %3230 = vmatpush1.xpose.msra.mxu0 0.0
    %3231 = vmatprep.subr.mxu0 0.0
    %3232 = vmatpush1.xpose.msra.mxu0 0.0
    %3233 = vmatprep.subr.mxu0 0.0
    %3234 = vmatpush1.xpose.msra.mxu0 0.0
    %3235 = vmatprep.subr.mxu0 0.0
    %3236 = vmatpush1.xpose.msra.mxu0 0.0
    %3237 = vmatprep.subr.mxu0 0.0
    %3238 = vmatpush1.xpose.msra.mxu0 0.0
    %3239 = vmatprep.subr.mxu0 0.0
    %3240 = vmatpush1.xpose.msra.mxu0 0.0
    %3241 = vmatprep.subr.mxu0 0.0
    %3242 = vmatpush1.xpose.msra.mxu0 0.0
    %3243 = vmatprep.subr.mxu0 0.0
    %3244 = vmatpush1.xpose.msra.mxu0 0.0
    %3245 = vmatprep.subr.mxu0 0.0
    %3246 = vmatpush1.xpose.msra.mxu0 0.0
    %3247 = vmatprep.subr.mxu0 0.0
    %3248 = vmatpush1.xpose.msra.mxu0 0.0
    %3249 = vmatprep.subr.mxu0 0.0
    %3250 = vmatpush1.xpose.msra.mxu0 0.0
    %3251 = vmatprep.subr.mxu0 0.0
    %3252 = vmatpush1.xpose.msra.mxu0 0.0
    %3253 = vmatprep.subr.mxu0 0.0
    %3254 = vmatpush1.xpose.msra.mxu0 0.0
    %3255 = vmatprep.subr.mxu0 0.0
    %3256 = vmatpush1.xpose.msra.mxu0 0.0
    %3257 = vmatprep.subr.mxu0 0.0
    %3258 = vmatpush1.xpose.msra.mxu0 0.0
    %3259 = vmatprep.subr.mxu0 0.0
    %3260 = vmatpush1.xpose.msra.mxu0 0.0
    %3261 = vmatprep.subr.mxu0 0.0
    %3262 = vmatpush1.xpose.msra.mxu0 0.0
    %3263 = vmatprep.subr.mxu0 0.0
    %3264 = vmatpush1.xpose.msra.mxu0 0.0
    %3265 = vmatprep.subr.mxu0 0.0
    %3266 = vmatpush1.xpose.msra.mxu0 0.0
    %3267 = vmatprep.subr.mxu0 0.0
    %3268 = vmatpush1.xpose.msra.mxu0 0.0
    %3269 = vmatprep.subr.mxu0 0.0
    %3270 = vmatpush1.xpose.msra.mxu0 0.0
    %3271 = vmatprep.subr.mxu0 0.0
    %3272 = vmatpush1.xpose.msra.mxu0 0.0
    %3273 = vmatprep.subr.mxu0 0.0
    %3274 = vmatpush1.xpose.msra.mxu0 0.0
    %3275 = vmatprep.subr.mxu0 0.0
    %3276 = vmatpush1.xpose.msra.mxu0 0.0
    %3277 = vmatprep.subr.mxu0 0.0
    %3278 = vmatpush1.xpose.msra.mxu0 0.0
    %3279 = vmatprep.subr.mxu0 0.0
    %3280 = vmatpush1.xpose.msra.mxu0 0.0
    %3281 = vmatprep.subr.mxu0 0.0
    %3282 = vmatpush1.xpose.msra.mxu0 0.0
    %3283 = vmatprep.subr.mxu0 0.0
    %3284 = vmatpush1.xpose.msra.mxu0 0.0
    %3285 = vmatprep.mubr.f32.mxu0 0.0
    %3286 = vmatmul.mubr.f32.gmra.mrb[0].mxu0 %v3215
    %v3287 = vpop.f32.mrb[0].mxu0
    %v3288 = vadd.f32 0.0, %v3287
    %v3289 = vpop.f32.mrb[0].mxu0
    %3290 = vdwg.mxu0
    %v3291 = vmul.f32 %v3288, 0.35355338
    %v3292 = vsel %vm835, %v3291, -inf
    %3293 = vmax.xlane.f32.xlu0 %v3292
    %v3294 = vpop.xlane.xlu0 %3293
    %v3295 = vsub.f32 %v3291, %v3294
    %v3296 = vmul.f32 %v3295, 1.442695
    %v3297 = vpow.pop %v3296
    %v3298 = vsel %vm835, %v3297, 0.0
    %3299 = vadd.xlane.f32.xlu0 %v3298
    %v3300 = vpop.xlane.xlu0 %3299
    %v3301 = vrcp.pop %v3300
    %v3302 = vmul.f32 %v3297, %v3301
    %3303 = vrot.lane.b32.xlu0 %v1903, 72
    %v3304 = vpop.permute.xlu0 %3303
    %3305 = vrot.lane.b32.xlu0 %v1908, 72
    %v3306 = vpop.permute.xlu0 %3305
    %v3310 = vsel %vm835, %v3302, 0
    %3312 = vmatprep.subr.mxu0 0.0
    %3313 = vmatpush1.msra.mxu0 %v3304
    %3314 = vmatprep.subr.mxu0 0.0
    %3315 = vmatpush1.msra.mxu0 %v3306
    %3316 = vmatprep.subr.mxu0 0.0
    %3317 = vmatpush1.msra.mxu0 0.0
    %3318 = vmatprep.subr.mxu0 0.0
    %3319 = vmatpush1.msra.mxu0 0.0
    %3320 = vmatprep.subr.mxu0 0.0
    %3321 = vmatpush1.msra.mxu0 0.0
    %3322 = vmatprep.subr.mxu0 0.0
    %3323 = vmatpush1.msra.mxu0 0.0
    %3324 = vmatprep.subr.mxu0 0.0
    %3325 = vmatpush1.msra.mxu0 0.0
    %3326 = vmatprep.subr.mxu0 0.0
    %3327 = vmatpush1.msra.mxu0 0.0
    %3328 = vmatprep.subr.mxu0 0.0
    %3329 = vmatpush1.msra.mxu0 0.0
    %3330 = vmatprep.subr.mxu0 0.0
    %3331 = vmatpush1.msra.mxu0 0.0
    %3332 = vmatprep.subr.mxu0 0.0
    %3333 = vmatpush1.msra.mxu0 0.0
    %3334 = vmatprep.subr.mxu0 0.0
    %3335 = vmatpush1.msra.mxu0 0.0
    %3336 = vmatprep.subr.mxu0 0.0
    %3337 = vmatpush1.msra.mxu0 0.0
    %3338 = vmatprep.subr.mxu0 0.0
    %3339 = vmatpush1.msra.mxu0 0.0
    %3340 = vmatprep.subr.mxu0 0.0
    %3341 = vmatpush1.msra.mxu0 0.0
    %3342 = vmatprep.subr.mxu0 0.0
    %3343 = vmatpush1.msra.mxu0 0.0
    %3344 = vmatprep.subr.mxu0 0.0
    %3345 = vmatpush1.msra.mxu0 0.0
    %3346 = vmatprep.subr.mxu0 0.0
    %3347 = vmatpush1.msra.mxu0 0.0
    %3348 = vmatprep.subr.mxu0 0.0
    %3349 = vmatpush1.msra.mxu0 0.0
    %3350 = vmatprep.subr.mxu0 0.0
    %3351 = vmatpush1.msra.mxu0 0.0
    %3352 = vmatprep.subr.mxu0 0.0
    %3353 = vmatpush1.msra.mxu0 0.0
    %3354 = vmatprep.subr.mxu0 0.0
    %3355 = vmatpush1.msra.mxu0 0.0
    %3356 = vmatprep.subr.mxu0 0.0
    %3357 = vmatpush1.msra.mxu0 0.0
    %3358 = vmatprep.subr.mxu0 0.0
    %3359 = vmatpush1.msra.mxu0 0.0
    %3360 = vmatprep.subr.mxu0 0.0
    %3361 = vmatpush1.msra.mxu0 0.0
    %3362 = vmatprep.subr.mxu0 0.0
    %3363 = vmatpush1.msra.mxu0 0.0
    %3364 = vmatprep.subr.mxu0 0.0
    %3365 = vmatpush1.msra.mxu0 0.0
    %3366 = vmatprep.subr.mxu0 0.0
    %3367 = vmatpush1.msra.mxu0 0.0
    %3368 = vmatprep.subr.mxu0 0.0
    %3369 = vmatpush1.msra.mxu0 0.0
    %3370 = vmatprep.subr.mxu0 0.0
    %3371 = vmatpush1.msra.mxu0 0.0
    %3372 = vmatprep.subr.mxu0 0.0
    %3373 = vmatpush1.msra.mxu0 0.0
    %3374 = vmatprep.subr.mxu0 0.0
    %3375 = vmatpush1.msra.mxu0 0.0
    %3376 = vmatprep.mubr.f32.mxu0 0.0
    %3377 = vmatmul.mubr.f32.gmra.mrb[0].mxu0 %v3310
    %v3378 = vpop.f32.mrb[0].mxu0
    %v3379 = vadd.f32 0.0, %v3378
    %v3380 = vpop.f32.mrb[0].mxu0
    %3381 = vdwg.mxu0
    %3383 = vrot.lane.b32.xlu0 %v3033, 8
    %v3384 = vpop.permute.xlu0 %3383
    %3387 = vrot.lane.b32.xlu0 %v3206, 16
    %v3388 = vpop.permute.xlu0 %3387
    %3391 = vrot.lane.b32.xlu0 %v3379, 24
    %v3392 = vpop.permute.xlu0 %3391
    %v3394 = vsel %vm161, %v2860, %v3384
    %v3395 = vsel %vm835, %v3394, %v3388
    %v3396 = vsel %vm837, %v3395, %v3392
    %v3398 = vsel %vm72, %v3396, 0
    %3400 = vmatprep.subr.mxu0 0.0
    %3401 = vmatpush1.msra.mxu0 %v1911
    %3402 = vmatprep.subr.mxu0 0.0
    %3403 = vmatpush1.msra.mxu0 %v1912
    %3404 = vmatprep.subr.mxu0 0.0
    %3405 = vmatpush1.msra.mxu0 %v1913
    %3406 = vmatprep.subr.mxu0 0.0
    %3407 = vmatpush1.msra.mxu0 %v1914
    %3408 = vmatprep.subr.mxu0 0.0
    %3409 = vmatpush1.msra.mxu0 0.0
    %3410 = vmatprep.subr.mxu0 0.0
    %3411 = vmatpush1.msra.mxu0 0.0
    %3412 = vmatprep.subr.mxu0 0.0
    %3413 = vmatpush1.msra.mxu0 0.0
    %3414 = vmatprep.subr.mxu0 0.0
    %3415 = vmatpush1.msra.mxu0 0.0
    %3416 = vmatprep.subr.mxu0 0.0
    %3417 = vmatpush1.msra.mxu0 0.0
    %3418 = vmatprep.subr.mxu0 0.0
    %3419 = vmatpush1.msra.mxu0 0.0
    %3420 = vmatprep.subr.mxu0 0.0
    %3421 = vmatpush1.msra.mxu0 0.0
    %3422 = vmatprep.subr.mxu0 0.0
    %3423 = vmatpush1.msra.mxu0 0.0
    %3424 = vmatprep.subr.mxu0 0.0
    %3425 = vmatpush1.msra.mxu0 0.0
    %3426 = vmatprep.subr.mxu0 0.0
    %3427 = vmatpush1.msra.mxu0 0.0
    %3428 = vmatprep.subr.mxu0 0.0
    %3429 = vmatpush1.msra.mxu0 0.0
    %3430 = vmatprep.subr.mxu0 0.0
    %3431 = vmatpush1.msra.mxu0 0.0
    %3432 = vmatprep.subr.mxu0 0.0
    %3433 = vmatpush1.msra.mxu0 0.0
    %3434 = vmatprep.subr.mxu0 0.0
    %3435 = vmatpush1.msra.mxu0 0.0
    %3436 = vmatprep.subr.mxu0 0.0
    %3437 = vmatpush1.msra.mxu0 0.0
    %3438 = vmatprep.subr.mxu0 0.0
    %3439 = vmatpush1.msra.mxu0 0.0
    %3440 = vmatprep.subr.mxu0 0.0
    %3441 = vmatpush1.msra.mxu0 0.0
    %3442 = vmatprep.subr.mxu0 0.0
    %3443 = vmatpush1.msra.mxu0 0.0
    %3444 = vmatprep.subr.mxu0 0.0
    %3445 = vmatpush1.msra.mxu0 0.0
    %3446 = vmatprep.subr.mxu0 0.0
    %3447 = vmatpush1.msra.mxu0 0.0
    %3448 = vmatprep.subr.mxu0 0.0
    %3449 = vmatpush1.msra.mxu0 0.0
    %3450 = vmatprep.subr.mxu0 0.0
    %3451 = vmatpush1.msra.mxu0 0.0
    %3452 = vmatprep.subr.mxu0 0.0
    %3453 = vmatpush1.msra.mxu0 0.0
    %3454 = vmatprep.subr.mxu0 0.0
    %3455 = vmatpush1.msra.mxu0 0.0
    %3456 = vmatprep.subr.mxu0 0.0
    %3457 = vmatpush1.msra.mxu0 0.0
    %3458 = vmatprep.subr.mxu0 0.0
    %3459 = vmatpush1.msra.mxu0 0.0
    %3460 = vmatprep.subr.mxu0 0.0
    %3461 = vmatpush1.msra.mxu0 0.0
    %3462 = vmatprep.subr.mxu0 0.0
    %3463 = vmatpush1.msra.mxu0 0.0
    %3464 = vmatprep.mubr.f32.mxu0 0.0
    %3465 = vmatmul.mubr.f32.gmra.mrb[0].mxu0 %v3398
    %v3466 = vpop.f32.mrb[0].mxu0
    %v3467 = vadd.f32 0.0, %v3466
    %v3468 = vpop.f32.mrb[0].mxu0
    %3469 = vdwg.mxu0
    %3470 = vst.msk [vmem:[#allocation2 + $0x8] sm:$0xff] %vm72, %v3467
    %v3471 = vld [vmem:[#allocation8 + $0xc0] sm:$0x1]
    %v3472 = vld [vmem:[#allocation2] sm:$0xff]
    %v3473 = vld [vmem:[#allocation2 + $0x8] sm:$0xff]
    %v3474 = vadd.f32 %v1713, %v3472
    %v3475 = vadd.f32 %v1714, %v3473
    %v3476 = vlaneseq
    %v3477 = vshrl.u32 %v3476, 7
    %v3478 = vsub.s32 0, %v3477
    %v3479 = vrot.slane %v3471, %v3478
    %v3480 = vadd.f32 %v3474, %v3479
    %v3481 = vadd.f32 %v3475, %v3479
    %v3482 = vsel %vm72, %v3480, 0.0
    %3483 = vadd.xlane.f32.xlu0 %v3482
    %v3484 = vpop.xlane.xlu0 %3483
    %v3485 = vsel %vm72, %v3481, 0.0
    %3486 = vadd.xlane.f32.xlu0 %v3485
    %v3487 = vpop.xlane.xlu0 %3486
    %v3488 = vmul.f32 %v3484, %v1682
    %v3489 = vmul.f32 %v3487, %v1682
    %v3490 = vsub.f32 %v3480, %v3488
    %v3491 = vsub.f32 %v3481, %v3489
    %v3492 = vmul.f32 %v3490, %v3490
    %v3493 = vmul.f32 %v3491, %v3491
    %v3494 = vsel %vm72, %v3492, 0.0
    %3495 = vadd.xlane.f32.xlu0 %v3494
    %v3496 = vpop.xlane.xlu0 %3495
    %v3497 = vsel %vm72, %v3493, 0.0
    %3498 = vadd.xlane.f32.xlu0 %v3497
    %v3499 = vpop.xlane.xlu0 %3498
    %v3500 = vmul.f32 %v3496, %v1682
    %v3501 = vmul.f32 %v3499, %v1682
    %v3502 = vadd.f32 %v3500, 1e-05
    %v3503 = vadd.f32 %v3501, 1e-05
    %v3504 = vrsqrt.pop %v3502
    %v3505 = vrsqrt.pop %v3503
    %v3506 = vmul.f32 %v3490, %v3504
    %v3507 = vmul.f32 %v3491, %v3505
    %v3508 = vlaneseq
    %v3509 = vshrl.u32 %v3508, 7
    %v3510 = vsub.s32 2, %v3509
    %v3511 = vrot.slane %v62, %v3510
    %v3512 = vmul.f32 %v3506, %v3511
    %v3513 = vmul.f32 %v3507, %v3511
    %v3514 = vlaneseq
    %v3515 = vshrl.u32 %v3514, 7
    %v3516 = vsub.s32 3, %v3515
    %v3517 = vrot.slane %v62, %v3516
    %v3518 = vadd.f32 %v3512, %v3517
    %v3519 = vadd.f32 %v3513, %v3517
    %v3520 = vld [vmem:[#allocation8 + $0xc8] sm:$0xff]
    %v3521 = vld [vmem:[#allocation8 + $0xd0] sm:$0xff]
    %v3522 = vld [vmem:[#allocation8 + $0xd8] sm:$0xff]
    %v3523 = vld [vmem:[#allocation8 + $0xe0] sm:$0xff]
    %v3524 = vld [vmem:[#allocation8 + $0xe8] sm:$0x1]
    %v3525 = vld [vmem:[#allocation8 + $0xf0] sm:$0xff]
    %v3526 = vld [vmem:[#allocation8 + $0xf8] sm:$0xff]
    %v3527 = vld [vmem:[#allocation8 + $0x100] sm:$0xff]
    %v3528 = vld [vmem:[#allocation8 + $0x108] sm:$0xff]
    %v3529 = vld [vmem:[#allocation8 + $0x110] sm:$0xff]
    %v3530 = vld [vmem:[#allocation8 + $0x118] sm:$0xff]
    %v3531 = vld [vmem:[#allocation8 + $0x120] sm:$0xff]
    %v3532 = vld [vmem:[#allocation8 + $0x128] sm:$0xff]
    %v3533 = vld [vmem:[#allocation8 + $0x130] sm:$0x1]
    %v3534 = vlaneseq
    %v3535 = vshrl.u32 %v3534, 7
    %v3536 = vsub.s32 0, %v3535
    %v3537 = vrot.slane %v3524, %v3536
    %v3539 = vsel %vm72, %v3518, 0
    %v3542 = vsel %vm72, %v3519, 0
    %3544 = vmatprep.subr.mxu0 0.0
    %3545 = vmatpush1.msra.mxu0 %v3520
    %3546 = vmatprep.subr.mxu0 0.0
    %3547 = vmatpush1.msra.mxu0 %v3521
    %3548 = vmatprep.subr.mxu0 0.0
    %3549 = vmatpush1.msra.mxu0 %v3522
    %3550 = vmatprep.subr.mxu0 0.0
    %3551 = vmatpush1.msra.mxu0 %v3523
    %3552 = vmatprep.subr.mxu0 0.0
    %3553 = vmatpush1.msra.mxu0 0.0
    %3554 = vmatprep.subr.mxu0 0.0
    %3555 = vmatpush1.msra.mxu0 0.0
    %3556 = vmatprep.subr.mxu0 0.0
    %3557 = vmatpush1.msra.mxu0 0.0
    %3558 = vmatprep.subr.mxu0 0.0
    %3559 = vmatpush1.msra.mxu0 0.0
    %3560 = vmatprep.subr.mxu0 0.0
    %3561 = vmatpush1.msra.mxu0 0.0
    %3562 = vmatprep.subr.mxu0 0.0
    %3563 = vmatpush1.msra.mxu0 0.0
    %3564 = vmatprep.subr.mxu0 0.0
    %3565 = vmatpush1.msra.mxu0 0.0
    %3566 = vmatprep.subr.mxu0 0.0
    %3567 = vmatpush1.msra.mxu0 0.0
    %3568 = vmatprep.subr.mxu0 0.0
    %3569 = vmatpush1.msra.mxu0 0.0
    %3570 = vmatprep.subr.mxu0 0.0
    %3571 = vmatpush1.msra.mxu0 0.0
    %3572 = vmatprep.subr.mxu0 0.0
    %3573 = vmatpush1.msra.mxu0 0.0
    %3574 = vmatprep.subr.mxu0 0.0
    %3575 = vmatpush1.msra.mxu0 0.0
    %3576 = vmatprep.subr.mxu0 0.0
    %3577 = vmatpush1.msra.mxu0 0.0
    %3578 = vmatprep.subr.mxu0 0.0
    %3579 = vmatpush1.msra.mxu0 0.0
    %3580 = vmatprep.subr.mxu0 0.0
    %3581 = vmatpush1.msra.mxu0 0.0
    %3582 = vmatprep.subr.mxu0 0.0
    %3583 = vmatpush1.msra.mxu0 0.0
    %3584 = vmatprep.subr.mxu0 0.0
    %3585 = vmatpush1.msra.mxu0 0.0
    %3586 = vmatprep.subr.mxu0 0.0
    %3587 = vmatpush1.msra.mxu0 0.0
    %3588 = vmatprep.subr.mxu0 0.0
    %3589 = vmatpush1.msra.mxu0 0.0
    %3590 = vmatprep.subr.mxu0 0.0
    %3591 = vmatpush1.msra.mxu0 0.0
    %3592 = vmatprep.subr.mxu0 0.0
    %3593 = vmatpush1.msra.mxu0 0.0
    %3594 = vmatprep.subr.mxu0 0.0
    %3595 = vmatpush1.msra.mxu0 0.0
    %3596 = vmatprep.subr.mxu0 0.0
    %3597 = vmatpush1.msra.mxu0 0.0
    %3598 = vmatprep.subr.mxu0 0.0
    %3599 = vmatpush1.msra.mxu0 0.0
    %3600 = vmatprep.subr.mxu0 0.0
    %3601 = vmatpush1.msra.mxu0 0.0
    %3602 = vmatprep.subr.mxu0 0.0
    %3603 = vmatpush1.msra.mxu0 0.0
    %3604 = vmatprep.subr.mxu0 0.0
    %3605 = vmatpush1.msra.mxu0 0.0
    %3606 = vmatprep.subr.mxu0 0.0
    %3607 = vmatpush1.msra.mxu0 0.0
    %3608 = vmatprep.mubr.f32.mxu0 0.0
    %3609 = vmatmul.mubr.f32.gmra.mrb[0].mxu0 %v3539
    %v3610 = vpop.f32.mrb[0].mxu0
    %v3611 = vadd.f32 %v3537, %v3610
    %v3612 = vpop.f32.mrb[0].mxu0
    %3613 = vmatprep.mubr.f32.mxu0 0.0
    %3614 = vmatmul.mubr.f32.gmra.mrb[0].mxu0 %v3542
    %v3615 = vpop.f32.mrb[0].mxu0
    %v3616 = vadd.f32 %v3537, %v3615
    %v3617 = vpop.f32.mrb[0].mxu0
    %3618 = vdwg.mxu0
    %v3619 = vmax.f32 %v3611, 0.0
    %v3620 = vmax.f32 %v3616, 0.0
    %v3621 = vlaneseq
    %v3622 = vshrl.u32 %v3621, 7
    %v3623 = vsub.s32 0, %v3622
    %v3624 = vrot.slane %v3533, %v3623
    %vm3625 = vcmask 523264
    %v3627 = vsel %vm3625, %v3619, 0
    %v3630 = vsel %vm3625, %v3620, 0
    %3632 = vmatprep.subr.mxu0 0.0
    %3633 = vmatpush1.msra.mxu0 %v3525
    %3634 = vmatprep.subr.mxu0 0.0
    %3635 = vmatpush1.msra.mxu0 %v3526
    %3636 = vmatprep.subr.mxu0 0.0
    %3637 = vmatpush1.msra.mxu0 %v3527
    %3638 = vmatprep.subr.mxu0 0.0
    %3639 = vmatpush1.msra.mxu0 %v3528
    %3640 = vmatprep.subr.mxu0 0.0
    %3641 = vmatpush1.msra.mxu0 %v3529
    %3642 = vmatprep.subr.mxu0 0.0
    %3643 = vmatpush1.msra.mxu0 %v3530
    %3644 = vmatprep.subr.mxu0 0.0
    %3645 = vmatpush1.msra.mxu0 %v3531
    %3646 = vmatprep.subr.mxu0 0.0
    %3647 = vmatpush1.msra.mxu0 %v3532
    %3648 = vmatprep.subr.mxu0 0.0
    %3649 = vmatpush1.msra.mxu0 0.0
    %3650 = vmatprep.subr.mxu0 0.0
    %3651 = vmatpush1.msra.mxu0 0.0
    %3652 = vmatprep.subr.mxu0 0.0
    %3653 = vmatpush1.msra.mxu0 0.0
    %3654 = vmatprep.subr.mxu0 0.0
    %3655 = vmatpush1.msra.mxu0 0.0
    %3656 = vmatprep.subr.mxu0 0.0
    %3657 = vmatpush1.msra.mxu0 0.0
    %3658 = vmatprep.subr.mxu0 0.0
    %3659 = vmatpush1.msra.mxu0 0.0
    %3660 = vmatprep.subr.mxu0 0.0
    %3661 = vmatpush1.msra.mxu0 0.0
    %3662 = vmatprep.subr.mxu0 0.0
    %3663 = vmatpush1.msra.mxu0 0.0
    %3664 = vmatprep.subr.mxu0 0.0
    %3665 = vmatpush1.msra.mxu0 0.0
    %3666 = vmatprep.subr.mxu0 0.0
    %3667 = vmatpush1.msra.mxu0 0.0
    %3668 = vmatprep.subr.mxu0 0.0
    %3669 = vmatpush1.msra.mxu0 0.0
    %3670 = vmatprep.subr.mxu0 0.0
    %3671 = vmatpush1.msra.mxu0 0.0
    %3672 = vmatprep.subr.mxu0 0.0
    %3673 = vmatpush1.msra.mxu0 0.0
    %3674 = vmatprep.subr.mxu0 0.0
    %3675 = vmatpush1.msra.mxu0 0.0
    %3676 = vmatprep.subr.mxu0 0.0
    %3677 = vmatpush1.msra.mxu0 0.0
    %3678 = vmatprep.subr.mxu0 0.0
    %3679 = vmatpush1.msra.mxu0 0.0
    %3680 = vmatprep.subr.mxu0 0.0
    %3681 = vmatpush1.msra.mxu0 0.0
    %3682 = vmatprep.subr.mxu0 0.0
    %3683 = vmatpush1.msra.mxu0 0.0
    %3684 = vmatprep.subr.mxu0 0.0
    %3685 = vmatpush1.msra.mxu0 0.0
    %3686 = vmatprep.subr.mxu0 0.0
    %3687 = vmatpush1.msra.mxu0 0.0
    %3688 = vmatprep.subr.mxu0 0.0
    %3689 = vmatpush1.msra.mxu0 0.0
    %3690 = vmatprep.subr.mxu0 0.0
    %3691 = vmatpush1.msra.mxu0 0.0
    %3692 = vmatprep.subr.mxu0 0.0
    %3693 = vmatpush1.msra.mxu0 0.0
    %3694 = vmatprep.subr.mxu0 0.0
    %3695 = vmatpush1.msra.mxu0 0.0
    %3696 = vmatprep.mubr.f32.mxu0 0.0
    %3697 = vmatmul.mubr.f32.gmra.mrb[0].mxu0 %v3627
    %v3698 = vpop.f32.mrb[0].mxu0
    %v3699 = vadd.f32 %v3624, %v3698
    %v3700 = vpop.f32.mrb[0].mxu0
    %3701 = vmatprep.mubr.f32.mxu0 0.0
    %3702 = vmatmul.mubr.f32.gmra.mrb[0].mxu0 %v3630
    %v3703 = vpop.f32.mrb[0].mxu0
    %v3704 = vadd.f32 %v3624, %v3703
    %v3705 = vpop.f32.mrb[0].mxu0
    %3706 = vdwg.mxu0
    %v3707 = vadd.f32 %v3518, %v3699
    %v3708 = vadd.f32 %v3519, %v3704
    %v3709 = vsel %vm72, %v3707, 0.0
    %3710 = vadd.xlane.f32.xlu0 %v3709
    %v3711 = vpop.xlane.xlu0 %3710
    %v3712 = vsel %vm72, %v3708, 0.0
    %3713 = vadd.xlane.f32.xlu0 %v3712
    %v3714 = vpop.xlane.xlu0 %3713
    %v3715 = vmul.f32 %v3711, %v1682
    %v3716 = vmul.f32 %v3714, %v1682
    %v3717 = vsub.f32 %v3707, %v3715
    %v3718 = vsub.f32 %v3708, %v3716
    %v3719 = vmul.f32 %v3717, %v3717
    %v3720 = vmul.f32 %v3718, %v3718
    %v3721 = vsel %vm72, %v3719, 0.0
    %3722 = vadd.xlane.f32.xlu0 %v3721
    %v3723 = vpop.xlane.xlu0 %3722
    %v3724 = vsel %vm72, %v3720, 0.0
    %3725 = vadd.xlane.f32.xlu0 %v3724
    %v3726 = vpop.xlane.xlu0 %3725
    %v3727 = vmul.f32 %v3723, %v1682
    %v3728 = vmul.f32 %v3726, %v1682
    %v3729 = vadd.f32 %v3727, 1e-05
    %v3730 = vadd.f32 %v3728, 1e-05
    %v3731 = vrsqrt.pop %v3729
    %v3732 = vrsqrt.pop %v3730
    %v3733 = vmul.f32 %v3717, %v3731
    %v3734 = vmul.f32 %v3718, %v3732
    %v3735 = vlaneseq
    %v3736 = vshrl.u32 %v3735, 7
    %v3737 = vsub.s32 4, %v3736
    %v3738 = vrot.slane %v62, %v3737
    %v3739 = vmul.f32 %v3733, %v3738
    %v3740 = vmul.f32 %v3734, %v3738
    %v3741 = vlaneseq
    %v3742 = vshrl.u32 %v3741, 7
    %v3743 = vsub.s32 5, %v3742
    %v3744 = vrot.slane %v62, %v3743
    %v3745 = vadd.f32 %v3739, %v3744
    %v3746 = vadd.f32 %v3740, %v3744
    %3747 = vst.msk [vmem:[#allocation9] sm:$0xff] %vm72, %v3745
    %3748 = vst.msk [vmem:[#allocation9 + $0x8] sm:$0xff] %vm72, %v3746
    // Predicated region
    $region26: #{decoder_layer.1} parent=1 // pred_check
      _
    $region27: #{decoder_layer.1} parent=1 // pred_check_branch
      %3750 = sbr.rel (0) target = $region29
    $region28: #{decoder_layer.1} parent=1 // pred_region
      %s3752 = ssub.s32 256, 256
      %3753 = vsyncadd [#allocation5], %s3752
      %s3754 = sshll.u32 [#allocation9], 4
      %s3755 = int_to_ptr.vmem [resolvable:$true] %s3754
      %3760 = dma.vmem_to_hbm [thread:$0]  %s3755, 256, %s3, [#allocation5], 128, 128, 8
    $region29: #{decoder_layer.1} parent=1 // pred_fallthru
      _
    // Predicated region
    $region30: #{decoder_layer.1} parent=1 // pred_check
      _
    $region31: #{decoder_layer.1} parent=1 // pred_check_branch
      %3762 = sbr.rel (0) target = $region33
    $region32: #{decoder_layer.1} parent=1 // pred_region
      %3763 = dma.done [#allocation5], 256
    $region33: #{decoder_layer.1} parent=1 // pred_fallthru
      _
    %3764 = vsyncpa [#allocation4], 1
    %3765 = vsyncpa [#allocation7], 1
    %3766 = vsyncpa [#allocation5], 1

</llo_original>
